<compile_context>
chip_gen: v5e
topology: v5e:2x2
jax: 0.10.0
libtpu: 0.0.40
codegen_flags: <defaults>
</compile_context>

<pallas_src>
import functools

import jax
import jax.numpy as jnp
from jax.experimental import pallas as pl
from jax.experimental.pallas import tpu as pltpu

EPS = 1e-5


def _basic_block_kernel(*refs, N, H, W, Hout, Wout, Cin, Cout, stride, has_proj):
    """Fused conv3x3 -> BN -> ReLU -> conv3x3 -> BN -> (+shortcut) -> ReLU."""
    it = iter(refs)
    if stride == 1:
        x_ref = next(it)                       # (N, H, W, Cin) bf16
        phase_refs = None
    else:
        # phase[a*2+b] = pad(x)[:, a::2, b::2, :]  (f32, ~1x input bytes total)
        phase_refs = [next(it) for _ in range(4)]
        x_ref = None
    w1_ref, g1_ref, b1_ref = next(it), next(it), next(it)
    w2_ref, g2_ref, b2_ref = next(it), next(it), next(it)
    if has_proj:
        wsc_ref, gsc_ref, bsc_ref = next(it), next(it), next(it)
    out_ref = next(it)
    col1_ref, pad2_ref, col2_ref = next(it), next(it), next(it)   # scratch
    if stride == 1:
        xpad1_ref = next(it)                                      # scratch

    M = N * Hout * Wout
    inv_m = 1.0 / M

    def batchnorm(y, g_ref, b_ref):
        # training-mode BN: per-channel batch mean / biased variance over (N,H,W)
        # single pass over the activation: sum + sum-of-squares.
        s = jnp.sum(y, axis=0, keepdims=True)
        ss = jnp.sum(y * y, axis=0, keepdims=True)
        mean = s * inv_m
        var = ss * inv_m - mean * mean
        scale = jax.lax.rsqrt(var + EPS) * g_ref[...]
        return (y - mean) * scale + b_ref[...]

    def zero_halo(ref, hin, win, c):
        # only the 1-pixel border is zeroed; the interior is written by compute.
        ref[:, 0:1, :, :] = jnp.zeros((N, 1, win + 2, c), ref.dtype)
        ref[:, hin + 1:hin + 2, :, :] = jnp.zeros((N, 1, win + 2, c), ref.dtype)
        ref[:, :, 0:1, :] = jnp.zeros((N, hin + 2, 1, c), ref.dtype)
        ref[:, :, win + 1:win + 2, :] = jnp.zeros((N, hin + 2, 1, c), ref.dtype)

    # ---- conv1: gather 9 taps into a (M, 9*Cin) bf16 column matrix, 1 matmul -
    if stride == 1:
        zero_halo(xpad1_ref, H, W, Cin)
        xpad1_ref[:, 1:H + 1, 1:W + 1, :] = x_ref[...].astype(xpad1_ref.dtype)

    def conv1_tap(kh, kw):
        if stride == 1:
            return xpad1_ref[:, kh:kh + Hout, kw:kw + Wout, :]
        p = phase_refs[(kh % 2) * 2 + (kw % 2)]
        r0, c0 = kh // 2, kw // 2
        return p[:, r0:r0 + Hout, c0:c0 + Wout, :]

    for k in range(9):
        kh, kw = divmod(k, 3)
        col1_ref[:, k * Cin:(k + 1) * Cin] = (
            conv1_tap(kh, kw).reshape(M, Cin).astype(col1_ref.dtype))

    a1 = jnp.dot(col1_ref[...], w1_ref[...], preferred_element_type=jnp.float32)
    out1 = jnp.maximum(batchnorm(a1, g1_ref, b1_ref), 0.0)

    # ---- conv2: halo-zeroed pad scratch -> (M, 9*Cout) bf16 columns, 1 matmul -
    zero_halo(pad2_ref, Hout, Wout, Cout)
    pad2_ref[:, 1:Hout + 1, 1:Wout + 1, :] = (
        out1.reshape(N, Hout, Wout, Cout).astype(pad2_ref.dtype))

    for k in range(9):
        kh, kw = divmod(k, 3)
        col2_ref[:, k * Cout:(k + 1) * Cout] = (
            pad2_ref[:, kh:kh + Hout, kw:kw + Wout, :]
            .reshape(M, Cout).astype(col2_ref.dtype))

    a2 = jnp.dot(col2_ref[...], w2_ref[...], preferred_element_type=jnp.float32)
    out2 = batchnorm(a2, g2_ref, b2_ref)

    # ---- shortcut ------------------------------------------------------------
    if has_proj:
        sc_in = x_ref[...] if stride == 1 else phase_refs[3][:, 0:Hout, 0:Wout, :]
        sc = jnp.dot(sc_in.reshape(M, Cin).astype(jnp.bfloat16), wsc_ref[...],
                     preferred_element_type=jnp.float32)
        sc = batchnorm(sc, gsc_ref, bsc_ref)
    else:
        sc = x_ref[...].reshape(M, Cout).astype(jnp.float32)   # identity (Cin==Cout)

    out = jnp.maximum(out2 + sc, 0.0)
    out_ref[...] = out.reshape(N, Hout, Wout, Cout).astype(out_ref.dtype)


def basic_block_forward(x_nchw, params, stride):
    """BasicBlock forward. x_nchw: (N, Cin, H, W) f32 -> (N, Cout, Hout, Wout) f32."""
    N, Cin, H, W = x_nchw.shape
    Cout = params["w1"].shape[-1]
    Hout = (H - 1) // stride + 1
    Wout = (W - 1) // stride + 1
    has_proj = (stride != 1) or (Cin != Cout)
    M = N * Hout * Wout

    x = jnp.transpose(x_nchw, (0, 2, 3, 1))                    # NCHW -> NHWC (once)

    w1 = params["w1"].reshape(9 * Cin, Cout).astype(jnp.bfloat16)
    w2 = params["w2"].reshape(9 * Cout, Cout).astype(jnp.bfloat16)

    inputs = []
    if stride == 1:
        inputs.append(x.astype(jnp.bfloat16))                  # bf16 activation traffic
    else:
        # 4-way parity split of the padded input: the kernel then needs only
        # contiguous slices (no strided access), and total bytes ~= 1x the input
        # instead of the 9x im2col stack.
        xpad = jnp.pad(x, ((0, 0), (1, 1), (1, 1), (0, 0)))
        for a in range(2):
            for b in range(2):
                inputs.append(xpad[:, a::2, b::2, :])
    inputs += [w1, params["g1"], params["b1"], w2, params["g2"], params["b2"]]
    if has_proj:
        inputs += [params["wsc"].astype(jnp.bfloat16), params["gsc"], params["bsc"]]

    scratch = [
        pltpu.VMEM((M, 9 * Cin), jnp.bfloat16),                     # col1 (MXU lhs)
        pltpu.VMEM((N, Hout + 2, Wout + 2, Cout), jnp.float32),     # conv2 pad scratch
        pltpu.VMEM((M, 9 * Cout), jnp.bfloat16),                    # col2 (MXU lhs)
    ]
    if stride == 1:
        scratch.append(pltpu.VMEM((N, H + 2, W + 2, Cin), jnp.float32))  # conv1 pad

    kernel = functools.partial(
        _basic_block_kernel, N=N, H=H, W=W, Hout=Hout, Wout=Wout,
        Cin=Cin, Cout=Cout, stride=stride, has_proj=has_proj)

    out_nhwc = pl.pallas_call(
        kernel,
        out_shape=jax.ShapeDtypeStruct((N, Hout, Wout, Cout), jnp.float32),
        in_specs=[pl.BlockSpec(memory_space=pltpu.MemorySpace.VMEM)] * len(inputs),
        out_specs=pl.BlockSpec(memory_space=pltpu.MemorySpace.VMEM),
        scratch_shapes=scratch,
        compiler_params=pltpu.CompilerParams(vmem_limit_bytes=32 * 1024 * 1024),
    )(*inputs)

    return jnp.transpose(out_nhwc, (0, 3, 1, 2))               # back to NCHW


def init_params(key, in_planes, planes, stride):
    """Deterministic synthetic parameters (shapes per BasicBlock.__init__)."""
    ks = jax.random.split(key, 9)
    p = {
        "w1": 0.1 * jax.random.normal(ks[0], (3, 3, in_planes, planes), jnp.float32),
        "g1": 1.0 + 0.1 * jax.random.normal(ks[1], (1, planes), jnp.float32),
        "b1": 0.1 * jax.random.normal(ks[2], (1, planes), jnp.float32),
        "w2": 0.1 * jax.random.normal(ks[3], (3, 3, planes, planes), jnp.float32),
        "g2": 1.0 + 0.1 * jax.random.normal(ks[4], (1, planes), jnp.float32),
        "b2": 0.1 * jax.random.normal(ks[5], (1, planes), jnp.float32),
    }
    if stride != 1 or in_planes != planes:
        p["wsc"] = 0.1 * jax.random.normal(ks[6], (in_planes, planes), jnp.float32)
        p["gsc"] = 1.0 + 0.1 * jax.random.normal(ks[7], (1, planes), jnp.float32)
        p["bsc"] = 0.1 * jax.random.normal(ks[8], (1, planes), jnp.float32)
    return p


def basic_block_reference(x_nchw, params, stride, operand_round=None):
    """Pure-JAX reference (NHWC convs + training-mode BN).

    operand_round: optional rounding applied to every conv operand, used to
    emulate the kernel's bf16 MXU inputs (BN math stays f32)."""
    rb = (lambda t: t) if operand_round is None else operand_round
    x = jnp.transpose(x_nchw, (0, 2, 3, 1))
    Cin = x.shape[-1]
    Cout = params["w1"].shape[-1]

    def conv(inp, w, s, pad):
        return jax.lax.conv_general_dilated(
            rb(inp), rb(w), (s, s), [(pad, pad), (pad, pad)],
            dimension_numbers=("NHWC", "HWIO", "NHWC"))

    def bn(y, g, b):
        mean = y.mean(axis=(0, 1, 2), keepdims=True)
        var = ((y - mean) ** 2).mean(axis=(0, 1, 2), keepdims=True)
        return (y - mean) / jnp.sqrt(var + EPS) * g.reshape(1, 1, 1, -1) + b.reshape(1, 1, 1, -1)

    out = jax.nn.relu(bn(conv(x, params["w1"], stride, 1), params["g1"], params["b1"]))
    out = bn(conv(out, params["w2"], 1, 1), params["g2"], params["b2"])
    if (stride != 1) or (Cin != Cout):
        sc = conv(x, params["wsc"].reshape(1, 1, Cin, Cout), stride, 0)
        sc = bn(sc, params["gsc"], params["bsc"])
    else:
        sc = rb(x)
    out = jax.nn.relu(out + sc)
    return jnp.transpose(out, (0, 3, 1, 2))


if __name__ == "__main__":
    key = jax.random.PRNGKey(0)
    kx, kp1, kp2 = jax.random.split(key, 3)

    x = jax.random.normal(kx, (2, 4, 16, 16), jnp.float32)   # NCHW, like PyTorch

    fwd = jax.jit(basic_block_forward, static_argnums=(2,))
    rb = lambda t: t.astype(jnp.bfloat16).astype(jnp.float32)   # bf16 operand rounding

    # Config A: projection shortcut (stride=2, channels 4 -> 8)
    params_a = init_params(kp1, in_planes=4, planes=8, stride=2)
    out_a = jax.block_until_ready(fwd(x, params_a, 2))
    assert out_a.shape == (2, 8, 8, 8)
    # tight check vs. reference computed with the same bf16 matmul operands
    assert jnp.allclose(out_a, basic_block_reference(x, params_a, 2, rb),
                        atol=5e-3, rtol=5e-3)
    # sanity check vs. exact f32 module math (bounded by bf16 operand rounding)
    assert jnp.allclose(out_a, basic_block_reference(x, params_a, 2),
                        atol=5e-2, rtol=5e-2)

    # Config B: identity shortcut (stride=1, 4 -> 4)
    params_b = init_params(kp2, in_planes=4, planes=4, stride=1)
    out_b = jax.block_until_ready(fwd(x, params_b, 1))
    assert out_b.shape == (2, 4, 16, 16)
    assert jnp.allclose(out_b, basic_block_reference(x, params_b, 1, rb),
                        atol=5e-3, rtol=5e-3)
    assert jnp.allclose(out_b, basic_block_reference(x, params_b, 1),
                        atol=5e-2, rtol=5e-2)

    print("KERNEL_OK")
</pallas_src>

<mosaic_0001>
module attributes {stable_mosaic.version = 11 : i64} {
  func.func @_basic_block_kernel(%arg0: memref<2x9x9x4xf32, #tpu.memory_space<vmem>>, %arg1: memref<2x9x9x4xf32, #tpu.memory_space<vmem>>, %arg2: memref<2x9x9x4xf32, #tpu.memory_space<vmem>>, %arg3: memref<2x9x9x4xf32, #tpu.memory_space<vmem>>, %arg4: memref<36x8xbf16, #tpu.memory_space<vmem>>, %arg5: memref<1x8xf32, #tpu.memory_space<vmem>>, %arg6: memref<1x8xf32, #tpu.memory_space<vmem>>, %arg7: memref<72x8xbf16, #tpu.memory_space<vmem>>, %arg8: memref<1x8xf32, #tpu.memory_space<vmem>>, %arg9: memref<1x8xf32, #tpu.memory_space<vmem>>, %arg10: memref<4x8xbf16, #tpu.memory_space<vmem>>, %arg11: memref<1x8xf32, #tpu.memory_space<vmem>>, %arg12: memref<1x8xf32, #tpu.memory_space<vmem>>, %arg13: memref<2x8x8x8xf32, #tpu.memory_space<vmem>>, %arg14: memref<128x36xbf16, #tpu.memory_space<vmem>>, %arg15: memref<2x10x10x8xf32, #tpu.memory_space<vmem>>, %arg16: memref<128x72xbf16, #tpu.memory_space<vmem>>) attributes {dimension_semantics = [], scalar_prefetch = 0 : i64, scratch_operands = 3 : i64, tpu.core_type = #tpu.core_type<tc>} {
    %c0 = arith.constant 0 : index
    %c0_0 = arith.constant 0 : index
    %c0_1 = arith.constant 0 : index
    %c0_2 = arith.constant 0 : index
    %0 = vector.load %arg0[%c0, %c0_0, %c0_1, %c0_2] : memref<2x9x9x4xf32, #tpu.memory_space<vmem>>, vector<2x8x8x4xf32>
    %1 = vector.shape_cast %0 : vector<2x8x8x4xf32> to vector<128x4xf32>
    %2 = arith.truncf %1 : vector<128x4xf32> to vector<128x4xbf16>
    %c0_3 = arith.constant 0 : index
    %c0_4 = arith.constant 0 : index
    %3 = vector.load %arg14[%c0_3, %c0_4] : memref<128x36xbf16, #tpu.memory_space<vmem>>, vector<128x4xbf16>
    tpu.vector_store %arg14[%c0_3, %c0_4], %2 {strides = array<i32>} : memref<128x36xbf16, #tpu.memory_space<vmem>>, vector<128x4xbf16>,
    %c0_5 = arith.constant 0 : index
    %c0_6 = arith.constant 0 : index
    %c0_7 = arith.constant 0 : index
    %c0_8 = arith.constant 0 : index
    %4 = vector.load %arg1[%c0_5, %c0_6, %c0_7, %c0_8] : memref<2x9x9x4xf32, #tpu.memory_space<vmem>>, vector<2x8x8x4xf32>
    %5 = vector.shape_cast %4 : vector<2x8x8x4xf32> to vector<128x4xf32>
    %6 = arith.truncf %5 : vector<128x4xf32> to vector<128x4xbf16>
    %c0_9 = arith.constant 0 : index
    %c4 = arith.constant 4 : index
    %7 = vector.load %arg14[%c0_9, %c4] : memref<128x36xbf16, #tpu.memory_space<vmem>>, vector<128x4xbf16>
    tpu.vector_store %arg14[%c0_9, %c4], %6 {strides = array<i32>} : memref<128x36xbf16, #tpu.memory_space<vmem>>, vector<128x4xbf16>,
    %c0_10 = arith.constant 0 : index
    %c0_11 = arith.constant 0 : index
    %c1 = arith.constant 1 : index
    %c0_12 = arith.constant 0 : index
    %8 = vector.load %arg0[%c0_10, %c0_11, %c1, %c0_12] : memref<2x9x9x4xf32, #tpu.memory_space<vmem>>, vector<2x8x8x4xf32>
    %9 = vector.shape_cast %8 : vector<2x8x8x4xf32> to vector<128x4xf32>
    %10 = arith.truncf %9 : vector<128x4xf32> to vector<128x4xbf16>
    %c0_13 = arith.constant 0 : index
    %c8 = arith.constant 8 : index
    %11 = vector.load %arg14[%c0_13, %c8] : memref<128x36xbf16, #tpu.memory_space<vmem>>, vector<128x4xbf16>
    tpu.vector_store %arg14[%c0_13, %c8], %10 {strides = array<i32>} : memref<128x36xbf16, #tpu.memory_space<vmem>>, vector<128x4xbf16>,
    %c0_14 = arith.constant 0 : index
    %c0_15 = arith.constant 0 : index
    %c0_16 = arith.constant 0 : index
    %c0_17 = arith.constant 0 : index
    %12 = vector.load %arg2[%c0_14, %c0_15, %c0_16, %c0_17] : memref<2x9x9x4xf32, #tpu.memory_space<vmem>>, vector<2x8x8x4xf32>
    %13 = vector.shape_cast %12 : vector<2x8x8x4xf32> to vector<128x4xf32>
    %14 = arith.truncf %13 : vector<128x4xf32> to vector<128x4xbf16>
    %c0_18 = arith.constant 0 : index
    %c12 = arith.constant 12 : index
    %15 = vector.load %arg14[%c0_18, %c12] : memref<128x36xbf16, #tpu.memory_space<vmem>>, vector<128x4xbf16>
    tpu.vector_store %arg14[%c0_18, %c12], %14 {strides = array<i32>} : memref<128x36xbf16, #tpu.memory_space<vmem>>, vector<128x4xbf16>,
    %c0_19 = arith.constant 0 : index
    %c0_20 = arith.constant 0 : index
    %c0_21 = arith.constant 0 : index
    %c0_22 = arith.constant 0 : index
    %16 = vector.load %arg3[%c0_19, %c0_20, %c0_21, %c0_22] : memref<2x9x9x4xf32, #tpu.memory_space<vmem>>, vector<2x8x8x4xf32>
    %17 = vector.shape_cast %16 : vector<2x8x8x4xf32> to vector<128x4xf32>
    %18 = arith.truncf %17 : vector<128x4xf32> to vector<128x4xbf16>
    %c0_23 = arith.constant 0 : index
    %c16 = arith.constant 16 : index
    %19 = vector.load %arg14[%c0_23, %c16] : memref<128x36xbf16, #tpu.memory_space<vmem>>, vector<128x4xbf16>
    tpu.vector_store %arg14[%c0_23, %c16], %18 {strides = array<i32>} : memref<128x36xbf16, #tpu.memory_space<vmem>>, vector<128x4xbf16>,
    %c0_24 = arith.constant 0 : index
    %c0_25 = arith.constant 0 : index
    %c1_26 = arith.constant 1 : index
    %c0_27 = arith.constant 0 : index
    %20 = vector.load %arg2[%c0_24, %c0_25, %c1_26, %c0_27] : memref<2x9x9x4xf32, #tpu.memory_space<vmem>>, vector<2x8x8x4xf32>
    %21 = vector.shape_cast %20 : vector<2x8x8x4xf32> to vector<128x4xf32>
    %22 = arith.truncf %21 : vector<128x4xf32> to vector<128x4xbf16>
    %c0_28 = arith.constant 0 : index
    %c20 = arith.constant 20 : index
    %23 = vector.load %arg14[%c0_28, %c20] : memref<128x36xbf16, #tpu.memory_space<vmem>>, vector<128x4xbf16>
    tpu.vector_store %arg14[%c0_28, %c20], %22 {strides = array<i32>} : memref<128x36xbf16, #tpu.memory_space<vmem>>, vector<128x4xbf16>,
    %c0_29 = arith.constant 0 : index
    %c1_30 = arith.constant 1 : index
    %c0_31 = arith.constant 0 : index
    %c0_32 = arith.constant 0 : index
    %24 = vector.load %arg0[%c0_29, %c1_30, %c0_31, %c0_32] : memref<2x9x9x4xf32, #tpu.memory_space<vmem>>, vector<2x8x8x4xf32>
    %25 = vector.shape_cast %24 : vector<2x8x8x4xf32> to vector<128x4xf32>
    %26 = arith.truncf %25 : vector<128x4xf32> to vector<128x4xbf16>
    %c0_33 = arith.constant 0 : index
    %c24 = arith.constant 24 : index
    %27 = vector.load %arg14[%c0_33, %c24] : memref<128x36xbf16, #tpu.memory_space<vmem>>, vector<128x4xbf16>
    tpu.vector_store %arg14[%c0_33, %c24], %26 {strides = array<i32>} : memref<128x36xbf16, #tpu.memory_space<vmem>>, vector<128x4xbf16>,
    %c0_34 = arith.constant 0 : index
    %c1_35 = arith.constant 1 : index
    %c0_36 = arith.constant 0 : index
    %c0_37 = arith.constant 0 : index
    %28 = vector.load %arg1[%c0_34, %c1_35, %c0_36, %c0_37] : memref<2x9x9x4xf32, #tpu.memory_space<vmem>>, vector<2x8x8x4xf32>
    %29 = vector.shape_cast %28 : vector<2x8x8x4xf32> to vector<128x4xf32>
    %30 = arith.truncf %29 : vector<128x4xf32> to vector<128x4xbf16>
    %c0_38 = arith.constant 0 : index
    %c28 = arith.constant 28 : index
    %31 = vector.load %arg14[%c0_38, %c28] : memref<128x36xbf16, #tpu.memory_space<vmem>>, vector<128x4xbf16>
    tpu.vector_store %arg14[%c0_38, %c28], %30 {strides = array<i32>} : memref<128x36xbf16, #tpu.memory_space<vmem>>, vector<128x4xbf16>,
    %c0_39 = arith.constant 0 : index
    %c1_40 = arith.constant 1 : index
    %c1_41 = arith.constant 1 : index
    %c0_42 = arith.constant 0 : index
    %32 = vector.load %arg0[%c0_39, %c1_40, %c1_41, %c0_42] : memref<2x9x9x4xf32, #tpu.memory_space<vmem>>, vector<2x8x8x4xf32>
    %33 = vector.shape_cast %32 : vector<2x8x8x4xf32> to vector<128x4xf32>
    %34 = arith.truncf %33 : vector<128x4xf32> to vector<128x4xbf16>
    %c0_43 = arith.constant 0 : index
    %c32 = arith.constant 32 : index
    %35 = vector.load %arg14[%c0_43, %c32] : memref<128x36xbf16, #tpu.memory_space<vmem>>, vector<128x4xbf16>
    tpu.vector_store %arg14[%c0_43, %c32], %34 {strides = array<i32>} : memref<128x36xbf16, #tpu.memory_space<vmem>>, vector<128x4xbf16>,
    %c0_44 = arith.constant 0 : index
    %c0_45 = arith.constant 0 : index
    %36 = vector.load %arg14[%c0_44, %c0_45] : memref<128x36xbf16, #tpu.memory_space<vmem>>, vector<128x36xbf16>
    %c0_46 = arith.constant 0 : index
    %c0_47 = arith.constant 0 : index
    %37 = vector.load %arg4[%c0_46, %c0_47] : memref<36x8xbf16, #tpu.memory_space<vmem>>, vector<36x8xbf16>
    %cst = arith.constant dense<0.000000e+00> : vector<128x8xf32>
    %38 = tpu.matmul %36, %37, %cst {dimension_numbers = #tpu.dot_dimension_numbers<[1], [0], [0], [1], [0, 0, 1, 1], [], []>} : vector<128x36xbf16>, vector<36x8xbf16>, vector<128x8xf32> -> vector<128x8xf32>
    %cst_48 = arith.constant dense<0.000000e+00> : vector<8xf32>
    %39 = vector.multi_reduction <add>, %38, %cst_48 [0] : vector<128x8xf32> to vector<8xf32>
    %40 = vector.shape_cast %39 : vector<8xf32> to vector<1x8xf32>
    %41 = arith.mulf %38, %38 : vector<128x8xf32>
    %cst_49 = arith.constant dense<0.000000e+00> : vector<8xf32>
    %42 = vector.multi_reduction <add>, %41, %cst_49 [0] : vector<128x8xf32> to vector<8xf32>
    %43 = vector.shape_cast %42 : vector<8xf32> to vector<1x8xf32>
    %cst_50 = arith.constant 7.812500e-03 : f32
    %44 = vector.broadcast %cst_50 : f32 to vector<1x8xf32>
    %45 = arith.mulf %40, %44 : vector<1x8xf32>
    %cst_51 = arith.constant 7.812500e-03 : f32
    %46 = vector.broadcast %cst_51 : f32 to vector<1x8xf32>
    %47 = arith.mulf %43, %46 : vector<1x8xf32>
    %48 = arith.mulf %45, %45 : vector<1x8xf32>
    %49 = arith.subf %47, %48 : vector<1x8xf32>
    %cst_52 = arith.constant 9.99999974E-6 : f32
    %50 = vector.broadcast %cst_52 : f32 to vector<1x8xf32>
    %51 = arith.addf %49, %50 : vector<1x8xf32>
    %52 = math.rsqrt %51 : vector<1x8xf32>
    %c0_53 = arith.constant 0 : index
    %c0_54 = arith.constant 0 : index
    %53 = vector.load %arg5[%c0_53, %c0_54] : memref<1x8xf32, #tpu.memory_space<vmem>>, vector<1x8xf32>
    %54 = arith.mulf %52, %53 : vector<1x8xf32>
    %55 = vector.broadcast %45 : vector<1x8xf32> to vector<128x8xf32>
    %56 = arith.subf %38, %55 : vector<128x8xf32>
    %57 = vector.broadcast %54 : vector<1x8xf32> to vector<128x8xf32>
    %58 = arith.mulf %56, %57 : vector<128x8xf32>
    %c0_55 = arith.constant 0 : index
    %c0_56 = arith.constant 0 : index
    %59 = vector.load %arg6[%c0_55, %c0_56] : memref<1x8xf32, #tpu.memory_space<vmem>>, vector<1x8xf32>
    %60 = vector.broadcast %59 : vector<1x8xf32> to vector<128x8xf32>
    %61 = arith.addf %58, %60 : vector<128x8xf32>
    %cst_57 = arith.constant 0.000000e+00 : f32
    %62 = vector.broadcast %cst_57 : f32 to vector<128x8xf32>
    %63 = arith.maximumf %61, %62 : vector<128x8xf32>
    %cst_58 = arith.constant 0.000000e+00 : f32
    %64 = vector.broadcast %cst_58 : f32 to vector<2x1x10x8xf32>
    %c0_59 = arith.constant 0 : index
    %c0_60 = arith.constant 0 : index
    %c0_61 = arith.constant 0 : index
    %c0_62 = arith.constant 0 : index
    %65 = vector.load %arg15[%c0_59, %c0_60, %c0_61, %c0_62] : memref<2x10x10x8xf32, #tpu.memory_space<vmem>>, vector<2x1x10x8xf32>
    tpu.vector_store %arg15[%c0_59, %c0_60, %c0_61, %c0_62], %64 {strides = array<i32>} : memref<2x10x10x8xf32, #tpu.memory_space<vmem>>, vector<2x1x10x8xf32>,
    %cst_63 = arith.constant 0.000000e+00 : f32
    %66 = vector.broadcast %cst_63 : f32 to vector<2x1x10x8xf32>
    %c0_64 = arith.constant 0 : index
    %c9 = arith.constant 9 : index
    %c0_65 = arith.constant 0 : index
    %c0_66 = arith.constant 0 : index
    %67 = vector.load %arg15[%c0_64, %c9, %c0_65, %c0_66] : memref<2x10x10x8xf32, #tpu.memory_space<vmem>>, vector<2x1x10x8xf32>
    tpu.vector_store %arg15[%c0_64, %c9, %c0_65, %c0_66], %66 {strides = array<i32>} : memref<2x10x10x8xf32, #tpu.memory_space<vmem>>, vector<2x1x10x8xf32>,
    %cst_67 = arith.constant 0.000000e+00 : f32
    %68 = vector.broadcast %cst_67 : f32 to vector<2x10x1x8xf32>
    %c0_68 = arith.constant 0 : index
    %c0_69 = arith.constant 0 : index
    %c0_70 = arith.constant 0 : index
    %c0_71 = arith.constant 0 : index
    %69 = vector.load %arg15[%c0_68, %c0_69, %c0_70, %c0_71] : memref<2x10x10x8xf32, #tpu.memory_space<vmem>>, vector<2x10x1x8xf32>
    tpu.vector_store %arg15[%c0_68, %c0_69, %c0_70, %c0_71], %68 {strides = array<i32>} : memref<2x10x10x8xf32, #tpu.memory_space<vmem>>, vector<2x10x1x8xf32>,
    %cst_72 = arith.constant 0.000000e+00 : f32
    %70 = vector.broadcast %cst_72 : f32 to vector<2x10x1x8xf32>
    %c0_73 = arith.constant 0 : index
    %c0_74 = arith.constant 0 : index
    %c9_75 = arith.constant 9 : index
    %c0_76 = arith.constant 0 : index
    %71 = vector.load %arg15[%c0_73, %c0_74, %c9_75, %c0_76] : memref<2x10x10x8xf32, #tpu.memory_space<vmem>>, vector<2x10x1x8xf32>
    tpu.vector_store %arg15[%c0_73, %c0_74, %c9_75, %c0_76], %70 {strides = array<i32>} : memref<2x10x10x8xf32, #tpu.memory_space<vmem>>, vector<2x10x1x8xf32>,
    %72 = vector.shape_cast %63 : vector<128x8xf32> to vector<2x8x8x8xf32>
    %c0_77 = arith.constant 0 : index
    %c1_78 = arith.constant 1 : index
    %c1_79 = arith.constant 1 : index
    %c0_80 = arith.constant 0 : index
    %73 = vector.load %arg15[%c0_77, %c1_78, %c1_79, %c0_80] : memref<2x10x10x8xf32, #tpu.memory_space<vmem>>, vector<2x8x8x8xf32>
    tpu.vector_store %arg15[%c0_77, %c1_78, %c1_79, %c0_80], %72 {strides = array<i32>} : memref<2x10x10x8xf32, #tpu.memory_space<vmem>>, vector<2x8x8x8xf32>,
    %c0_81 = arith.constant 0 : index
    %c0_82 = arith.constant 0 : index
    %c0_83 = arith.constant 0 : index
    %c0_84 = arith.constant 0 : index
    %74 = vector.load %arg15[%c0_81, %c0_82, %c0_83, %c0_84] : memref<2x10x10x8xf32, #tpu.memory_space<vmem>>, vector<2x8x8x8xf32>
    %75 = vector.shape_cast %74 : vector<2x8x8x8xf32> to vector<128x8xf32>
    %76 = arith.truncf %75 : vector<128x8xf32> to vector<128x8xbf16>
    %c0_85 = arith.constant 0 : index
    %c0_86 = arith.constant 0 : index
    %77 = vector.load %arg16[%c0_85, %c0_86] : memref<128x72xbf16, #tpu.memory_space<vmem>>, vector<128x8xbf16>
    tpu.vector_store %arg16[%c0_85, %c0_86], %76 {strides = array<i32>} : memref<128x72xbf16, #tpu.memory_space<vmem>>, vector<128x8xbf16>,
    %c0_87 = arith.constant 0 : index
    %c0_88 = arith.constant 0 : index
    %c1_89 = arith.constant 1 : index
    %c0_90 = arith.constant 0 : index
    %78 = vector.load %arg15[%c0_87, %c0_88, %c1_89, %c0_90] : memref<2x10x10x8xf32, #tpu.memory_space<vmem>>, vector<2x8x8x8xf32>
    %79 = vector.shape_cast %78 : vector<2x8x8x8xf32> to vector<128x8xf32>
    %80 = arith.truncf %79 : vector<128x8xf32> to vector<128x8xbf16>
    %c0_91 = arith.constant 0 : index
    %c8_92 = arith.constant 8 : index
    %81 = vector.load %arg16[%c0_91, %c8_92] : memref<128x72xbf16, #tpu.memory_space<vmem>>, vector<128x8xbf16>
    tpu.vector_store %arg16[%c0_91, %c8_92], %80 {strides = array<i32>} : memref<128x72xbf16, #tpu.memory_space<vmem>>, vector<128x8xbf16>,
    %c0_93 = arith.constant 0 : index
    %c0_94 = arith.constant 0 : index
    %c2 = arith.constant 2 : index
    %c0_95 = arith.constant 0 : index
    %82 = vector.load %arg15[%c0_93, %c0_94, %c2, %c0_95] : memref<2x10x10x8xf32, #tpu.memory_space<vmem>>, vector<2x8x8x8xf32>
    %83 = vector.shape_cast %82 : vector<2x8x8x8xf32> to vector<128x8xf32>
    %84 = arith.truncf %83 : vector<128x8xf32> to vector<128x8xbf16>
    %c0_96 = arith.constant 0 : index
    %c16_97 = arith.constant 16 : index
    %85 = vector.load %arg16[%c0_96, %c16_97] : memref<128x72xbf16, #tpu.memory_space<vmem>>, vector<128x8xbf16>
    tpu.vector_store %arg16[%c0_96, %c16_97], %84 {strides = array<i32>} : memref<128x72xbf16, #tpu.memory_space<vmem>>, vector<128x8xbf16>,
    %c0_98 = arith.constant 0 : index
    %c1_99 = arith.constant 1 : index
    %c0_100 = arith.constant 0 : index
    %c0_101 = arith.constant 0 : index
    %86 = vector.load %arg15[%c0_98, %c1_99, %c0_100, %c0_101] : memref<2x10x10x8xf32, #tpu.memory_space<vmem>>, vector<2x8x8x8xf32>
    %87 = vector.shape_cast %86 : vector<2x8x8x8xf32> to vector<128x8xf32>
    %88 = arith.truncf %87 : vector<128x8xf32> to vector<128x8xbf16>
    %c0_102 = arith.constant 0 : index
    %c24_103 = arith.constant 24 : index
    %89 = vector.load %arg16[%c0_102, %c24_103] : memref<128x72xbf16, #tpu.memory_space<vmem>>, vector<128x8xbf16>
    tpu.vector_store %arg16[%c0_102, %c24_103], %88 {strides = array<i32>} : memref<128x72xbf16, #tpu.memory_space<vmem>>, vector<128x8xbf16>,
    %c0_104 = arith.constant 0 : index
    %c1_105 = arith.constant 1 : index
    %c1_106 = arith.constant 1 : index
    %c0_107 = arith.constant 0 : index
    %90 = vector.load %arg15[%c0_104, %c1_105, %c1_106, %c0_107] : memref<2x10x10x8xf32, #tpu.memory_space<vmem>>, vector<2x8x8x8xf32>
    %91 = vector.shape_cast %90 : vector<2x8x8x8xf32> to vector<128x8xf32>
    %92 = arith.truncf %91 : vector<128x8xf32> to vector<128x8xbf16>
    %c0_108 = arith.constant 0 : index
    %c32_109 = arith.constant 32 : index
    %93 = vector.load %arg16[%c0_108, %c32_109] : memref<128x72xbf16, #tpu.memory_space<vmem>>, vector<128x8xbf16>
    tpu.vector_store %arg16[%c0_108, %c32_109], %92 {strides = array<i32>} : memref<128x72xbf16, #tpu.memory_space<vmem>>, vector<128x8xbf16>,
    %c0_110 = arith.constant 0 : index
    %c1_111 = arith.constant 1 : index
    %c2_112 = arith.constant 2 : index
    %c0_113 = arith.constant 0 : index
    %94 = vector.load %arg15[%c0_110, %c1_111, %c2_112, %c0_113] : memref<2x10x10x8xf32, #tpu.memory_space<vmem>>, vector<2x8x8x8xf32>
    %95 = vector.shape_cast %94 : vector<2x8x8x8xf32> to vector<128x8xf32>
    %96 = arith.truncf %95 : vector<128x8xf32> to vector<128x8xbf16>
    %c0_114 = arith.constant 0 : index
    %c40 = arith.constant 40 : index
    %97 = vector.load %arg16[%c0_114, %c40] : memref<128x72xbf16, #tpu.memory_space<vmem>>, vector<128x8xbf16>
    tpu.vector_store %arg16[%c0_114, %c40], %96 {strides = array<i32>} : memref<128x72xbf16, #tpu.memory_space<vmem>>, vector<128x8xbf16>,
    %c0_115 = arith.constant 0 : index
    %c2_116 = arith.constant 2 : index
    %c0_117 = arith.constant 0 : index
    %c0_118 = arith.constant 0 : index
    %98 = vector.load %arg15[%c0_115, %c2_116, %c0_117, %c0_118] : memref<2x10x10x8xf32, #tpu.memory_space<vmem>>, vector<2x8x8x8xf32>
    %99 = vector.shape_cast %98 : vector<2x8x8x8xf32> to vector<128x8xf32>
    %100 = arith.truncf %99 : vector<128x8xf32> to vector<128x8xbf16>
    %c0_119 = arith.constant 0 : index
    %c48 = arith.constant 48 : index
    %101 = vector.load %arg16[%c0_119, %c48] : memref<128x72xbf16, #tpu.memory_space<vmem>>, vector<128x8xbf16>
    tpu.vector_store %arg16[%c0_119, %c48], %100 {strides = array<i32>} : memref<128x72xbf16, #tpu.memory_space<vmem>>, vector<128x8xbf16>,
    %c0_120 = arith.constant 0 : index
    %c2_121 = arith.constant 2 : index
    %c1_122 = arith.constant 1 : index
    %c0_123 = arith.constant 0 : index
    %102 = vector.load %arg15[%c0_120, %c2_121, %c1_122, %c0_123] : memref<2x10x10x8xf32, #tpu.memory_space<vmem>>, vector<2x8x8x8xf32>
    %103 = vector.shape_cast %102 : vector<2x8x8x8xf32> to vector<128x8xf32>
    %104 = arith.truncf %103 : vector<128x8xf32> to vector<128x8xbf16>
    %c0_124 = arith.constant 0 : index
    %c56 = arith.constant 56 : index
    %105 = vector.load %arg16[%c0_124, %c56] : memref<128x72xbf16, #tpu.memory_space<vmem>>, vector<128x8xbf16>
    tpu.vector_store %arg16[%c0_124, %c56], %104 {strides = array<i32>} : memref<128x72xbf16, #tpu.memory_space<vmem>>, vector<128x8xbf16>,
    %c0_125 = arith.constant 0 : index
    %c2_126 = arith.constant 2 : index
    %c2_127 = arith.constant 2 : index
    %c0_128 = arith.constant 0 : index
    %106 = vector.load %arg15[%c0_125, %c2_126, %c2_127, %c0_128] : memref<2x10x10x8xf32, #tpu.memory_space<vmem>>, vector<2x8x8x8xf32>
    %107 = vector.shape_cast %106 : vector<2x8x8x8xf32> to vector<128x8xf32>
    %108 = arith.truncf %107 : vector<128x8xf32> to vector<128x8xbf16>
    %c0_129 = arith.constant 0 : index
    %c64 = arith.constant 64 : index
    %109 = vector.load %arg16[%c0_129, %c64] : memref<128x72xbf16, #tpu.memory_space<vmem>>, vector<128x8xbf16>
    tpu.vector_store %arg16[%c0_129, %c64], %108 {strides = array<i32>} : memref<128x72xbf16, #tpu.memory_space<vmem>>, vector<128x8xbf16>,
    %c0_130 = arith.constant 0 : index
    %c0_131 = arith.constant 0 : index
    %110 = vector.load %arg16[%c0_130, %c0_131] : memref<128x72xbf16, #tpu.memory_space<vmem>>, vector<128x72xbf16>
    %c0_132 = arith.constant 0 : index
    %c0_133 = arith.constant 0 : index
    %111 = vector.load %arg7[%c0_132, %c0_133] : memref<72x8xbf16, #tpu.memory_space<vmem>>, vector<72x8xbf16>
    %cst_134 = arith.constant dense<0.000000e+00> : vector<128x8xf32>
    %112 = tpu.matmul %110, %111, %cst_134 {dimension_numbers = #tpu.dot_dimension_numbers<[1], [0], [0], [1], [0, 0, 1, 1], [], []>} : vector<128x72xbf16>, vector<72x8xbf16>, vector<128x8xf32> -> vector<128x8xf32>
    %cst_135 = arith.constant dense<0.000000e+00> : vector<8xf32>
    %113 = vector.multi_reduction <add>, %112, %cst_135 [0] : vector<128x8xf32> to vector<8xf32>
    %114 = vector.shape_cast %113 : vector<8xf32> to vector<1x8xf32>
    %115 = arith.mulf %112, %112 : vector<128x8xf32>
    %cst_136 = arith.constant dense<0.000000e+00> : vector<8xf32>
    %116 = vector.multi_reduction <add>, %115, %cst_136 [0] : vector<128x8xf32> to vector<8xf32>
    %117 = vector.shape_cast %116 : vector<8xf32> to vector<1x8xf32>
    %cst_137 = arith.constant 7.812500e-03 : f32
    %118 = vector.broadcast %cst_137 : f32 to vector<1x8xf32>
    %119 = arith.mulf %114, %118 : vector<1x8xf32>
    %cst_138 = arith.constant 7.812500e-03 : f32
    %120 = vector.broadcast %cst_138 : f32 to vector<1x8xf32>
    %121 = arith.mulf %117, %120 : vector<1x8xf32>
    %122 = arith.mulf %119, %119 : vector<1x8xf32>
    %123 = arith.subf %121, %122 : vector<1x8xf32>
    %cst_139 = arith.constant 9.99999974E-6 : f32
    %124 = vector.broadcast %cst_139 : f32 to vector<1x8xf32>
    %125 = arith.addf %123, %124 : vector<1x8xf32>
    %126 = math.rsqrt %125 : vector<1x8xf32>
    %c0_140 = arith.constant 0 : index
    %c0_141 = arith.constant 0 : index
    %127 = vector.load %arg8[%c0_140, %c0_141] : memref<1x8xf32, #tpu.memory_space<vmem>>, vector<1x8xf32>
    %128 = arith.mulf %126, %127 : vector<1x8xf32>
    %129 = vector.broadcast %119 : vector<1x8xf32> to vector<128x8xf32>
    %130 = arith.subf %112, %129 : vector<128x8xf32>
    %131 = vector.broadcast %128 : vector<1x8xf32> to vector<128x8xf32>
    %132 = arith.mulf %130, %131 : vector<128x8xf32>
    %c0_142 = arith.constant 0 : index
    %c0_143 = arith.constant 0 : index
    %133 = vector.load %arg9[%c0_142, %c0_143] : memref<1x8xf32, #tpu.memory_space<vmem>>, vector<1x8xf32>
    %134 = vector.broadcast %133 : vector<1x8xf32> to vector<128x8xf32>
    %135 = arith.addf %132, %134 : vector<128x8xf32>
    %c0_144 = arith.constant 0 : index
    %c0_145 = arith.constant 0 : index
    %c0_146 = arith.constant 0 : index
    %c0_147 = arith.constant 0 : index
    %136 = vector.load %arg3[%c0_144, %c0_145, %c0_146, %c0_147] : memref<2x9x9x4xf32, #tpu.memory_space<vmem>>, vector<2x8x8x4xf32>
    %137 = vector.shape_cast %136 : vector<2x8x8x4xf32> to vector<128x4xf32>
    %138 = arith.truncf %137 : vector<128x4xf32> to vector<128x4xbf16>
    %c0_148 = arith.constant 0 : index
    %c0_149 = arith.constant 0 : index
    %139 = vector.load %arg10[%c0_148, %c0_149] : memref<4x8xbf16, #tpu.memory_space<vmem>>, vector<4x8xbf16>
    %cst_150 = arith.constant dense<0.000000e+00> : vector<128x8xf32>
    %140 = tpu.matmul %138, %139, %cst_150 {dimension_numbers = #tpu.dot_dimension_numbers<[1], [0], [0], [1], [0, 0, 1, 1], [], []>} : vector<128x4xbf16>, vector<4x8xbf16>, vector<128x8xf32> -> vector<128x8xf32>
    %cst_151 = arith.constant dense<0.000000e+00> : vector<8xf32>
    %141 = vector.multi_reduction <add>, %140, %cst_151 [0] : vector<128x8xf32> to vector<8xf32>
    %142 = vector.shape_cast %141 : vector<8xf32> to vector<1x8xf32>
    %143 = arith.mulf %140, %140 : vector<128x8xf32>
    %cst_152 = arith.constant dense<0.000000e+00> : vector<8xf32>
    %144 = vector.multi_reduction <add>, %143, %cst_152 [0] : vector<128x8xf32> to vector<8xf32>
    %145 = vector.shape_cast %144 : vector<8xf32> to vector<1x8xf32>
    %cst_153 = arith.constant 7.812500e-03 : f32
    %146 = vector.broadcast %cst_153 : f32 to vector<1x8xf32>
    %147 = arith.mulf %142, %146 : vector<1x8xf32>
    %cst_154 = arith.constant 7.812500e-03 : f32
    %148 = vector.broadcast %cst_154 : f32 to vector<1x8xf32>
    %149 = arith.mulf %145, %148 : vector<1x8xf32>
    %150 = arith.mulf %147, %147 : vector<1x8xf32>
    %151 = arith.subf %149, %150 : vector<1x8xf32>
    %cst_155 = arith.constant 9.99999974E-6 : f32
    %152 = vector.broadcast %cst_155 : f32 to vector<1x8xf32>
    %153 = arith.addf %151, %152 : vector<1x8xf32>
    %154 = math.rsqrt %153 : vector<1x8xf32>
    %c0_156 = arith.constant 0 : index
    %c0_157 = arith.constant 0 : index
    %155 = vector.load %arg11[%c0_156, %c0_157] : memref<1x8xf32, #tpu.memory_space<vmem>>, vector<1x8xf32>
    %156 = arith.mulf %154, %155 : vector<1x8xf32>
    %157 = vector.broadcast %147 : vector<1x8xf32> to vector<128x8xf32>
    %158 = arith.subf %140, %157 : vector<128x8xf32>
    %159 = vector.broadcast %156 : vector<1x8xf32> to vector<128x8xf32>
    %160 = arith.mulf %158, %159 : vector<128x8xf32>
    %c0_158 = arith.constant 0 : index
    %c0_159 = arith.constant 0 : index
    %161 = vector.load %arg12[%c0_158, %c0_159] : memref<1x8xf32, #tpu.memory_space<vmem>>, vector<1x8xf32>
    %162 = vector.broadcast %161 : vector<1x8xf32> to vector<128x8xf32>
    %163 = arith.addf %160, %162 : vector<128x8xf32>
    %164 = arith.addf %135, %163 : vector<128x8xf32>
    %cst_160 = arith.constant 0.000000e+00 : f32
    %165 = vector.broadcast %cst_160 : f32 to vector<128x8xf32>
    %166 = arith.maximumf %164, %165 : vector<128x8xf32>
    %167 = vector.shape_cast %166 : vector<128x8xf32> to vector<2x8x8x8xf32>
    %c0_161 = arith.constant 0 : index
    %c0_162 = arith.constant 0 : index
    %c0_163 = arith.constant 0 : index
    %c0_164 = arith.constant 0 : index
    %168 = vector.load %arg13[%c0_161, %c0_162, %c0_163, %c0_164] : memref<2x8x8x8xf32, #tpu.memory_space<vmem>>, vector<2x8x8x8xf32>
    tpu.vector_store %arg13[%c0_161, %c0_162, %c0_163, %c0_164], %167 {strides = array<i32>} : memref<2x8x8x8xf32, #tpu.memory_space<vmem>>, vector<2x8x8x8xf32>,
    return
  }
}

</mosaic_0001>

<llo_original>
// kernel: basic_block_forward.1
$region0: #{basic_block_forward.1}
  #allocation0 [shape = 'u32[]', space=smem, size = 0x4, offset = 0x4, fixed_abs, tag = 'smem constant byte address 0x4 - core index']
  #allocation1 [shape = 'u32[72,128]{1,0:T(1,128)}', space=vmem, size = 0x9000, scoped, tag = 'internal scratch']
  #allocation2 [shape = 'bf16[128,36]{1,0:T(8,128)(2,1)}', space=vmem, size = 0x8000, scoped, tag = 'scratch operand']
  #allocation3 [shape = 'f32[2,10,10,8]{3,2,1,0:T(8,128)}', space=vmem, size = 0x28000, scoped, tag = 'scratch operand']
  #allocation4 [shape = 'bf16[128,72]{1,0:T(8,128)(2,1)}', space=vmem, size = 0x8000, scoped, tag = 'scratch operand']
  %s0 = inlined_call_operand.vmem [shape: f32[2,9,9,4], index: 0, kind: input, shape index: {}]
  %s1 = inlined_call_operand.vmem [shape: f32[2,9,9,4], index: 1, kind: input, shape index: {}]
  %s2 = inlined_call_operand.vmem [shape: f32[2,9,9,4], index: 2, kind: input, shape index: {}]
  %s3 = inlined_call_operand.vmem [shape: f32[2,9,9,4], index: 3, kind: input, shape index: {}]
  %s4 = inlined_call_operand.vmem [shape: bf16[36,8], index: 4, kind: input, shape index: {}]
  %s5 = inlined_call_operand.vmem [shape: f32[1,8], index: 5, kind: input, shape index: {}]
  %s6 = inlined_call_operand.vmem [shape: f32[1,8], index: 6, kind: input, shape index: {}]
  %s7 = inlined_call_operand.vmem [shape: bf16[72,8], index: 7, kind: input, shape index: {}]
  %s8 = inlined_call_operand.vmem [shape: f32[1,8], index: 8, kind: input, shape index: {}]
  %s9 = inlined_call_operand.vmem [shape: f32[1,8], index: 9, kind: input, shape index: {}]
  %s10 = inlined_call_operand.vmem [shape: bf16[4,8], index: 10, kind: input, shape index: {}]
  %s11 = inlined_call_operand.vmem [shape: f32[1,8], index: 11, kind: input, shape index: {}]
  %s12 = inlined_call_operand.vmem [shape: f32[1,8], index: 12, kind: input, shape index: {}]
  %s13 = inlined_call_operand.vmem [shape: f32[2,8,8,8], index: 13, kind: output, shape index: {}]
  %s14 = sld [smem:[#allocation0]]
  $region62: #{basic_block_forward.1} parent=0
    _
  %s16 = ssub.s32 1, %s14
  %s17 = scalar_select 0, %s16, %s14
  // Predicated region
  $region2: #{basic_block_forward.1} parent=0 // pred_check
    _
  $region3: #{basic_block_forward.1} parent=0 // pred_check_branch
    %19 = sbr.rel (0) target = $region5
  $region4: #{basic_block_forward.1} parent=0 // pred_region
    _
  $region5: #{basic_block_forward.1} parent=0 // pred_fallthru
    _
  // Predicated region
  $region6: #{basic_block_forward.1} parent=0 // pred_check
    _
  $region7: #{basic_block_forward.1} parent=0 // pred_check_branch
    %21 = sbr.rel (0) target = $region9
  $region8: #{basic_block_forward.1} parent=0 // pred_region
    _
  $region9: #{basic_block_forward.1} parent=0 // pred_fallthru
    _
  // Predicated region
  $region10: #{basic_block_forward.1} parent=0 // pred_check
    _
  $region11: #{basic_block_forward.1} parent=0 // pred_check_branch
    %23 = sbr.rel (0) target = $region13
  $region12: #{basic_block_forward.1} parent=0 // pred_region
    _
  $region13: #{basic_block_forward.1} parent=0 // pred_fallthru
    _
  // Predicated region
  $region14: #{basic_block_forward.1} parent=0 // pred_check
    _
  $region15: #{basic_block_forward.1} parent=0 // pred_check_branch
    %25 = sbr.rel (0) target = $region17
  $region16: #{basic_block_forward.1} parent=0 // pred_region
    _
  $region17: #{basic_block_forward.1} parent=0 // pred_fallthru
    _
  // Predicated region
  $region18: #{basic_block_forward.1} parent=0 // pred_check
    _
  $region19: #{basic_block_forward.1} parent=0 // pred_check_branch
    %27 = sbr.rel (0) target = $region21
  $region20: #{basic_block_forward.1} parent=0 // pred_region
    _
  $region21: #{basic_block_forward.1} parent=0 // pred_fallthru
    _
  // Predicated region
  $region22: #{basic_block_forward.1} parent=0 // pred_check
    _
  $region23: #{basic_block_forward.1} parent=0 // pred_check_branch
    %29 = sbr.rel (0) target = $region25
  $region24: #{basic_block_forward.1} parent=0 // pred_region
    _
  $region25: #{basic_block_forward.1} parent=0 // pred_fallthru
    _
  // Predicated region
  $region26: #{basic_block_forward.1} parent=0 // pred_check
    _
  $region27: #{basic_block_forward.1} parent=0 // pred_check_branch
    %31 = sbr.rel (0) target = $region29
  $region28: #{basic_block_forward.1} parent=0 // pred_region
    _
  $region29: #{basic_block_forward.1} parent=0 // pred_fallthru
    _
  // Predicated region
  $region30: #{basic_block_forward.1} parent=0 // pred_check
    _
  $region31: #{basic_block_forward.1} parent=0 // pred_check_branch
    %33 = sbr.rel (0) target = $region33
  $region32: #{basic_block_forward.1} parent=0 // pred_region
    _
  $region33: #{basic_block_forward.1} parent=0 // pred_fallthru
    _
  // Predicated region
  $region34: #{basic_block_forward.1} parent=0 // pred_check
    _
  $region35: #{basic_block_forward.1} parent=0 // pred_check_branch
    %35 = sbr.rel (0) target = $region37
  $region36: #{basic_block_forward.1} parent=0 // pred_region
    _
  $region37: #{basic_block_forward.1} parent=0 // pred_fallthru
    _
  // Predicated region
  $region38: #{basic_block_forward.1} parent=0 // pred_check
    _
  $region39: #{basic_block_forward.1} parent=0 // pred_check_branch
    %37 = sbr.rel (0) target = $region41
  $region40: #{basic_block_forward.1} parent=0 // pred_region
    _
  $region41: #{basic_block_forward.1} parent=0 // pred_fallthru
    _
  // Predicated region
  $region42: #{basic_block_forward.1} parent=0 // pred_check
    _
  $region43: #{basic_block_forward.1} parent=0 // pred_check_branch
    %39 = sbr.rel (0) target = $region45
  $region44: #{basic_block_forward.1} parent=0 // pred_region
    _
  $region45: #{basic_block_forward.1} parent=0 // pred_fallthru
    _
  // Predicated region
  $region46: #{basic_block_forward.1} parent=0 // pred_check
    _
  $region47: #{basic_block_forward.1} parent=0 // pred_check_branch
    %41 = sbr.rel (0) target = $region49
  $region48: #{basic_block_forward.1} parent=0 // pred_region
    _
  $region49: #{basic_block_forward.1} parent=0 // pred_fallthru
    _
  // Predicated region
  $region50: #{basic_block_forward.1} parent=0 // pred_check
    _
  $region51: #{basic_block_forward.1} parent=0 // pred_check_branch
    %43 = sbr.rel (0) target = $region53
  $region52: #{basic_block_forward.1} parent=0 // pred_region
    _
  $region53: #{basic_block_forward.1} parent=0 // pred_fallthru
    _
  %v45 = vld [vmem:[%s0] sm:$0xff]
  %v46 = vld [vmem:[%s0 + $0x10] sm:$0xff]
  %v47 = vld [vmem:[%s0 + $0x20] sm:$0xff]
  %v48 = vld [vmem:[%s0 + $0x30] sm:$0xff]
  %v49 = vld [vmem:[%s0 + $0x40] sm:$0xff]
  %v50 = vld [vmem:[%s0 + $0x50] sm:$0xff]
  %v51 = vld [vmem:[%s0 + $0x60] sm:$0xff]
  %v52 = vld [vmem:[%s0 + $0x70] sm:$0xff]
  %v53 = vld [vmem:[%s0 + $0x90] sm:$0xff]
  %v54 = vld [vmem:[%s0 + $0xa0] sm:$0xff]
  %v55 = vld [vmem:[%s0 + $0xb0] sm:$0xff]
  %v56 = vld [vmem:[%s0 + $0xc0] sm:$0xff]
  %v57 = vld [vmem:[%s0 + $0xd0] sm:$0xff]
  %v58 = vld [vmem:[%s0 + $0xe0] sm:$0xff]
  %v59 = vld [vmem:[%s0 + $0xf0] sm:$0xff]
  %v60 = vld [vmem:[%s0 + $0x100] sm:$0xff]
  %v61 = vpack.c.bf16 %v45, %v45
  %v62 = vpack.c.bf16 %v46, %v46
  %v63 = vpack.c.bf16 %v47, %v47
  %v64 = vpack.c.bf16 %v48, %v48
  %v65 = vpack.c.bf16 %v49, %v49
  %v66 = vpack.c.bf16 %v50, %v50
  %v67 = vpack.c.bf16 %v51, %v51
  %v68 = vpack.c.bf16 %v52, %v52
  %v69 = vpack.c.bf16 %v53, %v53
  %v70 = vpack.c.bf16 %v54, %v54
  %v71 = vpack.c.bf16 %v55, %v55
  %v72 = vpack.c.bf16 %v56, %v56
  %v73 = vpack.c.bf16 %v57, %v57
  %v74 = vpack.c.bf16 %v58, %v58
  %v75 = vpack.c.bf16 %v59, %v59
  %v76 = vpack.c.bf16 %v60, %v60
  %vm77 = vcmask 27648
  %78 = vst.msk [vmem:[#allocation2] sm:$0xf] %vm77, %v61
  %79 = vst.msk [vmem:[#allocation2 + $0x4] sm:$0xf] %vm77, %v62
  %80 = vst.msk [vmem:[#allocation2 + $0x8] sm:$0xf] %vm77, %v63
  %81 = vst.msk [vmem:[#allocation2 + $0xc] sm:$0xf] %vm77, %v64
  %82 = vst.msk [vmem:[#allocation2 + $0x10] sm:$0xf] %vm77, %v65
  %83 = vst.msk [vmem:[#allocation2 + $0x14] sm:$0xf] %vm77, %v66
  %84 = vst.msk [vmem:[#allocation2 + $0x18] sm:$0xf] %vm77, %v67
  %85 = vst.msk [vmem:[#allocation2 + $0x1c] sm:$0xf] %vm77, %v68
  %86 = vst.msk [vmem:[#allocation2 + $0x20] sm:$0xf] %vm77, %v69
  %87 = vst.msk [vmem:[#allocation2 + $0x24] sm:$0xf] %vm77, %v70
  %88 = vst.msk [vmem:[#allocation2 + $0x28] sm:$0xf] %vm77, %v71
  %89 = vst.msk [vmem:[#allocation2 + $0x2c] sm:$0xf] %vm77, %v72
  %90 = vst.msk [vmem:[#allocation2 + $0x30] sm:$0xf] %vm77, %v73
  %91 = vst.msk [vmem:[#allocation2 + $0x34] sm:$0xf] %vm77, %v74
  %92 = vst.msk [vmem:[#allocation2 + $0x38] sm:$0xf] %vm77, %v75
  %93 = vst.msk [vmem:[#allocation2 + $0x3c] sm:$0xf] %vm77, %v76
  %v94 = vld [vmem:[%s1] sm:$0xff]
  %v95 = vld [vmem:[%s1 + $0x10] sm:$0xff]
  %v96 = vld [vmem:[%s1 + $0x20] sm:$0xff]
  %v97 = vld [vmem:[%s1 + $0x30] sm:$0xff]
  %v98 = vld [vmem:[%s1 + $0x40] sm:$0xff]
  %v99 = vld [vmem:[%s1 + $0x50] sm:$0xff]
  %v100 = vld [vmem:[%s1 + $0x60] sm:$0xff]
  %v101 = vld [vmem:[%s1 + $0x70] sm:$0xff]
  %v102 = vld [vmem:[%s1 + $0x90] sm:$0xff]
  %v103 = vld [vmem:[%s1 + $0xa0] sm:$0xff]
  %v104 = vld [vmem:[%s1 + $0xb0] sm:$0xff]
  %v105 = vld [vmem:[%s1 + $0xc0] sm:$0xff]
  %v106 = vld [vmem:[%s1 + $0xd0] sm:$0xff]
  %v107 = vld [vmem:[%s1 + $0xe0] sm:$0xff]
  %v108 = vld [vmem:[%s1 + $0xf0] sm:$0xff]
  %v109 = vld [vmem:[%s1 + $0x100] sm:$0xff]
  %v110 = vpack.c.bf16 %v94, %v94
  %v111 = vpack.c.bf16 %v95, %v95
  %v112 = vpack.c.bf16 %v96, %v96
  %v113 = vpack.c.bf16 %v97, %v97
  %v114 = vpack.c.bf16 %v98, %v98
  %v115 = vpack.c.bf16 %v99, %v99
  %v116 = vpack.c.bf16 %v100, %v100
  %v117 = vpack.c.bf16 %v101, %v101
  %v118 = vpack.c.bf16 %v102, %v102
  %v119 = vpack.c.bf16 %v103, %v103
  %v120 = vpack.c.bf16 %v104, %v104
  %v121 = vpack.c.bf16 %v105, %v105
  %v122 = vpack.c.bf16 %v106, %v106
  %v123 = vpack.c.bf16 %v107, %v107
  %v124 = vpack.c.bf16 %v108, %v108
  %v125 = vpack.c.bf16 %v109, %v109
  %142 = vrot.lane.b32.xlu0 %v110, 4
  %v143 = vpop.permute.xlu0 %142
  %144 = vrot.lane.b32.xlu0 %v111, 4
  %v145 = vpop.permute.xlu0 %144
  %146 = vrot.lane.b32.xlu0 %v112, 4
  %v147 = vpop.permute.xlu0 %146
  %148 = vrot.lane.b32.xlu0 %v113, 4
  %v149 = vpop.permute.xlu0 %148
  %150 = vrot.lane.b32.xlu0 %v114, 4
  %v151 = vpop.permute.xlu0 %150
  %152 = vrot.lane.b32.xlu0 %v115, 4
  %v153 = vpop.permute.xlu0 %152
  %154 = vrot.lane.b32.xlu0 %v116, 4
  %v155 = vpop.permute.xlu0 %154
  %156 = vrot.lane.b32.xlu0 %v117, 4
  %v157 = vpop.permute.xlu0 %156
  %158 = vrot.lane.b32.xlu0 %v118, 4
  %v159 = vpop.permute.xlu0 %158
  %160 = vrot.lane.b32.xlu0 %v119, 4
  %v161 = vpop.permute.xlu0 %160
  %162 = vrot.lane.b32.xlu0 %v120, 4
  %v163 = vpop.permute.xlu0 %162
  %164 = vrot.lane.b32.xlu0 %v121, 4
  %v165 = vpop.permute.xlu0 %164
  %166 = vrot.lane.b32.xlu0 %v122, 4
  %v167 = vpop.permute.xlu0 %166
  %168 = vrot.lane.b32.xlu0 %v123, 4
  %v169 = vpop.permute.xlu0 %168
  %170 = vrot.lane.b32.xlu0 %v124, 4
  %v171 = vpop.permute.xlu0 %170
  %172 = vrot.lane.b32.xlu0 %v125, 4
  %v173 = vpop.permute.xlu0 %172
  %vm190 = vcmask 60448
  %191 = vst.msk [vmem:[#allocation2] sm:$0xf] %vm190, %v143
  %192 = vst.msk [vmem:[#allocation2 + $0x4] sm:$0xf] %vm190, %v145
  %193 = vst.msk [vmem:[#allocation2 + $0x8] sm:$0xf] %vm190, %v147
  %194 = vst.msk [vmem:[#allocation2 + $0xc] sm:$0xf] %vm190, %v149
  %195 = vst.msk [vmem:[#allocation2 + $0x10] sm:$0xf] %vm190, %v151
  %196 = vst.msk [vmem:[#allocation2 + $0x14] sm:$0xf] %vm190, %v153
  %197 = vst.msk [vmem:[#allocation2 + $0x18] sm:$0xf] %vm190, %v155
  %198 = vst.msk [vmem:[#allocation2 + $0x1c] sm:$0xf] %vm190, %v157
  %199 = vst.msk [vmem:[#allocation2 + $0x20] sm:$0xf] %vm190, %v159
  %200 = vst.msk [vmem:[#allocation2 + $0x24] sm:$0xf] %vm190, %v161
  %201 = vst.msk [vmem:[#allocation2 + $0x28] sm:$0xf] %vm190, %v163
  %202 = vst.msk [vmem:[#allocation2 + $0x2c] sm:$0xf] %vm190, %v165
  %203 = vst.msk [vmem:[#allocation2 + $0x30] sm:$0xf] %vm190, %v167
  %204 = vst.msk [vmem:[#allocation2 + $0x34] sm:$0xf] %vm190, %v169
  %205 = vst.msk [vmem:[#allocation2 + $0x38] sm:$0xf] %vm190, %v171
  %206 = vst.msk [vmem:[#allocation2 + $0x3c] sm:$0xf] %vm190, %v173
  %v207 = vld [vmem:[%s0 + $0x1] sm:$0xff]
  %v208 = vld [vmem:[%s0 + $0x11] sm:$0xff]
  %v209 = vld [vmem:[%s0 + $0x21] sm:$0xff]
  %v210 = vld [vmem:[%s0 + $0x31] sm:$0xff]
  %v211 = vld [vmem:[%s0 + $0x41] sm:$0xff]
  %v212 = vld [vmem:[%s0 + $0x51] sm:$0xff]
  %v213 = vld [vmem:[%s0 + $0x61] sm:$0xff]
  %v214 = vld [vmem:[%s0 + $0x71] sm:$0xff]
  %v215 = vld [vmem:[%s0 + $0x91] sm:$0xff]
  %v216 = vld [vmem:[%s0 + $0xa1] sm:$0xff]
  %v217 = vld [vmem:[%s0 + $0xb1] sm:$0xff]
  %v218 = vld [vmem:[%s0 + $0xc1] sm:$0xff]
  %v219 = vld [vmem:[%s0 + $0xd1] sm:$0xff]
  %v220 = vld [vmem:[%s0 + $0xe1] sm:$0xff]
  %v221 = vld [vmem:[%s0 + $0xf1] sm:$0xff]
  %v222 = vld [vmem:[%s0 + $0x101] sm:$0xff]
  %v223 = vpack.c.bf16 %v207, %v207
  %v224 = vpack.c.bf16 %v208, %v208
  %v225 = vpack.c.bf16 %v209, %v209
  %v226 = vpack.c.bf16 %v210, %v210
  %v227 = vpack.c.bf16 %v211, %v211
  %v228 = vpack.c.bf16 %v212, %v212
  %v229 = vpack.c.bf16 %v213, %v213
  %v230 = vpack.c.bf16 %v214, %v214
  %v231 = vpack.c.bf16 %v215, %v215
  %v232 = vpack.c.bf16 %v216, %v216
  %v233 = vpack.c.bf16 %v217, %v217
  %v234 = vpack.c.bf16 %v218, %v218
  %v235 = vpack.c.bf16 %v219, %v219
  %v236 = vpack.c.bf16 %v220, %v220
  %v237 = vpack.c.bf16 %v221, %v221
  %v238 = vpack.c.bf16 %v222, %v222
  %255 = vrot.lane.b32.xlu0 %v223, 8
  %v256 = vpop.permute.xlu0 %255
  %257 = vrot.lane.b32.xlu0 %v224, 8
  %v258 = vpop.permute.xlu0 %257
  %259 = vrot.lane.b32.xlu0 %v225, 8
  %v260 = vpop.permute.xlu0 %259
  %261 = vrot.lane.b32.xlu0 %v226, 8
  %v262 = vpop.permute.xlu0 %261
  %263 = vrot.lane.b32.xlu0 %v227, 8
  %v264 = vpop.permute.xlu0 %263
  %265 = vrot.lane.b32.xlu0 %v228, 8
  %v266 = vpop.permute.xlu0 %265
  %267 = vrot.lane.b32.xlu0 %v229, 8
  %v268 = vpop.permute.xlu0 %267
  %269 = vrot.lane.b32.xlu0 %v230, 8
  %v270 = vpop.permute.xlu0 %269
  %271 = vrot.lane.b32.xlu0 %v231, 8
  %v272 = vpop.permute.xlu0 %271
  %273 = vrot.lane.b32.xlu0 %v232, 8
  %v274 = vpop.permute.xlu0 %273
  %275 = vrot.lane.b32.xlu0 %v233, 8
  %v276 = vpop.permute.xlu0 %275
  %277 = vrot.lane.b32.xlu0 %v234, 8
  %v278 = vpop.permute.xlu0 %277
  %279 = vrot.lane.b32.xlu0 %v235, 8
  %v280 = vpop.permute.xlu0 %279
  %281 = vrot.lane.b32.xlu0 %v236, 8
  %v282 = vpop.permute.xlu0 %281
  %283 = vrot.lane.b32.xlu0 %v237, 8
  %v284 = vpop.permute.xlu0 %283
  %285 = vrot.lane.b32.xlu0 %v238, 8
  %v286 = vpop.permute.xlu0 %285
  %vm303 = vcmask 93248
  %304 = vst.msk [vmem:[#allocation2] sm:$0xf] %vm303, %v256
  %305 = vst.msk [vmem:[#allocation2 + $0x4] sm:$0xf] %vm303, %v258
  %306 = vst.msk [vmem:[#allocation2 + $0x8] sm:$0xf] %vm303, %v260
  %307 = vst.msk [vmem:[#allocation2 + $0xc] sm:$0xf] %vm303, %v262
  %308 = vst.msk [vmem:[#allocation2 + $0x10] sm:$0xf] %vm303, %v264
  %309 = vst.msk [vmem:[#allocation2 + $0x14] sm:$0xf] %vm303, %v266
  %310 = vst.msk [vmem:[#allocation2 + $0x18] sm:$0xf] %vm303, %v268
  %311 = vst.msk [vmem:[#allocation2 + $0x1c] sm:$0xf] %vm303, %v270
  %312 = vst.msk [vmem:[#allocation2 + $0x20] sm:$0xf] %vm303, %v272
  %313 = vst.msk [vmem:[#allocation2 + $0x24] sm:$0xf] %vm303, %v274
  %314 = vst.msk [vmem:[#allocation2 + $0x28] sm:$0xf] %vm303, %v276
  %315 = vst.msk [vmem:[#allocation2 + $0x2c] sm:$0xf] %vm303, %v278
  %316 = vst.msk [vmem:[#allocation2 + $0x30] sm:$0xf] %vm303, %v280
  %317 = vst.msk [vmem:[#allocation2 + $0x34] sm:$0xf] %vm303, %v282
  %318 = vst.msk [vmem:[#allocation2 + $0x38] sm:$0xf] %vm303, %v284
  %319 = vst.msk [vmem:[#allocation2 + $0x3c] sm:$0xf] %vm303, %v286
  %v320 = vld [vmem:[%s2] sm:$0xff]
  %v321 = vld [vmem:[%s2 + $0x10] sm:$0xff]
  %v322 = vld [vmem:[%s2 + $0x20] sm:$0xff]
  %v323 = vld [vmem:[%s2 + $0x30] sm:$0xff]
  %v324 = vld [vmem:[%s2 + $0x40] sm:$0xff]
  %v325 = vld [vmem:[%s2 + $0x50] sm:$0xff]
  %v326 = vld [vmem:[%s2 + $0x60] sm:$0xff]
  %v327 = vld [vmem:[%s2 + $0x70] sm:$0xff]
  %v328 = vld [vmem:[%s2 + $0x90] sm:$0xff]
  %v329 = vld [vmem:[%s2 + $0xa0] sm:$0xff]
  %v330 = vld [vmem:[%s2 + $0xb0] sm:$0xff]
  %v331 = vld [vmem:[%s2 + $0xc0] sm:$0xff]
  %v332 = vld [vmem:[%s2 + $0xd0] sm:$0xff]
  %v333 = vld [vmem:[%s2 + $0xe0] sm:$0xff]
  %v334 = vld [vmem:[%s2 + $0xf0] sm:$0xff]
  %v335 = vld [vmem:[%s2 + $0x100] sm:$0xff]
  %v336 = vpack.c.bf16 %v320, %v320
  %v337 = vpack.c.bf16 %v321, %v321
  %v338 = vpack.c.bf16 %v322, %v322
  %v339 = vpack.c.bf16 %v323, %v323
  %v340 = vpack.c.bf16 %v324, %v324
  %v341 = vpack.c.bf16 %v325, %v325
  %v342 = vpack.c.bf16 %v326, %v326
  %v343 = vpack.c.bf16 %v327, %v327
  %v344 = vpack.c.bf16 %v328, %v328
  %v345 = vpack.c.bf16 %v329, %v329
  %v346 = vpack.c.bf16 %v330, %v330
  %v347 = vpack.c.bf16 %v331, %v331
  %v348 = vpack.c.bf16 %v332, %v332
  %v349 = vpack.c.bf16 %v333, %v333
  %v350 = vpack.c.bf16 %v334, %v334
  %v351 = vpack.c.bf16 %v335, %v335
  %368 = vrot.lane.b32.xlu0 %v336, 12
  %v369 = vpop.permute.xlu0 %368
  %370 = vrot.lane.b32.xlu0 %v337, 12
  %v371 = vpop.permute.xlu0 %370
  %372 = vrot.lane.b32.xlu0 %v338, 12
  %v373 = vpop.permute.xlu0 %372
  %374 = vrot.lane.b32.xlu0 %v339, 12
  %v375 = vpop.permute.xlu0 %374
  %376 = vrot.lane.b32.xlu0 %v340, 12
  %v377 = vpop.permute.xlu0 %376
  %378 = vrot.lane.b32.xlu0 %v341, 12
  %v379 = vpop.permute.xlu0 %378
  %380 = vrot.lane.b32.xlu0 %v342, 12
  %v381 = vpop.permute.xlu0 %380
  %382 = vrot.lane.b32.xlu0 %v343, 12
  %v383 = vpop.permute.xlu0 %382
  %384 = vrot.lane.b32.xlu0 %v344, 12
  %v385 = vpop.permute.xlu0 %384
  %386 = vrot.lane.b32.xlu0 %v345, 12
  %v387 = vpop.permute.xlu0 %386
  %388 = vrot.lane.b32.xlu0 %v346, 12
  %v389 = vpop.permute.xlu0 %388
  %390 = vrot.lane.b32.xlu0 %v347, 12
  %v391 = vpop.permute.xlu0 %390
  %392 = vrot.lane.b32.xlu0 %v348, 12
  %v393 = vpop.permute.xlu0 %392
  %394 = vrot.lane.b32.xlu0 %v349, 12
  %v395 = vpop.permute.xlu0 %394
  %396 = vrot.lane.b32.xlu0 %v350, 12
  %v397 = vpop.permute.xlu0 %396
  %398 = vrot.lane.b32.xlu0 %v351, 12
  %v399 = vpop.permute.xlu0 %398
  %vm416 = vcmask 126048
  %417 = vst.msk [vmem:[#allocation2] sm:$0xf] %vm416, %v369
  %418 = vst.msk [vmem:[#allocation2 + $0x4] sm:$0xf] %vm416, %v371
  %419 = vst.msk [vmem:[#allocation2 + $0x8] sm:$0xf] %vm416, %v373
  %420 = vst.msk [vmem:[#allocation2 + $0xc] sm:$0xf] %vm416, %v375
  %421 = vst.msk [vmem:[#allocation2 + $0x10] sm:$0xf] %vm416, %v377
  %422 = vst.msk [vmem:[#allocation2 + $0x14] sm:$0xf] %vm416, %v379
  %423 = vst.msk [vmem:[#allocation2 + $0x18] sm:$0xf] %vm416, %v381
  %424 = vst.msk [vmem:[#allocation2 + $0x1c] sm:$0xf] %vm416, %v383
  %425 = vst.msk [vmem:[#allocation2 + $0x20] sm:$0xf] %vm416, %v385
  %426 = vst.msk [vmem:[#allocation2 + $0x24] sm:$0xf] %vm416, %v387
  %427 = vst.msk [vmem:[#allocation2 + $0x28] sm:$0xf] %vm416, %v389
  %428 = vst.msk [vmem:[#allocation2 + $0x2c] sm:$0xf] %vm416, %v391
  %429 = vst.msk [vmem:[#allocation2 + $0x30] sm:$0xf] %vm416, %v393
  %430 = vst.msk [vmem:[#allocation2 + $0x34] sm:$0xf] %vm416, %v395
  %431 = vst.msk [vmem:[#allocation2 + $0x38] sm:$0xf] %vm416, %v397
  %432 = vst.msk [vmem:[#allocation2 + $0x3c] sm:$0xf] %vm416, %v399
  %v433 = vld [vmem:[%s3] sm:$0xff]
  %v434 = vld [vmem:[%s3 + $0x10] sm:$0xff]
  %v435 = vld [vmem:[%s3 + $0x20] sm:$0xff]
  %v436 = vld [vmem:[%s3 + $0x30] sm:$0xff]
  %v437 = vld [vmem:[%s3 + $0x40] sm:$0xff]
  %v438 = vld [vmem:[%s3 + $0x50] sm:$0xff]
  %v439 = vld [vmem:[%s3 + $0x60] sm:$0xff]
  %v440 = vld [vmem:[%s3 + $0x70] sm:$0xff]
  %v441 = vld [vmem:[%s3 + $0x90] sm:$0xff]
  %v442 = vld [vmem:[%s3 + $0xa0] sm:$0xff]
  %v443 = vld [vmem:[%s3 + $0xb0] sm:$0xff]
  %v444 = vld [vmem:[%s3 + $0xc0] sm:$0xff]
  %v445 = vld [vmem:[%s3 + $0xd0] sm:$0xff]
  %v446 = vld [vmem:[%s3 + $0xe0] sm:$0xff]
  %v447 = vld [vmem:[%s3 + $0xf0] sm:$0xff]
  %v448 = vld [vmem:[%s3 + $0x100] sm:$0xff]
  %v449 = vpack.c.bf16 %v433, %v433
  %v450 = vpack.c.bf16 %v434, %v434
  %v451 = vpack.c.bf16 %v435, %v435
  %v452 = vpack.c.bf16 %v436, %v436
  %v453 = vpack.c.bf16 %v437, %v437
  %v454 = vpack.c.bf16 %v438, %v438
  %v455 = vpack.c.bf16 %v439, %v439
  %v456 = vpack.c.bf16 %v440, %v440
  %v457 = vpack.c.bf16 %v441, %v441
  %v458 = vpack.c.bf16 %v442, %v442
  %v459 = vpack.c.bf16 %v443, %v443
  %v460 = vpack.c.bf16 %v444, %v444
  %v461 = vpack.c.bf16 %v445, %v445
  %v462 = vpack.c.bf16 %v446, %v446
  %v463 = vpack.c.bf16 %v447, %v447
  %v464 = vpack.c.bf16 %v448, %v448
  %481 = vrot.lane.b32.xlu0 %v449, 16
  %v482 = vpop.permute.xlu0 %481
  %483 = vrot.lane.b32.xlu0 %v450, 16
  %v484 = vpop.permute.xlu0 %483
  %485 = vrot.lane.b32.xlu0 %v451, 16
  %v486 = vpop.permute.xlu0 %485
  %487 = vrot.lane.b32.xlu0 %v452, 16
  %v488 = vpop.permute.xlu0 %487
  %489 = vrot.lane.b32.xlu0 %v453, 16
  %v490 = vpop.permute.xlu0 %489
  %491 = vrot.lane.b32.xlu0 %v454, 16
  %v492 = vpop.permute.xlu0 %491
  %493 = vrot.lane.b32.xlu0 %v455, 16
  %v494 = vpop.permute.xlu0 %493
  %495 = vrot.lane.b32.xlu0 %v456, 16
  %v496 = vpop.permute.xlu0 %495
  %497 = vrot.lane.b32.xlu0 %v457, 16
  %v498 = vpop.permute.xlu0 %497
  %499 = vrot.lane.b32.xlu0 %v458, 16
  %v500 = vpop.permute.xlu0 %499
  %501 = vrot.lane.b32.xlu0 %v459, 16
  %v502 = vpop.permute.xlu0 %501
  %503 = vrot.lane.b32.xlu0 %v460, 16
  %v504 = vpop.permute.xlu0 %503
  %505 = vrot.lane.b32.xlu0 %v461, 16
  %v506 = vpop.permute.xlu0 %505
  %507 = vrot.lane.b32.xlu0 %v462, 16
  %v508 = vpop.permute.xlu0 %507
  %509 = vrot.lane.b32.xlu0 %v463, 16
  %v510 = vpop.permute.xlu0 %509
  %511 = vrot.lane.b32.xlu0 %v464, 16
  %v512 = vpop.permute.xlu0 %511
  %vm529 = vcmask 158848
  %530 = vst.msk [vmem:[#allocation2] sm:$0xf] %vm529, %v482
  %531 = vst.msk [vmem:[#allocation2 + $0x4] sm:$0xf] %vm529, %v484
  %532 = vst.msk [vmem:[#allocation2 + $0x8] sm:$0xf] %vm529, %v486
  %533 = vst.msk [vmem:[#allocation2 + $0xc] sm:$0xf] %vm529, %v488
  %534 = vst.msk [vmem:[#allocation2 + $0x10] sm:$0xf] %vm529, %v490
  %535 = vst.msk [vmem:[#allocation2 + $0x14] sm:$0xf] %vm529, %v492
  %536 = vst.msk [vmem:[#allocation2 + $0x18] sm:$0xf] %vm529, %v494
  %537 = vst.msk [vmem:[#allocation2 + $0x1c] sm:$0xf] %vm529, %v496
  %538 = vst.msk [vmem:[#allocation2 + $0x20] sm:$0xf] %vm529, %v498
  %539 = vst.msk [vmem:[#allocation2 + $0x24] sm:$0xf] %vm529, %v500
  %540 = vst.msk [vmem:[#allocation2 + $0x28] sm:$0xf] %vm529, %v502
  %541 = vst.msk [vmem:[#allocation2 + $0x2c] sm:$0xf] %vm529, %v504
  %542 = vst.msk [vmem:[#allocation2 + $0x30] sm:$0xf] %vm529, %v506
  %543 = vst.msk [vmem:[#allocation2 + $0x34] sm:$0xf] %vm529, %v508
  %544 = vst.msk [vmem:[#allocation2 + $0x38] sm:$0xf] %vm529, %v510
  %545 = vst.msk [vmem:[#allocation2 + $0x3c] sm:$0xf] %vm529, %v512
  %v546 = vld [vmem:[%s2 + $0x1] sm:$0xff]
  %v547 = vld [vmem:[%s2 + $0x11] sm:$0xff]
  %v548 = vld [vmem:[%s2 + $0x21] sm:$0xff]
  %v549 = vld [vmem:[%s2 + $0x31] sm:$0xff]
  %v550 = vld [vmem:[%s2 + $0x41] sm:$0xff]
  %v551 = vld [vmem:[%s2 + $0x51] sm:$0xff]
  %v552 = vld [vmem:[%s2 + $0x61] sm:$0xff]
  %v553 = vld [vmem:[%s2 + $0x71] sm:$0xff]
  %v554 = vld [vmem:[%s2 + $0x91] sm:$0xff]
  %v555 = vld [vmem:[%s2 + $0xa1] sm:$0xff]
  %v556 = vld [vmem:[%s2 + $0xb1] sm:$0xff]
  %v557 = vld [vmem:[%s2 + $0xc1] sm:$0xff]
  %v558 = vld [vmem:[%s2 + $0xd1] sm:$0xff]
  %v559 = vld [vmem:[%s2 + $0xe1] sm:$0xff]
  %v560 = vld [vmem:[%s2 + $0xf1] sm:$0xff]
  %v561 = vld [vmem:[%s2 + $0x101] sm:$0xff]
  %v562 = vpack.c.bf16 %v546, %v546
  %v563 = vpack.c.bf16 %v547, %v547
  %v564 = vpack.c.bf16 %v548, %v548
  %v565 = vpack.c.bf16 %v549, %v549
  %v566 = vpack.c.bf16 %v550, %v550
  %v567 = vpack.c.bf16 %v551, %v551
  %v568 = vpack.c.bf16 %v552, %v552
  %v569 = vpack.c.bf16 %v553, %v553
  %v570 = vpack.c.bf16 %v554, %v554
  %v571 = vpack.c.bf16 %v555, %v555
  %v572 = vpack.c.bf16 %v556, %v556
  %v573 = vpack.c.bf16 %v557, %v557
  %v574 = vpack.c.bf16 %v558, %v558
  %v575 = vpack.c.bf16 %v559, %v559
  %v576 = vpack.c.bf16 %v560, %v560
  %v577 = vpack.c.bf16 %v561, %v561
  %594 = vrot.lane.b32.xlu0 %v562, 20
  %v595 = vpop.permute.xlu0 %594
  %596 = vrot.lane.b32.xlu0 %v563, 20
  %v597 = vpop.permute.xlu0 %596
  %598 = vrot.lane.b32.xlu0 %v564, 20
  %v599 = vpop.permute.xlu0 %598
  %600 = vrot.lane.b32.xlu0 %v565, 20
  %v601 = vpop.permute.xlu0 %600
  %602 = vrot.lane.b32.xlu0 %v566, 20
  %v603 = vpop.permute.xlu0 %602
  %604 = vrot.lane.b32.xlu0 %v567, 20
  %v605 = vpop.permute.xlu0 %604
  %606 = vrot.lane.b32.xlu0 %v568, 20
  %v607 = vpop.permute.xlu0 %606
  %608 = vrot.lane.b32.xlu0 %v569, 20
  %v609 = vpop.permute.xlu0 %608
  %610 = vrot.lane.b32.xlu0 %v570, 20
  %v611 = vpop.permute.xlu0 %610
  %612 = vrot.lane.b32.xlu0 %v571, 20
  %v613 = vpop.permute.xlu0 %612
  %614 = vrot.lane.b32.xlu0 %v572, 20
  %v615 = vpop.permute.xlu0 %614
  %616 = vrot.lane.b32.xlu0 %v573, 20
  %v617 = vpop.permute.xlu0 %616
  %618 = vrot.lane.b32.xlu0 %v574, 20
  %v619 = vpop.permute.xlu0 %618
  %620 = vrot.lane.b32.xlu0 %v575, 20
  %v621 = vpop.permute.xlu0 %620
  %622 = vrot.lane.b32.xlu0 %v576, 20
  %v623 = vpop.permute.xlu0 %622
  %624 = vrot.lane.b32.xlu0 %v577, 20
  %v625 = vpop.permute.xlu0 %624
  %vm642 = vcmask 191648
  %643 = vst.msk [vmem:[#allocation2] sm:$0xf] %vm642, %v595
  %644 = vst.msk [vmem:[#allocation2 + $0x4] sm:$0xf] %vm642, %v597
  %645 = vst.msk [vmem:[#allocation2 + $0x8] sm:$0xf] %vm642, %v599
  %646 = vst.msk [vmem:[#allocation2 + $0xc] sm:$0xf] %vm642, %v601
  %647 = vst.msk [vmem:[#allocation2 + $0x10] sm:$0xf] %vm642, %v603
  %648 = vst.msk [vmem:[#allocation2 + $0x14] sm:$0xf] %vm642, %v605
  %649 = vst.msk [vmem:[#allocation2 + $0x18] sm:$0xf] %vm642, %v607
  %650 = vst.msk [vmem:[#allocation2 + $0x1c] sm:$0xf] %vm642, %v609
  %651 = vst.msk [vmem:[#allocation2 + $0x20] sm:$0xf] %vm642, %v611
  %652 = vst.msk [vmem:[#allocation2 + $0x24] sm:$0xf] %vm642, %v613
  %653 = vst.msk [vmem:[#allocation2 + $0x28] sm:$0xf] %vm642, %v615
  %654 = vst.msk [vmem:[#allocation2 + $0x2c] sm:$0xf] %vm642, %v617
  %655 = vst.msk [vmem:[#allocation2 + $0x30] sm:$0xf] %vm642, %v619
  %656 = vst.msk [vmem:[#allocation2 + $0x34] sm:$0xf] %vm642, %v621
  %657 = vst.msk [vmem:[#allocation2 + $0x38] sm:$0xf] %vm642, %v623
  %658 = vst.msk [vmem:[#allocation2 + $0x3c] sm:$0xf] %vm642, %v625
  %s659 = scalar_lea.vmem %s0, 16
  %v660 = vld [vmem:[%s659] sm:$0xff]
  %v661 = vld [vmem:[%s659 + $0x10] sm:$0xff]
  %v662 = vld [vmem:[%s659 + $0x20] sm:$0xff]
  %v663 = vld [vmem:[%s659 + $0x30] sm:$0xff]
  %v664 = vld [vmem:[%s659 + $0x40] sm:$0xff]
  %v665 = vld [vmem:[%s659 + $0x50] sm:$0xff]
  %v666 = vld [vmem:[%s659 + $0x60] sm:$0xff]
  %v667 = vld [vmem:[%s659 + $0x70] sm:$0xff]
  %v668 = vld [vmem:[%s659 + $0x90] sm:$0xff]
  %v669 = vld [vmem:[%s659 + $0xa0] sm:$0xff]
  %v670 = vld [vmem:[%s659 + $0xb0] sm:$0xff]
  %v671 = vld [vmem:[%s659 + $0xc0] sm:$0xff]
  %v672 = vld [vmem:[%s659 + $0xd0] sm:$0xff]
  %v673 = vld [vmem:[%s659 + $0xe0] sm:$0xff]
  %v674 = vld [vmem:[%s659 + $0xf0] sm:$0xff]
  %v675 = vld [vmem:[%s659 + $0x100] sm:$0xff]
  %v676 = vpack.c.bf16 %v660, %v660
  %v677 = vpack.c.bf16 %v661, %v661
  %v678 = vpack.c.bf16 %v662, %v662
  %v679 = vpack.c.bf16 %v663, %v663
  %v680 = vpack.c.bf16 %v664, %v664
  %v681 = vpack.c.bf16 %v665, %v665
  %v682 = vpack.c.bf16 %v666, %v666
  %v683 = vpack.c.bf16 %v667, %v667
  %v684 = vpack.c.bf16 %v668, %v668
  %v685 = vpack.c.bf16 %v669, %v669
  %v686 = vpack.c.bf16 %v670, %v670
  %v687 = vpack.c.bf16 %v671, %v671
  %v688 = vpack.c.bf16 %v672, %v672
  %v689 = vpack.c.bf16 %v673, %v673
  %v690 = vpack.c.bf16 %v674, %v674
  %v691 = vpack.c.bf16 %v675, %v675
  %708 = vrot.lane.b32.xlu0 %v676, 24
  %v709 = vpop.permute.xlu0 %708
  %710 = vrot.lane.b32.xlu0 %v677, 24
  %v711 = vpop.permute.xlu0 %710
  %712 = vrot.lane.b32.xlu0 %v678, 24
  %v713 = vpop.permute.xlu0 %712
  %714 = vrot.lane.b32.xlu0 %v679, 24
  %v715 = vpop.permute.xlu0 %714
  %716 = vrot.lane.b32.xlu0 %v680, 24
  %v717 = vpop.permute.xlu0 %716
  %718 = vrot.lane.b32.xlu0 %v681, 24
  %v719 = vpop.permute.xlu0 %718
  %720 = vrot.lane.b32.xlu0 %v682, 24
  %v721 = vpop.permute.xlu0 %720
  %722 = vrot.lane.b32.xlu0 %v683, 24
  %v723 = vpop.permute.xlu0 %722
  %724 = vrot.lane.b32.xlu0 %v684, 24
  %v725 = vpop.permute.xlu0 %724
  %726 = vrot.lane.b32.xlu0 %v685, 24
  %v727 = vpop.permute.xlu0 %726
  %728 = vrot.lane.b32.xlu0 %v686, 24
  %v729 = vpop.permute.xlu0 %728
  %730 = vrot.lane.b32.xlu0 %v687, 24
  %v731 = vpop.permute.xlu0 %730
  %732 = vrot.lane.b32.xlu0 %v688, 24
  %v733 = vpop.permute.xlu0 %732
  %734 = vrot.lane.b32.xlu0 %v689, 24
  %v735 = vpop.permute.xlu0 %734
  %736 = vrot.lane.b32.xlu0 %v690, 24
  %v737 = vpop.permute.xlu0 %736
  %738 = vrot.lane.b32.xlu0 %v691, 24
  %v739 = vpop.permute.xlu0 %738
  %vm756 = vcmask 224448
  %757 = vst.msk [vmem:[#allocation2] sm:$0xf] %vm756, %v709
  %758 = vst.msk [vmem:[#allocation2 + $0x4] sm:$0xf] %vm756, %v711
  %759 = vst.msk [vmem:[#allocation2 + $0x8] sm:$0xf] %vm756, %v713
  %760 = vst.msk [vmem:[#allocation2 + $0xc] sm:$0xf] %vm756, %v715
  %761 = vst.msk [vmem:[#allocation2 + $0x10] sm:$0xf] %vm756, %v717
  %762 = vst.msk [vmem:[#allocation2 + $0x14] sm:$0xf] %vm756, %v719
  %763 = vst.msk [vmem:[#allocation2 + $0x18] sm:$0xf] %vm756, %v721
  %764 = vst.msk [vmem:[#allocation2 + $0x1c] sm:$0xf] %vm756, %v723
  %765 = vst.msk [vmem:[#allocation2 + $0x20] sm:$0xf] %vm756, %v725
  %766 = vst.msk [vmem:[#allocation2 + $0x24] sm:$0xf] %vm756, %v727
  %767 = vst.msk [vmem:[#allocation2 + $0x28] sm:$0xf] %vm756, %v729
  %768 = vst.msk [vmem:[#allocation2 + $0x2c] sm:$0xf] %vm756, %v731
  %769 = vst.msk [vmem:[#allocation2 + $0x30] sm:$0xf] %vm756, %v733
  %770 = vst.msk [vmem:[#allocation2 + $0x34] sm:$0xf] %vm756, %v735
  %771 = vst.msk [vmem:[#allocation2 + $0x38] sm:$0xf] %vm756, %v737
  %772 = vst.msk [vmem:[#allocation2 + $0x3c] sm:$0xf] %vm756, %v739
  %s773 = scalar_lea.vmem %s1, 16
  %v774 = vld [vmem:[%s773] sm:$0xff]
  %v775 = vld [vmem:[%s773 + $0x10] sm:$0xff]
  %v776 = vld [vmem:[%s773 + $0x20] sm:$0xff]
  %v777 = vld [vmem:[%s773 + $0x30] sm:$0xff]
  %v778 = vld [vmem:[%s773 + $0x40] sm:$0xff]
  %v779 = vld [vmem:[%s773 + $0x50] sm:$0xff]
  %v780 = vld [vmem:[%s773 + $0x60] sm:$0xff]
  %v781 = vld [vmem:[%s773 + $0x70] sm:$0xff]
  %v782 = vld [vmem:[%s773 + $0x90] sm:$0xff]
  %v783 = vld [vmem:[%s773 + $0xa0] sm:$0xff]
  %v784 = vld [vmem:[%s773 + $0xb0] sm:$0xff]
  %v785 = vld [vmem:[%s773 + $0xc0] sm:$0xff]
  %v786 = vld [vmem:[%s773 + $0xd0] sm:$0xff]
  %v787 = vld [vmem:[%s773 + $0xe0] sm:$0xff]
  %v788 = vld [vmem:[%s773 + $0xf0] sm:$0xff]
  %v789 = vld [vmem:[%s773 + $0x100] sm:$0xff]
  %v790 = vpack.c.bf16 %v774, %v774
  %v791 = vpack.c.bf16 %v775, %v775
  %v792 = vpack.c.bf16 %v776, %v776
  %v793 = vpack.c.bf16 %v777, %v777
  %v794 = vpack.c.bf16 %v778, %v778
  %v795 = vpack.c.bf16 %v779, %v779
  %v796 = vpack.c.bf16 %v780, %v780
  %v797 = vpack.c.bf16 %v781, %v781
  %v798 = vpack.c.bf16 %v782, %v782
  %v799 = vpack.c.bf16 %v783, %v783
  %v800 = vpack.c.bf16 %v784, %v784
  %v801 = vpack.c.bf16 %v785, %v785
  %v802 = vpack.c.bf16 %v786, %v786
  %v803 = vpack.c.bf16 %v787, %v787
  %v804 = vpack.c.bf16 %v788, %v788
  %v805 = vpack.c.bf16 %v789, %v789
  %822 = vrot.lane.b32.xlu0 %v790, 28
  %v823 = vpop.permute.xlu0 %822
  %824 = vrot.lane.b32.xlu0 %v791, 28
  %v825 = vpop.permute.xlu0 %824
  %826 = vrot.lane.b32.xlu0 %v792, 28
  %v827 = vpop.permute.xlu0 %826
  %828 = vrot.lane.b32.xlu0 %v793, 28
  %v829 = vpop.permute.xlu0 %828
  %830 = vrot.lane.b32.xlu0 %v794, 28
  %v831 = vpop.permute.xlu0 %830
  %832 = vrot.lane.b32.xlu0 %v795, 28
  %v833 = vpop.permute.xlu0 %832
  %834 = vrot.lane.b32.xlu0 %v796, 28
  %v835 = vpop.permute.xlu0 %834
  %836 = vrot.lane.b32.xlu0 %v797, 28
  %v837 = vpop.permute.xlu0 %836
  %838 = vrot.lane.b32.xlu0 %v798, 28
  %v839 = vpop.permute.xlu0 %838
  %840 = vrot.lane.b32.xlu0 %v799, 28
  %v841 = vpop.permute.xlu0 %840
  %842 = vrot.lane.b32.xlu0 %v800, 28
  %v843 = vpop.permute.xlu0 %842
  %844 = vrot.lane.b32.xlu0 %v801, 28
  %v845 = vpop.permute.xlu0 %844
  %846 = vrot.lane.b32.xlu0 %v802, 28
  %v847 = vpop.permute.xlu0 %846
  %848 = vrot.lane.b32.xlu0 %v803, 28
  %v849 = vpop.permute.xlu0 %848
  %850 = vrot.lane.b32.xlu0 %v804, 28
  %v851 = vpop.permute.xlu0 %850
  %852 = vrot.lane.b32.xlu0 %v805, 28
  %v853 = vpop.permute.xlu0 %852
  %vm870 = vcmask 257248
  %871 = vst.msk [vmem:[#allocation2] sm:$0xf] %vm870, %v823
  %872 = vst.msk [vmem:[#allocation2 + $0x4] sm:$0xf] %vm870, %v825
  %873 = vst.msk [vmem:[#allocation2 + $0x8] sm:$0xf] %vm870, %v827
  %874 = vst.msk [vmem:[#allocation2 + $0xc] sm:$0xf] %vm870, %v829
  %875 = vst.msk [vmem:[#allocation2 + $0x10] sm:$0xf] %vm870, %v831
  %876 = vst.msk [vmem:[#allocation2 + $0x14] sm:$0xf] %vm870, %v833
  %877 = vst.msk [vmem:[#allocation2 + $0x18] sm:$0xf] %vm870, %v835
  %878 = vst.msk [vmem:[#allocation2 + $0x1c] sm:$0xf] %vm870, %v837
  %879 = vst.msk [vmem:[#allocation2 + $0x20] sm:$0xf] %vm870, %v839
  %880 = vst.msk [vmem:[#allocation2 + $0x24] sm:$0xf] %vm870, %v841
  %881 = vst.msk [vmem:[#allocation2 + $0x28] sm:$0xf] %vm870, %v843
  %882 = vst.msk [vmem:[#allocation2 + $0x2c] sm:$0xf] %vm870, %v845
  %883 = vst.msk [vmem:[#allocation2 + $0x30] sm:$0xf] %vm870, %v847
  %884 = vst.msk [vmem:[#allocation2 + $0x34] sm:$0xf] %vm870, %v849
  %885 = vst.msk [vmem:[#allocation2 + $0x38] sm:$0xf] %vm870, %v851
  %886 = vst.msk [vmem:[#allocation2 + $0x3c] sm:$0xf] %vm870, %v853
  %v887 = vld [vmem:[%s659 + $0x1] sm:$0xff]
  %v888 = vld [vmem:[%s659 + $0x11] sm:$0xff]
  %v889 = vld [vmem:[%s659 + $0x21] sm:$0xff]
  %v890 = vld [vmem:[%s659 + $0x31] sm:$0xff]
  %v891 = vld [vmem:[%s659 + $0x41] sm:$0xff]
  %v892 = vld [vmem:[%s659 + $0x51] sm:$0xff]
  %v893 = vld [vmem:[%s659 + $0x61] sm:$0xff]
  %v894 = vld [vmem:[%s659 + $0x71] sm:$0xff]
  %v895 = vld [vmem:[%s659 + $0x91] sm:$0xff]
  %v896 = vld [vmem:[%s659 + $0xa1] sm:$0xff]
  %v897 = vld [vmem:[%s659 + $0xb1] sm:$0xff]
  %v898 = vld [vmem:[%s659 + $0xc1] sm:$0xff]
  %v899 = vld [vmem:[%s659 + $0xd1] sm:$0xff]
  %v900 = vld [vmem:[%s659 + $0xe1] sm:$0xff]
  %v901 = vld [vmem:[%s659 + $0xf1] sm:$0xff]
  %v902 = vld [vmem:[%s659 + $0x101] sm:$0xff]
  %v903 = vpack.c.bf16 %v887, %v887
  %v904 = vpack.c.bf16 %v888, %v888
  %v905 = vpack.c.bf16 %v889, %v889
  %v906 = vpack.c.bf16 %v890, %v890
  %v907 = vpack.c.bf16 %v891, %v891
  %v908 = vpack.c.bf16 %v892, %v892
  %v909 = vpack.c.bf16 %v893, %v893
  %v910 = vpack.c.bf16 %v894, %v894
  %v911 = vpack.c.bf16 %v895, %v895
  %v912 = vpack.c.bf16 %v896, %v896
  %v913 = vpack.c.bf16 %v897, %v897
  %v914 = vpack.c.bf16 %v898, %v898
  %v915 = vpack.c.bf16 %v899, %v899
  %v916 = vpack.c.bf16 %v900, %v900
  %v917 = vpack.c.bf16 %v901, %v901
  %v918 = vpack.c.bf16 %v902, %v902
  %935 = vrot.lane.b32.xlu0 %v903, 32
  %v936 = vpop.permute.xlu0 %935
  %937 = vrot.lane.b32.xlu0 %v904, 32
  %v938 = vpop.permute.xlu0 %937
  %939 = vrot.lane.b32.xlu0 %v905, 32
  %v940 = vpop.permute.xlu0 %939
  %941 = vrot.lane.b32.xlu0 %v906, 32
  %v942 = vpop.permute.xlu0 %941
  %943 = vrot.lane.b32.xlu0 %v907, 32
  %v944 = vpop.permute.xlu0 %943
  %945 = vrot.lane.b32.xlu0 %v908, 32
  %v946 = vpop.permute.xlu0 %945
  %947 = vrot.lane.b32.xlu0 %v909, 32
  %v948 = vpop.permute.xlu0 %947
  %949 = vrot.lane.b32.xlu0 %v910, 32
  %v950 = vpop.permute.xlu0 %949
  %951 = vrot.lane.b32.xlu0 %v911, 32
  %v952 = vpop.permute.xlu0 %951
  %953 = vrot.lane.b32.xlu0 %v912, 32
  %v954 = vpop.permute.xlu0 %953
  %955 = vrot.lane.b32.xlu0 %v913, 32
  %v956 = vpop.permute.xlu0 %955
  %957 = vrot.lane.b32.xlu0 %v914, 32
  %v958 = vpop.permute.xlu0 %957
  %959 = vrot.lane.b32.xlu0 %v915, 32
  %v960 = vpop.permute.xlu0 %959
  %961 = vrot.lane.b32.xlu0 %v916, 32
  %v962 = vpop.permute.xlu0 %961
  %963 = vrot.lane.b32.xlu0 %v917, 32
  %v964 = vpop.permute.xlu0 %963
  %965 = vrot.lane.b32.xlu0 %v918, 32
  %v966 = vpop.permute.xlu0 %965
  %vm983 = vcmask 290048
  %984 = vst.msk [vmem:[#allocation2] sm:$0xf] %vm983, %v936
  %985 = vst.msk [vmem:[#allocation2 + $0x4] sm:$0xf] %vm983, %v938
  %986 = vst.msk [vmem:[#allocation2 + $0x8] sm:$0xf] %vm983, %v940
  %987 = vst.msk [vmem:[#allocation2 + $0xc] sm:$0xf] %vm983, %v942
  %988 = vst.msk [vmem:[#allocation2 + $0x10] sm:$0xf] %vm983, %v944
  %989 = vst.msk [vmem:[#allocation2 + $0x14] sm:$0xf] %vm983, %v946
  %990 = vst.msk [vmem:[#allocation2 + $0x18] sm:$0xf] %vm983, %v948
  %991 = vst.msk [vmem:[#allocation2 + $0x1c] sm:$0xf] %vm983, %v950
  %992 = vst.msk [vmem:[#allocation2 + $0x20] sm:$0xf] %vm983, %v952
  %993 = vst.msk [vmem:[#allocation2 + $0x24] sm:$0xf] %vm983, %v954
  %994 = vst.msk [vmem:[#allocation2 + $0x28] sm:$0xf] %vm983, %v956
  %995 = vst.msk [vmem:[#allocation2 + $0x2c] sm:$0xf] %vm983, %v958
  %996 = vst.msk [vmem:[#allocation2 + $0x30] sm:$0xf] %vm983, %v960
  %997 = vst.msk [vmem:[#allocation2 + $0x34] sm:$0xf] %vm983, %v962
  %998 = vst.msk [vmem:[#allocation2 + $0x38] sm:$0xf] %vm983, %v964
  %999 = vst.msk [vmem:[#allocation2 + $0x3c] sm:$0xf] %vm983, %v966
  %v1000 = vld [vmem:[#allocation2] sm:$0xf]
  %v1001 = vld [vmem:[#allocation2 + $0x4] sm:$0xf]
  %v1002 = vld [vmem:[#allocation2 + $0x8] sm:$0xf]
  %v1003 = vld [vmem:[#allocation2 + $0xc] sm:$0xf]
  %v1004 = vld [vmem:[#allocation2 + $0x10] sm:$0xf]
  %v1005 = vld [vmem:[#allocation2 + $0x14] sm:$0xf]
  %v1006 = vld [vmem:[#allocation2 + $0x18] sm:$0xf]
  %v1007 = vld [vmem:[#allocation2 + $0x1c] sm:$0xf]
  %v1008 = vld [vmem:[#allocation2 + $0x20] sm:$0xf]
  %v1009 = vld [vmem:[#allocation2 + $0x24] sm:$0xf]
  %v1010 = vld [vmem:[#allocation2 + $0x28] sm:$0xf]
  %v1011 = vld [vmem:[#allocation2 + $0x2c] sm:$0xf]
  %v1012 = vld [vmem:[#allocation2 + $0x30] sm:$0xf]
  %v1013 = vld [vmem:[#allocation2 + $0x34] sm:$0xf]
  %v1014 = vld [vmem:[#allocation2 + $0x38] sm:$0xf]
  %v1015 = vld [vmem:[#allocation2 + $0x3c] sm:$0xf]
  %v1016 = vld [vmem:[%s4] sm:$0xf]
  %v1017 = vld [vmem:[%s4 + $0x4] sm:$0xf]
  %v1018 = vld [vmem:[%s4 + $0x8] sm:$0xf]
  %v1019 = vld [vmem:[%s4 + $0xc] sm:$0xf]
  %v1020 = vld [vmem:[%s4 + $0x10] sm:$0x3]
  %v1037 = vunpack.c.l.b16 %v1000
  %v1038 = vunpack.c.l.b16 %v1001
  %v1039 = vunpack.c.l.b16 %v1002
  %v1040 = vunpack.c.l.b16 %v1003
  %v1041 = vunpack.c.l.b16 %v1004
  %v1042 = vunpack.c.l.b16 %v1005
  %v1043 = vunpack.c.l.b16 %v1006
  %v1044 = vunpack.c.l.b16 %v1007
  %v1045 = vunpack.c.l.b16 %v1008
  %v1046 = vunpack.c.l.b16 %v1009
  %v1047 = vunpack.c.l.b16 %v1010
  %v1048 = vunpack.c.l.b16 %v1011
  %v1049 = vunpack.c.l.b16 %v1012
  %v1050 = vunpack.c.l.b16 %v1013
  %v1051 = vunpack.c.l.b16 %v1014
  %v1052 = vunpack.c.l.b16 %v1015
  %v1053 = vpack.c.b16 %v1038, %v1037
  %v1054 = vpack.c.b16 %v1040, %v1039
  %v1055 = vpack.c.b16 %v1042, %v1041
  %v1056 = vpack.c.b16 %v1044, %v1043
  %v1057 = vpack.c.b16 %v1046, %v1045
  %v1058 = vpack.c.b16 %v1048, %v1047
  %v1059 = vpack.c.b16 %v1050, %v1049
  %v1060 = vpack.c.b16 %v1052, %v1051
  %v1066 = vunpack.c.l.b16 %v1016
  %v1067 = vunpack.c.l.b16 %v1017
  %v1068 = vunpack.c.l.b16 %v1018
  %v1069 = vunpack.c.l.b16 %v1019
  %v1070 = vunpack.c.l.b16 %v1020
  %v1071 = vpack.c.b16 %v1067, %v1066
  %v1072 = vpack.c.b16 %v1069, %v1068
  %v1073 = vpack.c.b16 %v1070, %v1070
  %vm1076 = vcmask 293888
  %v1078 = vsel %vm1076, %v1053, 0
  %v1081 = vsel %vm1076, %v1054, 0
  %v1084 = vsel %vm1076, %v1055, 0
  %v1087 = vsel %vm1076, %v1056, 0
  %v1090 = vsel %vm1076, %v1057, 0
  %v1093 = vsel %vm1076, %v1058, 0
  %v1096 = vsel %vm1076, %v1059, 0
  %v1099 = vsel %vm1076, %v1060, 0
  %vm1101 = vcmask 1041408
  %v1103 = vsel %vm1101, %v1073, 0
  %1105 = vmatpush.bf16.msra.mxu0 0
  %1106 = vmatpush.bf16.msra.mxu0 0
  %1107 = vmatpush.bf16.msra.mxu0 0
  %1108 = vmatpush.bf16.msra.mxu0 0
  %1109 = vmatpush.bf16.msra.mxu0 0
  %1110 = vmatpush.bf16.msra.mxu0 %v1103
  %1111 = vmatpush.bf16.msra.mxu0 %v1072
  %1112 = vmatpush.bf16.msra.mxu0 %v1071
  %1113 = vmatmul.bf16.gmra.mxu0 %v1078
  %v1114 = vpop.f32.mrf.mxu0
  %v1115 = vadd.f32 0.0, %v1114
  %v1116 = vpop.f32.mrf.mxu0
  %v1117 = vadd.f32 0.0, %v1116
  %1118 = vmatmul.bf16.gmra.mxu0 %v1081
  %v1119 = vpop.f32.mrf.mxu0
  %v1120 = vadd.f32 0.0, %v1119
  %v1121 = vpop.f32.mrf.mxu0
  %v1122 = vadd.f32 0.0, %v1121
  %1123 = vmatmul.bf16.gmra.mxu0 %v1084
  %v1124 = vpop.f32.mrf.mxu0
  %v1125 = vadd.f32 0.0, %v1124
  %v1126 = vpop.f32.mrf.mxu0
  %v1127 = vadd.f32 0.0, %v1126
  %1128 = vmatmul.bf16.gmra.mxu0 %v1087
  %v1129 = vpop.f32.mrf.mxu0
  %v1130 = vadd.f32 0.0, %v1129
  %v1131 = vpop.f32.mrf.mxu0
  %v1132 = vadd.f32 0.0, %v1131
  %1133 = vmatmul.bf16.gmra.mxu0 %v1090
  %v1134 = vpop.f32.mrf.mxu0
  %v1135 = vadd.f32 0.0, %v1134
  %v1136 = vpop.f32.mrf.mxu0
  %v1137 = vadd.f32 0.0, %v1136
  %1138 = vmatmul.bf16.gmra.mxu0 %v1093
  %v1139 = vpop.f32.mrf.mxu0
  %v1140 = vadd.f32 0.0, %v1139
  %v1141 = vpop.f32.mrf.mxu0
  %v1142 = vadd.f32 0.0, %v1141
  %1143 = vmatmul.bf16.gmra.mxu0 %v1096
  %v1144 = vpop.f32.mrf.mxu0
  %v1145 = vadd.f32 0.0, %v1144
  %v1146 = vpop.f32.mrf.mxu0
  %v1147 = vadd.f32 0.0, %v1146
  %1148 = vmatmul.bf16.gmra.mxu0 %v1099
  %v1149 = vpop.f32.mrf.mxu0
  %v1150 = vadd.f32 0.0, %v1149
  %v1151 = vpop.f32.mrf.mxu0
  %v1152 = vadd.f32 0.0, %v1151
  %1153 = vdwg.mxu0
  %vm1154 = vcmask 64512
  %v1155 = vsel %vm1154, %v1115, 0.0
  %v1156 = vsel %vm1154, %v1117, 0.0
  %v1157 = vadd.f32 %v1155, %v1156
  %v1158 = vsel %vm1154, %v1120, 0.0
  %v1159 = vadd.f32 %v1157, %v1158
  %v1160 = vsel %vm1154, %v1122, 0.0
  %v1161 = vadd.f32 %v1159, %v1160
  %v1162 = vsel %vm1154, %v1125, 0.0
  %v1163 = vadd.f32 %v1161, %v1162
  %v1164 = vsel %vm1154, %v1127, 0.0
  %v1165 = vadd.f32 %v1163, %v1164
  %v1166 = vsel %vm1154, %v1130, 0.0
  %v1167 = vadd.f32 %v1165, %v1166
  %v1168 = vsel %vm1154, %v1132, 0.0
  %v1169 = vadd.f32 %v1167, %v1168
  %v1170 = vsel %vm1154, %v1135, 0.0
  %v1171 = vadd.f32 %v1169, %v1170
  %v1172 = vsel %vm1154, %v1137, 0.0
  %v1173 = vadd.f32 %v1171, %v1172
  %v1174 = vsel %vm1154, %v1140, 0.0
  %v1175 = vadd.f32 %v1173, %v1174
  %v1176 = vsel %vm1154, %v1142, 0.0
  %v1177 = vadd.f32 %v1175, %v1176
  %v1178 = vsel %vm1154, %v1145, 0.0
  %v1179 = vadd.f32 %v1177, %v1178
  %v1180 = vsel %vm1154, %v1147, 0.0
  %v1181 = vadd.f32 %v1179, %v1180
  %v1182 = vsel %vm1154, %v1150, 0.0
  %v1183 = vadd.f32 %v1181, %v1182
  %v1184 = vsel %vm1154, %v1152, 0.0
  %v1185 = vadd.f32 %v1183, %v1184
  %v1186 = vrot.slane %v1185, 4
  %v1187 = vadd.f32 %v1185, %v1186
  %v1188 = vrot.slane %v1187, 2
  %v1189 = vadd.f32 %v1187, %v1188
  %v1190 = vrot.slane %v1189, 1
  %v1191 = vadd.f32 %v1189, %v1190
  %v1192 = vmul.f32 %v1115, %v1115
  %v1193 = vmul.f32 %v1117, %v1117
  %v1194 = vmul.f32 %v1120, %v1120
  %v1195 = vmul.f32 %v1122, %v1122
  %v1196 = vmul.f32 %v1125, %v1125
  %v1197 = vmul.f32 %v1127, %v1127
  %v1198 = vmul.f32 %v1130, %v1130
  %v1199 = vmul.f32 %v1132, %v1132
  %v1200 = vmul.f32 %v1135, %v1135
  %v1201 = vmul.f32 %v1137, %v1137
  %v1202 = vmul.f32 %v1140, %v1140
  %v1203 = vmul.f32 %v1142, %v1142
  %v1204 = vmul.f32 %v1145, %v1145
  %v1205 = vmul.f32 %v1147, %v1147
  %v1206 = vmul.f32 %v1150, %v1150
  %v1207 = vmul.f32 %v1152, %v1152
  %v1208 = vsel %vm1154, %v1192, 0.0
  %v1209 = vsel %vm1154, %v1193, 0.0
  %v1210 = vadd.f32 %v1208, %v1209
  %v1211 = vsel %vm1154, %v1194, 0.0
  %v1212 = vadd.f32 %v1210, %v1211
  %v1213 = vsel %vm1154, %v1195, 0.0
  %v1214 = vadd.f32 %v1212, %v1213
  %v1215 = vsel %vm1154, %v1196, 0.0
  %v1216 = vadd.f32 %v1214, %v1215
  %v1217 = vsel %vm1154, %v1197, 0.0
  %v1218 = vadd.f32 %v1216, %v1217
  %v1219 = vsel %vm1154, %v1198, 0.0
  %v1220 = vadd.f32 %v1218, %v1219
  %v1221 = vsel %vm1154, %v1199, 0.0
  %v1222 = vadd.f32 %v1220, %v1221
  %v1223 = vsel %vm1154, %v1200, 0.0
  %v1224 = vadd.f32 %v1222, %v1223
  %v1225 = vsel %vm1154, %v1201, 0.0
  %v1226 = vadd.f32 %v1224, %v1225
  %v1227 = vsel %vm1154, %v1202, 0.0
  %v1228 = vadd.f32 %v1226, %v1227
  %v1229 = vsel %vm1154, %v1203, 0.0
  %v1230 = vadd.f32 %v1228, %v1229
  %v1231 = vsel %vm1154, %v1204, 0.0
  %v1232 = vadd.f32 %v1230, %v1231
  %v1233 = vsel %vm1154, %v1205, 0.0
  %v1234 = vadd.f32 %v1232, %v1233
  %v1235 = vsel %vm1154, %v1206, 0.0
  %v1236 = vadd.f32 %v1234, %v1235
  %v1237 = vsel %vm1154, %v1207, 0.0
  %v1238 = vadd.f32 %v1236, %v1237
  %v1239 = vrot.slane %v1238, 4
  %v1240 = vadd.f32 %v1238, %v1239
  %v1241 = vrot.slane %v1240, 2
  %v1242 = vadd.f32 %v1240, %v1241
  %v1243 = vrot.slane %v1242, 1
  %v1244 = vadd.f32 %v1242, %v1243
  %v1245 = vmul.f32 %v1191, 0.0078125
  %v1246 = vmul.f32 %v1244, 0.0078125
  %v1247 = vmul.f32 %v1245, %v1245
  %v1248 = vsub.f32 %v1246, %v1247
  %v1249 = vadd.f32 %v1248, 1e-05
  %v1250 = vrsqrt.pop %v1249
  %v1251 = vmul.f32 %v1250, %v1249
  %v1252 = vmul.f32 %v1251, %v1250
  %v1253 = vmul.f32 0.5, %v1252
  %v1254 = vsub.f32 1.5, %v1253
  %v1255 = vmul.f32 %v1250, %v1254
  %vm1256 = vweird.f32 %v1249
  %vm1257 = vweird.f32 %v1250
  %vm1258 = vmor %vm1256, %vm1257
  %v1259 = vsel %vm1258, %v1250, %v1255
  %v1260 = vld [vmem:[%s5] sm:$0x1]
  %v1261 = vmul.f32 %v1259, %v1260
  %v1262 = vsub.f32 %v1115, %v1245
  %v1263 = vsub.f32 %v1117, %v1245
  %v1264 = vsub.f32 %v1120, %v1245
  %v1265 = vsub.f32 %v1122, %v1245
  %v1266 = vsub.f32 %v1125, %v1245
  %v1267 = vsub.f32 %v1127, %v1245
  %v1268 = vsub.f32 %v1130, %v1245
  %v1269 = vsub.f32 %v1132, %v1245
  %v1270 = vsub.f32 %v1135, %v1245
  %v1271 = vsub.f32 %v1137, %v1245
  %v1272 = vsub.f32 %v1140, %v1245
  %v1273 = vsub.f32 %v1142, %v1245
  %v1274 = vsub.f32 %v1145, %v1245
  %v1275 = vsub.f32 %v1147, %v1245
  %v1276 = vsub.f32 %v1150, %v1245
  %v1277 = vsub.f32 %v1152, %v1245
  %v1278 = vperm.slane %v1261, 0
  %v1279 = vmul.f32 %v1262, %v1278
  %v1280 = vmul.f32 %v1263, %v1278
  %v1281 = vmul.f32 %v1264, %v1278
  %v1282 = vmul.f32 %v1265, %v1278
  %v1283 = vmul.f32 %v1266, %v1278
  %v1284 = vmul.f32 %v1267, %v1278
  %v1285 = vmul.f32 %v1268, %v1278
  %v1286 = vmul.f32 %v1269, %v1278
  %v1287 = vmul.f32 %v1270, %v1278
  %v1288 = vmul.f32 %v1271, %v1278
  %v1289 = vmul.f32 %v1272, %v1278
  %v1290 = vmul.f32 %v1273, %v1278
  %v1291 = vmul.f32 %v1274, %v1278
  %v1292 = vmul.f32 %v1275, %v1278
  %v1293 = vmul.f32 %v1276, %v1278
  %v1294 = vmul.f32 %v1277, %v1278
  %v1295 = vld [vmem:[%s6] sm:$0x1]
  %v1297 = vperm.slane %v1295, 0
  %v1299 = vadd.f32 %v1279, %v1297
  %v1300 = vadd.f32 %v1280, %v1297
  %v1301 = vadd.f32 %v1281, %v1297
  %v1302 = vadd.f32 %v1282, %v1297
  %v1303 = vadd.f32 %v1283, %v1297
  %v1304 = vadd.f32 %v1284, %v1297
  %v1305 = vadd.f32 %v1285, %v1297
  %v1306 = vadd.f32 %v1286, %v1297
  %v1307 = vadd.f32 %v1287, %v1297
  %v1308 = vadd.f32 %v1288, %v1297
  %v1309 = vadd.f32 %v1289, %v1297
  %v1310 = vadd.f32 %v1290, %v1297
  %v1311 = vadd.f32 %v1291, %v1297
  %v1312 = vadd.f32 %v1292, %v1297
  %v1313 = vadd.f32 %v1293, %v1297
  %v1314 = vadd.f32 %v1294, %v1297
  %v1315 = vmax.f32 %v1299, 0.0
  %v1316 = vmax.f32 %v1300, 0.0
  %v1317 = vmax.f32 %v1301, 0.0
  %v1318 = vmax.f32 %v1302, 0.0
  %v1319 = vmax.f32 %v1303, 0.0
  %v1320 = vmax.f32 %v1304, 0.0
  %v1321 = vmax.f32 %v1305, 0.0
  %v1322 = vmax.f32 %v1306, 0.0
  %v1323 = vmax.f32 %v1307, 0.0
  %v1324 = vmax.f32 %v1308, 0.0
  %v1325 = vmax.f32 %v1309, 0.0
  %v1326 = vmax.f32 %v1310, 0.0
  %v1327 = vmax.f32 %v1311, 0.0
  %v1328 = vmax.f32 %v1312, 0.0
  %v1329 = vmax.f32 %v1313, 0.0
  %v1330 = vmax.f32 %v1314, 0.0
  %1331 = vst.msk [vmem:[#allocation3] sm:$0xff] %vm1154, 0.0
  %vm1332 = vcmask 58368
  %1333 = vst.msk [vmem:[#allocation3 + $0x8] sm:$0x3] %vm1332, 0.0
  %1334 = vst.msk [vmem:[#allocation3 + $0xa0] sm:$0xff] %vm1154, 0.0
  %1335 = vst.msk [vmem:[#allocation3 + $0xa8] sm:$0x3] %vm1332, 0.0
  %s1336 = scalar_lea.vmem [#allocation3], 144
  %1337 = vst.msk [vmem:[%s1336] sm:$0xff] %vm1154, 0.0
  %1338 = vst.msk [vmem:[%s1336 + $0x8] sm:$0x3] %vm1332, 0.0
  %1339 = vst.msk [vmem:[%s1336 + $0xa0] sm:$0xff] %vm1154, 0.0
  %1340 = vst.msk [vmem:[%s1336 + $0xa8] sm:$0x3] %vm1332, 0.0
  %vm1341 = vcmask 57344
  %1342 = vst.msk [vmem:[#allocation3] sm:$0x1] %vm1341, 0.0
  %1343 = vst.msk [vmem:[#allocation3 + $0x10] sm:$0x1] %vm1341, 0.0
  %1344 = vst.msk [vmem:[#allocation3 + $0x20] sm:$0x1] %vm1341, 0.0
  %1345 = vst.msk [vmem:[#allocation3 + $0x30] sm:$0x1] %vm1341, 0.0
  %1346 = vst.msk [vmem:[#allocation3 + $0x40] sm:$0x1] %vm1341, 0.0
  %1347 = vst.msk [vmem:[#allocation3 + $0x50] sm:$0x1] %vm1341, 0.0
  %1348 = vst.msk [vmem:[#allocation3 + $0x60] sm:$0x1] %vm1341, 0.0
  %1349 = vst.msk [vmem:[#allocation3 + $0x70] sm:$0x1] %vm1341, 0.0
  %1350 = vst.msk [vmem:[#allocation3 + $0x80] sm:$0x1] %vm1341, 0.0
  %1351 = vst.msk [vmem:[#allocation3 + $0x90] sm:$0x1] %vm1341, 0.0
  %1352 = vst.msk [vmem:[#allocation3 + $0xa0] sm:$0x1] %vm1341, 0.0
  %1353 = vst.msk [vmem:[#allocation3 + $0xb0] sm:$0x1] %vm1341, 0.0
  %1354 = vst.msk [vmem:[#allocation3 + $0xc0] sm:$0x1] %vm1341, 0.0
  %1355 = vst.msk [vmem:[#allocation3 + $0xd0] sm:$0x1] %vm1341, 0.0
  %1356 = vst.msk [vmem:[#allocation3 + $0xe0] sm:$0x1] %vm1341, 0.0
  %1357 = vst.msk [vmem:[#allocation3 + $0xf0] sm:$0x1] %vm1341, 0.0
  %1358 = vst.msk [vmem:[#allocation3 + $0x100] sm:$0x1] %vm1341, 0.0
  %1359 = vst.msk [vmem:[#allocation3 + $0x110] sm:$0x1] %vm1341, 0.0
  %1360 = vst.msk [vmem:[#allocation3 + $0x120] sm:$0x1] %vm1341, 0.0
  %1361 = vst.msk [vmem:[#allocation3 + $0x130] sm:$0x1] %vm1341, 0.0
  %1362 = vst.msk [vmem:[#allocation3 + $0x9] sm:$0x1] %vm1341, 0.0
  %1363 = vst.msk [vmem:[#allocation3 + $0x19] sm:$0x1] %vm1341, 0.0
  %1364 = vst.msk [vmem:[#allocation3 + $0x29] sm:$0x1] %vm1341, 0.0
  %1365 = vst.msk [vmem:[#allocation3 + $0x39] sm:$0x1] %vm1341, 0.0
  %1366 = vst.msk [vmem:[#allocation3 + $0x49] sm:$0x1] %vm1341, 0.0
  %1367 = vst.msk [vmem:[#allocation3 + $0x59] sm:$0x1] %vm1341, 0.0
  %1368 = vst.msk [vmem:[#allocation3 + $0x69] sm:$0x1] %vm1341, 0.0
  %1369 = vst.msk [vmem:[#allocation3 + $0x79] sm:$0x1] %vm1341, 0.0
  %1370 = vst.msk [vmem:[#allocation3 + $0x89] sm:$0x1] %vm1341, 0.0
  %1371 = vst.msk [vmem:[#allocation3 + $0x99] sm:$0x1] %vm1341, 0.0
  %1372 = vst.msk [vmem:[#allocation3 + $0xa9] sm:$0x1] %vm1341, 0.0
  %1373 = vst.msk [vmem:[#allocation3 + $0xb9] sm:$0x1] %vm1341, 0.0
  %1374 = vst.msk [vmem:[#allocation3 + $0xc9] sm:$0x1] %vm1341, 0.0
  %1375 = vst.msk [vmem:[#allocation3 + $0xd9] sm:$0x1] %vm1341, 0.0
  %1376 = vst.msk [vmem:[#allocation3 + $0xe9] sm:$0x1] %vm1341, 0.0
  %1377 = vst.msk [vmem:[#allocation3 + $0xf9] sm:$0x1] %vm1341, 0.0
  %1378 = vst.msk [vmem:[#allocation3 + $0x109] sm:$0x1] %vm1341, 0.0
  %1379 = vst.msk [vmem:[#allocation3 + $0x119] sm:$0x1] %vm1341, 0.0
  %1380 = vst.msk [vmem:[#allocation3 + $0x129] sm:$0x1] %vm1341, 0.0
  %1381 = vst.msk [vmem:[#allocation3 + $0x139] sm:$0x1] %vm1341, 0.0
  %s1382 = scalar_lea.vmem [#allocation3], 16
  %1383 = vst.msk [vmem:[%s1382 + $0x1] sm:$0xff] %vm1154, %v1315
  %1384 = vst.msk [vmem:[%s1382 + $0x11] sm:$0xff] %vm1154, %v1316
  %1385 = vst.msk [vmem:[%s1382 + $0x21] sm:$0xff] %vm1154, %v1317
  %1386 = vst.msk [vmem:[%s1382 + $0x31] sm:$0xff] %vm1154, %v1318
  %1387 = vst.msk [vmem:[%s1382 + $0x41] sm:$0xff] %vm1154, %v1319
  %1388 = vst.msk [vmem:[%s1382 + $0x51] sm:$0xff] %vm1154, %v1320
  %1389 = vst.msk [vmem:[%s1382 + $0x61] sm:$0xff] %vm1154, %v1321
  %1390 = vst.msk [vmem:[%s1382 + $0x71] sm:$0xff] %vm1154, %v1322
  %1391 = vst.msk [vmem:[%s1382 + $0xa1] sm:$0xff] %vm1154, %v1323
  %1392 = vst.msk [vmem:[%s1382 + $0xb1] sm:$0xff] %vm1154, %v1324
  %1393 = vst.msk [vmem:[%s1382 + $0xc1] sm:$0xff] %vm1154, %v1325
  %1394 = vst.msk [vmem:[%s1382 + $0xd1] sm:$0xff] %vm1154, %v1326
  %1395 = vst.msk [vmem:[%s1382 + $0xe1] sm:$0xff] %vm1154, %v1327
  %1396 = vst.msk [vmem:[%s1382 + $0xf1] sm:$0xff] %vm1154, %v1328
  %1397 = vst.msk [vmem:[%s1382 + $0x101] sm:$0xff] %vm1154, %v1329
  %1398 = vst.msk [vmem:[%s1382 + $0x111] sm:$0xff] %vm1154, %v1330
  %v1399 = vld [vmem:[#allocation3] sm:$0xff]
  %v1400 = vld [vmem:[#allocation3 + $0x10] sm:$0xff]
  %v1401 = vld [vmem:[#allocation3 + $0x20] sm:$0xff]
  %v1402 = vld [vmem:[#allocation3 + $0x30] sm:$0xff]
  %v1403 = vld [vmem:[#allocation3 + $0x40] sm:$0xff]
  %v1404 = vld [vmem:[#allocation3 + $0x50] sm:$0xff]
  %v1405 = vld [vmem:[#allocation3 + $0x60] sm:$0xff]
  %v1406 = vld [vmem:[#allocation3 + $0x70] sm:$0xff]
  %v1407 = vld [vmem:[#allocation3 + $0xa0] sm:$0xff]
  %v1408 = vld [vmem:[#allocation3 + $0xb0] sm:$0xff]
  %v1409 = vld [vmem:[#allocation3 + $0xc0] sm:$0xff]
  %v1410 = vld [vmem:[#allocation3 + $0xd0] sm:$0xff]
  %v1411 = vld [vmem:[#allocation3 + $0xe0] sm:$0xff]
  %v1412 = vld [vmem:[#allocation3 + $0xf0] sm:$0xff]
  %v1413 = vld [vmem:[#allocation3 + $0x100] sm:$0xff]
  %v1414 = vld [vmem:[#allocation3 + $0x110] sm:$0xff]
  %v1415 = vpack.c.bf16 %v1399, %v1399
  %v1416 = vpack.c.bf16 %v1400, %v1400
  %v1417 = vpack.c.bf16 %v1401, %v1401
  %v1418 = vpack.c.bf16 %v1402, %v1402
  %v1419 = vpack.c.bf16 %v1403, %v1403
  %v1420 = vpack.c.bf16 %v1404, %v1404
  %v1421 = vpack.c.bf16 %v1405, %v1405
  %v1422 = vpack.c.bf16 %v1406, %v1406
  %v1423 = vpack.c.bf16 %v1407, %v1407
  %v1424 = vpack.c.bf16 %v1408, %v1408
  %v1425 = vpack.c.bf16 %v1409, %v1409
  %v1426 = vpack.c.bf16 %v1410, %v1410
  %v1427 = vpack.c.bf16 %v1411, %v1411
  %v1428 = vpack.c.bf16 %v1412, %v1412
  %v1429 = vpack.c.bf16 %v1413, %v1413
  %v1430 = vpack.c.bf16 %v1414, %v1414
  %vm1431 = vcmask 60416
  %1432 = vst.msk [vmem:[#allocation4] sm:$0xf] %vm1431, %v1415
  %1433 = vst.msk [vmem:[#allocation4 + $0x4] sm:$0xf] %vm1431, %v1416
  %1434 = vst.msk [vmem:[#allocation4 + $0x8] sm:$0xf] %vm1431, %v1417
  %1435 = vst.msk [vmem:[#allocation4 + $0xc] sm:$0xf] %vm1431, %v1418
  %1436 = vst.msk [vmem:[#allocation4 + $0x10] sm:$0xf] %vm1431, %v1419
  %1437 = vst.msk [vmem:[#allocation4 + $0x14] sm:$0xf] %vm1431, %v1420
  %1438 = vst.msk [vmem:[#allocation4 + $0x18] sm:$0xf] %vm1431, %v1421
  %1439 = vst.msk [vmem:[#allocation4 + $0x1c] sm:$0xf] %vm1431, %v1422
  %1440 = vst.msk [vmem:[#allocation4 + $0x20] sm:$0xf] %vm1431, %v1423
  %1441 = vst.msk [vmem:[#allocation4 + $0x24] sm:$0xf] %vm1431, %v1424
  %1442 = vst.msk [vmem:[#allocation4 + $0x28] sm:$0xf] %vm1431, %v1425
  %1443 = vst.msk [vmem:[#allocation4 + $0x2c] sm:$0xf] %vm1431, %v1426
  %1444 = vst.msk [vmem:[#allocation4 + $0x30] sm:$0xf] %vm1431, %v1427
  %1445 = vst.msk [vmem:[#allocation4 + $0x34] sm:$0xf] %vm1431, %v1428
  %1446 = vst.msk [vmem:[#allocation4 + $0x38] sm:$0xf] %vm1431, %v1429
  %1447 = vst.msk [vmem:[#allocation4 + $0x3c] sm:$0xf] %vm1431, %v1430
  %v1448 = vld [vmem:[#allocation3 + $0x1] sm:$0xff]
  %v1449 = vld [vmem:[#allocation3 + $0x11] sm:$0xff]
  %v1450 = vld [vmem:[#allocation3 + $0x21] sm:$0xff]
  %v1451 = vld [vmem:[#allocation3 + $0x31] sm:$0xff]
  %v1452 = vld [vmem:[#allocation3 + $0x41] sm:$0xff]
  %v1453 = vld [vmem:[#allocation3 + $0x51] sm:$0xff]
  %v1454 = vld [vmem:[#allocation3 + $0x61] sm:$0xff]
  %v1455 = vld [vmem:[#allocation3 + $0x71] sm:$0xff]
  %v1456 = vld [vmem:[#allocation3 + $0xa1] sm:$0xff]
  %v1457 = vld [vmem:[#allocation3 + $0xb1] sm:$0xff]
  %v1458 = vld [vmem:[#allocation3 + $0xc1] sm:$0xff]
  %v1459 = vld [vmem:[#allocation3 + $0xd1] sm:$0xff]
  %v1460 = vld [vmem:[#allocation3 + $0xe1] sm:$0xff]
  %v1461 = vld [vmem:[#allocation3 + $0xf1] sm:$0xff]
  %v1462 = vld [vmem:[#allocation3 + $0x101] sm:$0xff]
  %v1463 = vld [vmem:[#allocation3 + $0x111] sm:$0xff]
  %v1464 = vpack.c.bf16 %v1448, %v1448
  %v1465 = vpack.c.bf16 %v1449, %v1449
  %v1466 = vpack.c.bf16 %v1450, %v1450
  %v1467 = vpack.c.bf16 %v1451, %v1451
  %v1468 = vpack.c.bf16 %v1452, %v1452
  %v1469 = vpack.c.bf16 %v1453, %v1453
  %v1470 = vpack.c.bf16 %v1454, %v1454
  %v1471 = vpack.c.bf16 %v1455, %v1455
  %v1472 = vpack.c.bf16 %v1456, %v1456
  %v1473 = vpack.c.bf16 %v1457, %v1457
  %v1474 = vpack.c.bf16 %v1458, %v1458
  %v1475 = vpack.c.bf16 %v1459, %v1459
  %v1476 = vpack.c.bf16 %v1460, %v1460
  %v1477 = vpack.c.bf16 %v1461, %v1461
  %v1478 = vpack.c.bf16 %v1462, %v1462
  %v1479 = vpack.c.bf16 %v1463, %v1463
  %1496 = vrot.lane.b32.xlu0 %v1464, 8
  %v1497 = vpop.permute.xlu0 %1496
  %1498 = vrot.lane.b32.xlu0 %v1465, 8
  %v1499 = vpop.permute.xlu0 %1498
  %1500 = vrot.lane.b32.xlu0 %v1466, 8
  %v1501 = vpop.permute.xlu0 %1500
  %1502 = vrot.lane.b32.xlu0 %v1467, 8
  %v1503 = vpop.permute.xlu0 %1502
  %1504 = vrot.lane.b32.xlu0 %v1468, 8
  %v1505 = vpop.permute.xlu0 %1504
  %1506 = vrot.lane.b32.xlu0 %v1469, 8
  %v1507 = vpop.permute.xlu0 %1506
  %1508 = vrot.lane.b32.xlu0 %v1470, 8
  %v1509 = vpop.permute.xlu0 %1508
  %1510 = vrot.lane.b32.xlu0 %v1471, 8
  %v1511 = vpop.permute.xlu0 %1510
  %1512 = vrot.lane.b32.xlu0 %v1472, 8
  %v1513 = vpop.permute.xlu0 %1512
  %1514 = vrot.lane.b32.xlu0 %v1473, 8
  %v1515 = vpop.permute.xlu0 %1514
  %1516 = vrot.lane.b32.xlu0 %v1474, 8
  %v1517 = vpop.permute.xlu0 %1516
  %1518 = vrot.lane.b32.xlu0 %v1475, 8
  %v1519 = vpop.permute.xlu0 %1518
  %1520 = vrot.lane.b32.xlu0 %v1476, 8
  %v1521 = vpop.permute.xlu0 %1520
  %1522 = vrot.lane.b32.xlu0 %v1477, 8
  %v1523 = vpop.permute.xlu0 %1522
  %1524 = vrot.lane.b32.xlu0 %v1478, 8
  %v1525 = vpop.permute.xlu0 %1524
  %1526 = vrot.lane.b32.xlu0 %v1479, 8
  %v1527 = vpop.permute.xlu0 %1526
  %vm1544 = vcmask 126016
  %1545 = vst.msk [vmem:[#allocation4] sm:$0xf] %vm1544, %v1497
  %1546 = vst.msk [vmem:[#allocation4 + $0x4] sm:$0xf] %vm1544, %v1499
  %1547 = vst.msk [vmem:[#allocation4 + $0x8] sm:$0xf] %vm1544, %v1501
  %1548 = vst.msk [vmem:[#allocation4 + $0xc] sm:$0xf] %vm1544, %v1503
  %1549 = vst.msk [vmem:[#allocation4 + $0x10] sm:$0xf] %vm1544, %v1505
  %1550 = vst.msk [vmem:[#allocation4 + $0x14] sm:$0xf] %vm1544, %v1507
  %1551 = vst.msk [vmem:[#allocation4 + $0x18] sm:$0xf] %vm1544, %v1509
  %1552 = vst.msk [vmem:[#allocation4 + $0x1c] sm:$0xf] %vm1544, %v1511
  %1553 = vst.msk [vmem:[#allocation4 + $0x20] sm:$0xf] %vm1544, %v1513
  %1554 = vst.msk [vmem:[#allocation4 + $0x24] sm:$0xf] %vm1544, %v1515
  %1555 = vst.msk [vmem:[#allocation4 + $0x28] sm:$0xf] %vm1544, %v1517
  %1556 = vst.msk [vmem:[#allocation4 + $0x2c] sm:$0xf] %vm1544, %v1519
  %1557 = vst.msk [vmem:[#allocation4 + $0x30] sm:$0xf] %vm1544, %v1521
  %1558 = vst.msk [vmem:[#allocation4 + $0x34] sm:$0xf] %vm1544, %v1523
  %1559 = vst.msk [vmem:[#allocation4 + $0x38] sm:$0xf] %vm1544, %v1525
  %1560 = vst.msk [vmem:[#allocation4 + $0x3c] sm:$0xf] %vm1544, %v1527
  %v1561 = vld [vmem:[#allocation3 + $0x2] sm:$0xff]
  %v1562 = vld [vmem:[#allocation3 + $0x12] sm:$0xff]
  %v1563 = vld [vmem:[#allocation3 + $0x22] sm:$0xff]
  %v1564 = vld [vmem:[#allocation3 + $0x32] sm:$0xff]
  %v1565 = vld [vmem:[#allocation3 + $0x42] sm:$0xff]
  %v1566 = vld [vmem:[#allocation3 + $0x52] sm:$0xff]
  %v1567 = vld [vmem:[#allocation3 + $0x62] sm:$0xff]
  %v1568 = vld [vmem:[#allocation3 + $0x72] sm:$0xff]
  %v1569 = vld [vmem:[#allocation3 + $0xa2] sm:$0xff]
  %v1570 = vld [vmem:[#allocation3 + $0xb2] sm:$0xff]
  %v1571 = vld [vmem:[#allocation3 + $0xc2] sm:$0xff]
  %v1572 = vld [vmem:[#allocation3 + $0xd2] sm:$0xff]
  %v1573 = vld [vmem:[#allocation3 + $0xe2] sm:$0xff]
  %v1574 = vld [vmem:[#allocation3 + $0xf2] sm:$0xff]
  %v1575 = vld [vmem:[#allocation3 + $0x102] sm:$0xff]
  %v1576 = vld [vmem:[#allocation3 + $0x112] sm:$0xff]
  %v1577 = vpack.c.bf16 %v1561, %v1561
  %v1578 = vpack.c.bf16 %v1562, %v1562
  %v1579 = vpack.c.bf16 %v1563, %v1563
  %v1580 = vpack.c.bf16 %v1564, %v1564
  %v1581 = vpack.c.bf16 %v1565, %v1565
  %v1582 = vpack.c.bf16 %v1566, %v1566
  %v1583 = vpack.c.bf16 %v1567, %v1567
  %v1584 = vpack.c.bf16 %v1568, %v1568
  %v1585 = vpack.c.bf16 %v1569, %v1569
  %v1586 = vpack.c.bf16 %v1570, %v1570
  %v1587 = vpack.c.bf16 %v1571, %v1571
  %v1588 = vpack.c.bf16 %v1572, %v1572
  %v1589 = vpack.c.bf16 %v1573, %v1573
  %v1590 = vpack.c.bf16 %v1574, %v1574
  %v1591 = vpack.c.bf16 %v1575, %v1575
  %v1592 = vpack.c.bf16 %v1576, %v1576
  %1609 = vrot.lane.b32.xlu0 %v1577, 16
  %v1610 = vpop.permute.xlu0 %1609
  %1611 = vrot.lane.b32.xlu0 %v1578, 16
  %v1612 = vpop.permute.xlu0 %1611
  %1613 = vrot.lane.b32.xlu0 %v1579, 16
  %v1614 = vpop.permute.xlu0 %1613
  %1615 = vrot.lane.b32.xlu0 %v1580, 16
  %v1616 = vpop.permute.xlu0 %1615
  %1617 = vrot.lane.b32.xlu0 %v1581, 16
  %v1618 = vpop.permute.xlu0 %1617
  %1619 = vrot.lane.b32.xlu0 %v1582, 16
  %v1620 = vpop.permute.xlu0 %1619
  %1621 = vrot.lane.b32.xlu0 %v1583, 16
  %v1622 = vpop.permute.xlu0 %1621
  %1623 = vrot.lane.b32.xlu0 %v1584, 16
  %v1624 = vpop.permute.xlu0 %1623
  %1625 = vrot.lane.b32.xlu0 %v1585, 16
  %v1626 = vpop.permute.xlu0 %1625
  %1627 = vrot.lane.b32.xlu0 %v1586, 16
  %v1628 = vpop.permute.xlu0 %1627
  %1629 = vrot.lane.b32.xlu0 %v1587, 16
  %v1630 = vpop.permute.xlu0 %1629
  %1631 = vrot.lane.b32.xlu0 %v1588, 16
  %v1632 = vpop.permute.xlu0 %1631
  %1633 = vrot.lane.b32.xlu0 %v1589, 16
  %v1634 = vpop.permute.xlu0 %1633
  %1635 = vrot.lane.b32.xlu0 %v1590, 16
  %v1636 = vpop.permute.xlu0 %1635
  %1637 = vrot.lane.b32.xlu0 %v1591, 16
  %v1638 = vpop.permute.xlu0 %1637
  %1639 = vrot.lane.b32.xlu0 %v1592, 16
  %v1640 = vpop.permute.xlu0 %1639
  %vm1657 = vcmask 191616
  %1658 = vst.msk [vmem:[#allocation4] sm:$0xf] %vm1657, %v1610
  %1659 = vst.msk [vmem:[#allocation4 + $0x4] sm:$0xf] %vm1657, %v1612
  %1660 = vst.msk [vmem:[#allocation4 + $0x8] sm:$0xf] %vm1657, %v1614
  %1661 = vst.msk [vmem:[#allocation4 + $0xc] sm:$0xf] %vm1657, %v1616
  %1662 = vst.msk [vmem:[#allocation4 + $0x10] sm:$0xf] %vm1657, %v1618
  %1663 = vst.msk [vmem:[#allocation4 + $0x14] sm:$0xf] %vm1657, %v1620
  %1664 = vst.msk [vmem:[#allocation4 + $0x18] sm:$0xf] %vm1657, %v1622
  %1665 = vst.msk [vmem:[#allocation4 + $0x1c] sm:$0xf] %vm1657, %v1624
  %1666 = vst.msk [vmem:[#allocation4 + $0x20] sm:$0xf] %vm1657, %v1626
  %1667 = vst.msk [vmem:[#allocation4 + $0x24] sm:$0xf] %vm1657, %v1628
  %1668 = vst.msk [vmem:[#allocation4 + $0x28] sm:$0xf] %vm1657, %v1630
  %1669 = vst.msk [vmem:[#allocation4 + $0x2c] sm:$0xf] %vm1657, %v1632
  %1670 = vst.msk [vmem:[#allocation4 + $0x30] sm:$0xf] %vm1657, %v1634
  %1671 = vst.msk [vmem:[#allocation4 + $0x34] sm:$0xf] %vm1657, %v1636
  %1672 = vst.msk [vmem:[#allocation4 + $0x38] sm:$0xf] %vm1657, %v1638
  %1673 = vst.msk [vmem:[#allocation4 + $0x3c] sm:$0xf] %vm1657, %v1640
  %v1674 = vld [vmem:[%s1382] sm:$0xff]
  %v1675 = vld [vmem:[%s1382 + $0x10] sm:$0xff]
  %v1676 = vld [vmem:[%s1382 + $0x20] sm:$0xff]
  %v1677 = vld [vmem:[%s1382 + $0x30] sm:$0xff]
  %v1678 = vld [vmem:[%s1382 + $0x40] sm:$0xff]
  %v1679 = vld [vmem:[%s1382 + $0x50] sm:$0xff]
  %v1680 = vld [vmem:[%s1382 + $0x60] sm:$0xff]
  %v1681 = vld [vmem:[%s1382 + $0x70] sm:$0xff]
  %v1682 = vld [vmem:[%s1382 + $0xa0] sm:$0xff]
  %v1683 = vld [vmem:[%s1382 + $0xb0] sm:$0xff]
  %v1684 = vld [vmem:[%s1382 + $0xc0] sm:$0xff]
  %v1685 = vld [vmem:[%s1382 + $0xd0] sm:$0xff]
  %v1686 = vld [vmem:[%s1382 + $0xe0] sm:$0xff]
  %v1687 = vld [vmem:[%s1382 + $0xf0] sm:$0xff]
  %v1688 = vld [vmem:[%s1382 + $0x100] sm:$0xff]
  %v1689 = vld [vmem:[%s1382 + $0x110] sm:$0xff]
  %v1690 = vpack.c.bf16 %v1674, %v1674
  %v1691 = vpack.c.bf16 %v1675, %v1675
  %v1692 = vpack.c.bf16 %v1676, %v1676
  %v1693 = vpack.c.bf16 %v1677, %v1677
  %v1694 = vpack.c.bf16 %v1678, %v1678
  %v1695 = vpack.c.bf16 %v1679, %v1679
  %v1696 = vpack.c.bf16 %v1680, %v1680
  %v1697 = vpack.c.bf16 %v1681, %v1681
  %v1698 = vpack.c.bf16 %v1682, %v1682
  %v1699 = vpack.c.bf16 %v1683, %v1683
  %v1700 = vpack.c.bf16 %v1684, %v1684
  %v1701 = vpack.c.bf16 %v1685, %v1685
  %v1702 = vpack.c.bf16 %v1686, %v1686
  %v1703 = vpack.c.bf16 %v1687, %v1687
  %v1704 = vpack.c.bf16 %v1688, %v1688
  %v1705 = vpack.c.bf16 %v1689, %v1689
  %1722 = vrot.lane.b32.xlu0 %v1690, 24
  %v1723 = vpop.permute.xlu0 %1722
  %1724 = vrot.lane.b32.xlu0 %v1691, 24
  %v1725 = vpop.permute.xlu0 %1724
  %1726 = vrot.lane.b32.xlu0 %v1692, 24
  %v1727 = vpop.permute.xlu0 %1726
  %1728 = vrot.lane.b32.xlu0 %v1693, 24
  %v1729 = vpop.permute.xlu0 %1728
  %1730 = vrot.lane.b32.xlu0 %v1694, 24
  %v1731 = vpop.permute.xlu0 %1730
  %1732 = vrot.lane.b32.xlu0 %v1695, 24
  %v1733 = vpop.permute.xlu0 %1732
  %1734 = vrot.lane.b32.xlu0 %v1696, 24
  %v1735 = vpop.permute.xlu0 %1734
  %1736 = vrot.lane.b32.xlu0 %v1697, 24
  %v1737 = vpop.permute.xlu0 %1736
  %1738 = vrot.lane.b32.xlu0 %v1698, 24
  %v1739 = vpop.permute.xlu0 %1738
  %1740 = vrot.lane.b32.xlu0 %v1699, 24
  %v1741 = vpop.permute.xlu0 %1740
  %1742 = vrot.lane.b32.xlu0 %v1700, 24
  %v1743 = vpop.permute.xlu0 %1742
  %1744 = vrot.lane.b32.xlu0 %v1701, 24
  %v1745 = vpop.permute.xlu0 %1744
  %1746 = vrot.lane.b32.xlu0 %v1702, 24
  %v1747 = vpop.permute.xlu0 %1746
  %1748 = vrot.lane.b32.xlu0 %v1703, 24
  %v1749 = vpop.permute.xlu0 %1748
  %1750 = vrot.lane.b32.xlu0 %v1704, 24
  %v1751 = vpop.permute.xlu0 %1750
  %1752 = vrot.lane.b32.xlu0 %v1705, 24
  %v1753 = vpop.permute.xlu0 %1752
  %vm1770 = vcmask 257216
  %1771 = vst.msk [vmem:[#allocation4] sm:$0xf] %vm1770, %v1723
  %1772 = vst.msk [vmem:[#allocation4 + $0x4] sm:$0xf] %vm1770, %v1725
  %1773 = vst.msk [vmem:[#allocation4 + $0x8] sm:$0xf] %vm1770, %v1727
  %1774 = vst.msk [vmem:[#allocation4 + $0xc] sm:$0xf] %vm1770, %v1729
  %1775 = vst.msk [vmem:[#allocation4 + $0x10] sm:$0xf] %vm1770, %v1731
  %1776 = vst.msk [vmem:[#allocation4 + $0x14] sm:$0xf] %vm1770, %v1733
  %1777 = vst.msk [vmem:[#allocation4 + $0x18] sm:$0xf] %vm1770, %v1735
  %1778 = vst.msk [vmem:[#allocation4 + $0x1c] sm:$0xf] %vm1770, %v1737
  %1779 = vst.msk [vmem:[#allocation4 + $0x20] sm:$0xf] %vm1770, %v1739
  %1780 = vst.msk [vmem:[#allocation4 + $0x24] sm:$0xf] %vm1770, %v1741
  %1781 = vst.msk [vmem:[#allocation4 + $0x28] sm:$0xf] %vm1770, %v1743
  %1782 = vst.msk [vmem:[#allocation4 + $0x2c] sm:$0xf] %vm1770, %v1745
  %1783 = vst.msk [vmem:[#allocation4 + $0x30] sm:$0xf] %vm1770, %v1747
  %1784 = vst.msk [vmem:[#allocation4 + $0x34] sm:$0xf] %vm1770, %v1749
  %1785 = vst.msk [vmem:[#allocation4 + $0x38] sm:$0xf] %vm1770, %v1751
  %1786 = vst.msk [vmem:[#allocation4 + $0x3c] sm:$0xf] %vm1770, %v1753
  %v1787 = vld [vmem:[%s1382 + $0x1] sm:$0xff]
  %v1788 = vld [vmem:[%s1382 + $0x11] sm:$0xff]
  %v1789 = vld [vmem:[%s1382 + $0x21] sm:$0xff]
  %v1790 = vld [vmem:[%s1382 + $0x31] sm:$0xff]
  %v1791 = vld [vmem:[%s1382 + $0x41] sm:$0xff]
  %v1792 = vld [vmem:[%s1382 + $0x51] sm:$0xff]
  %v1793 = vld [vmem:[%s1382 + $0x61] sm:$0xff]
  %v1794 = vld [vmem:[%s1382 + $0x71] sm:$0xff]
  %v1795 = vld [vmem:[%s1382 + $0xa1] sm:$0xff]
  %v1796 = vld [vmem:[%s1382 + $0xb1] sm:$0xff]
  %v1797 = vld [vmem:[%s1382 + $0xc1] sm:$0xff]
  %v1798 = vld [vmem:[%s1382 + $0xd1] sm:$0xff]
  %v1799 = vld [vmem:[%s1382 + $0xe1] sm:$0xff]
  %v1800 = vld [vmem:[%s1382 + $0xf1] sm:$0xff]
  %v1801 = vld [vmem:[%s1382 + $0x101] sm:$0xff]
  %v1802 = vld [vmem:[%s1382 + $0x111] sm:$0xff]
  %v1803 = vpack.c.bf16 %v1787, %v1787
  %v1804 = vpack.c.bf16 %v1788, %v1788
  %v1805 = vpack.c.bf16 %v1789, %v1789
  %v1806 = vpack.c.bf16 %v1790, %v1790
  %v1807 = vpack.c.bf16 %v1791, %v1791
  %v1808 = vpack.c.bf16 %v1792, %v1792
  %v1809 = vpack.c.bf16 %v1793, %v1793
  %v1810 = vpack.c.bf16 %v1794, %v1794
  %v1811 = vpack.c.bf16 %v1795, %v1795
  %v1812 = vpack.c.bf16 %v1796, %v1796
  %v1813 = vpack.c.bf16 %v1797, %v1797
  %v1814 = vpack.c.bf16 %v1798, %v1798
  %v1815 = vpack.c.bf16 %v1799, %v1799
  %v1816 = vpack.c.bf16 %v1800, %v1800
  %v1817 = vpack.c.bf16 %v1801, %v1801
  %v1818 = vpack.c.bf16 %v1802, %v1802
  %1835 = vrot.lane.b32.xlu0 %v1803, 32
  %v1836 = vpop.permute.xlu0 %1835
  %1837 = vrot.lane.b32.xlu0 %v1804, 32
  %v1838 = vpop.permute.xlu0 %1837
  %1839 = vrot.lane.b32.xlu0 %v1805, 32
  %v1840 = vpop.permute.xlu0 %1839
  %1841 = vrot.lane.b32.xlu0 %v1806, 32
  %v1842 = vpop.permute.xlu0 %1841
  %1843 = vrot.lane.b32.xlu0 %v1807, 32
  %v1844 = vpop.permute.xlu0 %1843
  %1845 = vrot.lane.b32.xlu0 %v1808, 32
  %v1846 = vpop.permute.xlu0 %1845
  %1847 = vrot.lane.b32.xlu0 %v1809, 32
  %v1848 = vpop.permute.xlu0 %1847
  %1849 = vrot.lane.b32.xlu0 %v1810, 32
  %v1850 = vpop.permute.xlu0 %1849
  %1851 = vrot.lane.b32.xlu0 %v1811, 32
  %v1852 = vpop.permute.xlu0 %1851
  %1853 = vrot.lane.b32.xlu0 %v1812, 32
  %v1854 = vpop.permute.xlu0 %1853
  %1855 = vrot.lane.b32.xlu0 %v1813, 32
  %v1856 = vpop.permute.xlu0 %1855
  %1857 = vrot.lane.b32.xlu0 %v1814, 32
  %v1858 = vpop.permute.xlu0 %1857
  %1859 = vrot.lane.b32.xlu0 %v1815, 32
  %v1860 = vpop.permute.xlu0 %1859
  %1861 = vrot.lane.b32.xlu0 %v1816, 32
  %v1862 = vpop.permute.xlu0 %1861
  %1863 = vrot.lane.b32.xlu0 %v1817, 32
  %v1864 = vpop.permute.xlu0 %1863
  %1865 = vrot.lane.b32.xlu0 %v1818, 32
  %v1866 = vpop.permute.xlu0 %1865
  %vm1883 = vcmask 322816
  %1884 = vst.msk [vmem:[#allocation4] sm:$0xf] %vm1883, %v1836
  %1885 = vst.msk [vmem:[#allocation4 + $0x4] sm:$0xf] %vm1883, %v1838
  %1886 = vst.msk [vmem:[#allocation4 + $0x8] sm:$0xf] %vm1883, %v1840
  %1887 = vst.msk [vmem:[#allocation4 + $0xc] sm:$0xf] %vm1883, %v1842
  %1888 = vst.msk [vmem:[#allocation4 + $0x10] sm:$0xf] %vm1883, %v1844
  %1889 = vst.msk [vmem:[#allocation4 + $0x14] sm:$0xf] %vm1883, %v1846
  %1890 = vst.msk [vmem:[#allocation4 + $0x18] sm:$0xf] %vm1883, %v1848
  %1891 = vst.msk [vmem:[#allocation4 + $0x1c] sm:$0xf] %vm1883, %v1850
  %1892 = vst.msk [vmem:[#allocation4 + $0x20] sm:$0xf] %vm1883, %v1852
  %1893 = vst.msk [vmem:[#allocation4 + $0x24] sm:$0xf] %vm1883, %v1854
  %1894 = vst.msk [vmem:[#allocation4 + $0x28] sm:$0xf] %vm1883, %v1856
  %1895 = vst.msk [vmem:[#allocation4 + $0x2c] sm:$0xf] %vm1883, %v1858
  %1896 = vst.msk [vmem:[#allocation4 + $0x30] sm:$0xf] %vm1883, %v1860
  %1897 = vst.msk [vmem:[#allocation4 + $0x34] sm:$0xf] %vm1883, %v1862
  %1898 = vst.msk [vmem:[#allocation4 + $0x38] sm:$0xf] %vm1883, %v1864
  %1899 = vst.msk [vmem:[#allocation4 + $0x3c] sm:$0xf] %vm1883, %v1866
  %v1900 = vld [vmem:[%s1382 + $0x2] sm:$0xff]
  %v1901 = vld [vmem:[%s1382 + $0x12] sm:$0xff]
  %v1902 = vld [vmem:[%s1382 + $0x22] sm:$0xff]
  %v1903 = vld [vmem:[%s1382 + $0x32] sm:$0xff]
  %v1904 = vld [vmem:[%s1382 + $0x42] sm:$0xff]
  %v1905 = vld [vmem:[%s1382 + $0x52] sm:$0xff]
  %v1906 = vld [vmem:[%s1382 + $0x62] sm:$0xff]
  %v1907 = vld [vmem:[%s1382 + $0x72] sm:$0xff]
  %v1908 = vld [vmem:[%s1382 + $0xa2] sm:$0xff]
  %v1909 = vld [vmem:[%s1382 + $0xb2] sm:$0xff]
  %v1910 = vld [vmem:[%s1382 + $0xc2] sm:$0xff]
  %v1911 = vld [vmem:[%s1382 + $0xd2] sm:$0xff]
  %v1912 = vld [vmem:[%s1382 + $0xe2] sm:$0xff]
  %v1913 = vld [vmem:[%s1382 + $0xf2] sm:$0xff]
  %v1914 = vld [vmem:[%s1382 + $0x102] sm:$0xff]
  %v1915 = vld [vmem:[%s1382 + $0x112] sm:$0xff]
  %v1916 = vpack.c.bf16 %v1900, %v1900
  %v1917 = vpack.c.bf16 %v1901, %v1901
  %v1918 = vpack.c.bf16 %v1902, %v1902
  %v1919 = vpack.c.bf16 %v1903, %v1903
  %v1920 = vpack.c.bf16 %v1904, %v1904
  %v1921 = vpack.c.bf16 %v1905, %v1905
  %v1922 = vpack.c.bf16 %v1906, %v1906
  %v1923 = vpack.c.bf16 %v1907, %v1907
  %v1924 = vpack.c.bf16 %v1908, %v1908
  %v1925 = vpack.c.bf16 %v1909, %v1909
  %v1926 = vpack.c.bf16 %v1910, %v1910
  %v1927 = vpack.c.bf16 %v1911, %v1911
  %v1928 = vpack.c.bf16 %v1912, %v1912
  %v1929 = vpack.c.bf16 %v1913, %v1913
  %v1930 = vpack.c.bf16 %v1914, %v1914
  %v1931 = vpack.c.bf16 %v1915, %v1915
  %1948 = vrot.lane.b32.xlu0 %v1916, 40
  %v1949 = vpop.permute.xlu0 %1948
  %1950 = vrot.lane.b32.xlu0 %v1917, 40
  %v1951 = vpop.permute.xlu0 %1950
  %1952 = vrot.lane.b32.xlu0 %v1918, 40
  %v1953 = vpop.permute.xlu0 %1952
  %1954 = vrot.lane.b32.xlu0 %v1919, 40
  %v1955 = vpop.permute.xlu0 %1954
  %1956 = vrot.lane.b32.xlu0 %v1920, 40
  %v1957 = vpop.permute.xlu0 %1956
  %1958 = vrot.lane.b32.xlu0 %v1921, 40
  %v1959 = vpop.permute.xlu0 %1958
  %1960 = vrot.lane.b32.xlu0 %v1922, 40
  %v1961 = vpop.permute.xlu0 %1960
  %1962 = vrot.lane.b32.xlu0 %v1923, 40
  %v1963 = vpop.permute.xlu0 %1962
  %1964 = vrot.lane.b32.xlu0 %v1924, 40
  %v1965 = vpop.permute.xlu0 %1964
  %1966 = vrot.lane.b32.xlu0 %v1925, 40
  %v1967 = vpop.permute.xlu0 %1966
  %1968 = vrot.lane.b32.xlu0 %v1926, 40
  %v1969 = vpop.permute.xlu0 %1968
  %1970 = vrot.lane.b32.xlu0 %v1927, 40
  %v1971 = vpop.permute.xlu0 %1970
  %1972 = vrot.lane.b32.xlu0 %v1928, 40
  %v1973 = vpop.permute.xlu0 %1972
  %1974 = vrot.lane.b32.xlu0 %v1929, 40
  %v1975 = vpop.permute.xlu0 %1974
  %1976 = vrot.lane.b32.xlu0 %v1930, 40
  %v1977 = vpop.permute.xlu0 %1976
  %1978 = vrot.lane.b32.xlu0 %v1931, 40
  %v1979 = vpop.permute.xlu0 %1978
  %vm1996 = vcmask 388416
  %1997 = vst.msk [vmem:[#allocation4] sm:$0xf] %vm1996, %v1949
  %1998 = vst.msk [vmem:[#allocation4 + $0x4] sm:$0xf] %vm1996, %v1951
  %1999 = vst.msk [vmem:[#allocation4 + $0x8] sm:$0xf] %vm1996, %v1953
  %2000 = vst.msk [vmem:[#allocation4 + $0xc] sm:$0xf] %vm1996, %v1955
  %2001 = vst.msk [vmem:[#allocation4 + $0x10] sm:$0xf] %vm1996, %v1957
  %2002 = vst.msk [vmem:[#allocation4 + $0x14] sm:$0xf] %vm1996, %v1959
  %2003 = vst.msk [vmem:[#allocation4 + $0x18] sm:$0xf] %vm1996, %v1961
  %2004 = vst.msk [vmem:[#allocation4 + $0x1c] sm:$0xf] %vm1996, %v1963
  %2005 = vst.msk [vmem:[#allocation4 + $0x20] sm:$0xf] %vm1996, %v1965
  %2006 = vst.msk [vmem:[#allocation4 + $0x24] sm:$0xf] %vm1996, %v1967
  %2007 = vst.msk [vmem:[#allocation4 + $0x28] sm:$0xf] %vm1996, %v1969
  %2008 = vst.msk [vmem:[#allocation4 + $0x2c] sm:$0xf] %vm1996, %v1971
  %2009 = vst.msk [vmem:[#allocation4 + $0x30] sm:$0xf] %vm1996, %v1973
  %2010 = vst.msk [vmem:[#allocation4 + $0x34] sm:$0xf] %vm1996, %v1975
  %2011 = vst.msk [vmem:[#allocation4 + $0x38] sm:$0xf] %vm1996, %v1977
  %2012 = vst.msk [vmem:[#allocation4 + $0x3c] sm:$0xf] %vm1996, %v1979
  %s2013 = scalar_lea.vmem [#allocation3], 32
  %v2014 = vld [vmem:[%s2013] sm:$0xff]
  %v2015 = vld [vmem:[%s2013 + $0x10] sm:$0xff]
  %v2016 = vld [vmem:[%s2013 + $0x20] sm:$0xff]
  %v2017 = vld [vmem:[%s2013 + $0x30] sm:$0xff]
  %v2018 = vld [vmem:[%s2013 + $0x40] sm:$0xff]
  %v2019 = vld [vmem:[%s2013 + $0x50] sm:$0xff]
  %v2020 = vld [vmem:[%s2013 + $0x60] sm:$0xff]
  %v2021 = vld [vmem:[%s2013 + $0x70] sm:$0xff]
  %v2022 = vld [vmem:[%s2013 + $0xa0] sm:$0xff]
  %v2023 = vld [vmem:[%s2013 + $0xb0] sm:$0xff]
  %v2024 = vld [vmem:[%s2013 + $0xc0] sm:$0xff]
  %v2025 = vld [vmem:[%s2013 + $0xd0] sm:$0xff]
  %v2026 = vld [vmem:[%s2013 + $0xe0] sm:$0xff]
  %v2027 = vld [vmem:[%s2013 + $0xf0] sm:$0xff]
  %v2028 = vld [vmem:[%s2013 + $0x100] sm:$0xff]
  %v2029 = vld [vmem:[%s2013 + $0x110] sm:$0xff]
  %v2030 = vpack.c.bf16 %v2014, %v2014
  %v2031 = vpack.c.bf16 %v2015, %v2015
  %v2032 = vpack.c.bf16 %v2016, %v2016
  %v2033 = vpack.c.bf16 %v2017, %v2017
  %v2034 = vpack.c.bf16 %v2018, %v2018
  %v2035 = vpack.c.bf16 %v2019, %v2019
  %v2036 = vpack.c.bf16 %v2020, %v2020
  %v2037 = vpack.c.bf16 %v2021, %v2021
  %v2038 = vpack.c.bf16 %v2022, %v2022
  %v2039 = vpack.c.bf16 %v2023, %v2023
  %v2040 = vpack.c.bf16 %v2024, %v2024
  %v2041 = vpack.c.bf16 %v2025, %v2025
  %v2042 = vpack.c.bf16 %v2026, %v2026
  %v2043 = vpack.c.bf16 %v2027, %v2027
  %v2044 = vpack.c.bf16 %v2028, %v2028
  %v2045 = vpack.c.bf16 %v2029, %v2029
  %2062 = vrot.lane.b32.xlu0 %v2030, 48
  %v2063 = vpop.permute.xlu0 %2062
  %2064 = vrot.lane.b32.xlu0 %v2031, 48
  %v2065 = vpop.permute.xlu0 %2064
  %2066 = vrot.lane.b32.xlu0 %v2032, 48
  %v2067 = vpop.permute.xlu0 %2066
  %2068 = vrot.lane.b32.xlu0 %v2033, 48
  %v2069 = vpop.permute.xlu0 %2068
  %2070 = vrot.lane.b32.xlu0 %v2034, 48
  %v2071 = vpop.permute.xlu0 %2070
  %2072 = vrot.lane.b32.xlu0 %v2035, 48
  %v2073 = vpop.permute.xlu0 %2072
  %2074 = vrot.lane.b32.xlu0 %v2036, 48
  %v2075 = vpop.permute.xlu0 %2074
  %2076 = vrot.lane.b32.xlu0 %v2037, 48
  %v2077 = vpop.permute.xlu0 %2076
  %2078 = vrot.lane.b32.xlu0 %v2038, 48
  %v2079 = vpop.permute.xlu0 %2078
  %2080 = vrot.lane.b32.xlu0 %v2039, 48
  %v2081 = vpop.permute.xlu0 %2080
  %2082 = vrot.lane.b32.xlu0 %v2040, 48
  %v2083 = vpop.permute.xlu0 %2082
  %2084 = vrot.lane.b32.xlu0 %v2041, 48
  %v2085 = vpop.permute.xlu0 %2084
  %2086 = vrot.lane.b32.xlu0 %v2042, 48
  %v2087 = vpop.permute.xlu0 %2086
  %2088 = vrot.lane.b32.xlu0 %v2043, 48
  %v2089 = vpop.permute.xlu0 %2088
  %2090 = vrot.lane.b32.xlu0 %v2044, 48
  %v2091 = vpop.permute.xlu0 %2090
  %2092 = vrot.lane.b32.xlu0 %v2045, 48
  %v2093 = vpop.permute.xlu0 %2092
  %vm2110 = vcmask 454016
  %2111 = vst.msk [vmem:[#allocation4] sm:$0xf] %vm2110, %v2063
  %2112 = vst.msk [vmem:[#allocation4 + $0x4] sm:$0xf] %vm2110, %v2065
  %2113 = vst.msk [vmem:[#allocation4 + $0x8] sm:$0xf] %vm2110, %v2067
  %2114 = vst.msk [vmem:[#allocation4 + $0xc] sm:$0xf] %vm2110, %v2069
  %2115 = vst.msk [vmem:[#allocation4 + $0x10] sm:$0xf] %vm2110, %v2071
  %2116 = vst.msk [vmem:[#allocation4 + $0x14] sm:$0xf] %vm2110, %v2073
  %2117 = vst.msk [vmem:[#allocation4 + $0x18] sm:$0xf] %vm2110, %v2075
  %2118 = vst.msk [vmem:[#allocation4 + $0x1c] sm:$0xf] %vm2110, %v2077
  %2119 = vst.msk [vmem:[#allocation4 + $0x20] sm:$0xf] %vm2110, %v2079
  %2120 = vst.msk [vmem:[#allocation4 + $0x24] sm:$0xf] %vm2110, %v2081
  %2121 = vst.msk [vmem:[#allocation4 + $0x28] sm:$0xf] %vm2110, %v2083
  %2122 = vst.msk [vmem:[#allocation4 + $0x2c] sm:$0xf] %vm2110, %v2085
  %2123 = vst.msk [vmem:[#allocation4 + $0x30] sm:$0xf] %vm2110, %v2087
  %2124 = vst.msk [vmem:[#allocation4 + $0x34] sm:$0xf] %vm2110, %v2089
  %2125 = vst.msk [vmem:[#allocation4 + $0x38] sm:$0xf] %vm2110, %v2091
  %2126 = vst.msk [vmem:[#allocation4 + $0x3c] sm:$0xf] %vm2110, %v2093
  %v2127 = vld [vmem:[%s2013 + $0x1] sm:$0xff]
  %v2128 = vld [vmem:[%s2013 + $0x11] sm:$0xff]
  %v2129 = vld [vmem:[%s2013 + $0x21] sm:$0xff]
  %v2130 = vld [vmem:[%s2013 + $0x31] sm:$0xff]
  %v2131 = vld [vmem:[%s2013 + $0x41] sm:$0xff]
  %v2132 = vld [vmem:[%s2013 + $0x51] sm:$0xff]
  %v2133 = vld [vmem:[%s2013 + $0x61] sm:$0xff]
  %v2134 = vld [vmem:[%s2013 + $0x71] sm:$0xff]
  %v2135 = vld [vmem:[%s2013 + $0xa1] sm:$0xff]
  %v2136 = vld [vmem:[%s2013 + $0xb1] sm:$0xff]
  %v2137 = vld [vmem:[%s2013 + $0xc1] sm:$0xff]
  %v2138 = vld [vmem:[%s2013 + $0xd1] sm:$0xff]
  %v2139 = vld [vmem:[%s2013 + $0xe1] sm:$0xff]
  %v2140 = vld [vmem:[%s2013 + $0xf1] sm:$0xff]
  %v2141 = vld [vmem:[%s2013 + $0x101] sm:$0xff]
  %v2142 = vld [vmem:[%s2013 + $0x111] sm:$0xff]
  %v2143 = vpack.c.bf16 %v2127, %v2127
  %v2144 = vpack.c.bf16 %v2128, %v2128
  %v2145 = vpack.c.bf16 %v2129, %v2129
  %v2146 = vpack.c.bf16 %v2130, %v2130
  %v2147 = vpack.c.bf16 %v2131, %v2131
  %v2148 = vpack.c.bf16 %v2132, %v2132
  %v2149 = vpack.c.bf16 %v2133, %v2133
  %v2150 = vpack.c.bf16 %v2134, %v2134
  %v2151 = vpack.c.bf16 %v2135, %v2135
  %v2152 = vpack.c.bf16 %v2136, %v2136
  %v2153 = vpack.c.bf16 %v2137, %v2137
  %v2154 = vpack.c.bf16 %v2138, %v2138
  %v2155 = vpack.c.bf16 %v2139, %v2139
  %v2156 = vpack.c.bf16 %v2140, %v2140
  %v2157 = vpack.c.bf16 %v2141, %v2141
  %v2158 = vpack.c.bf16 %v2142, %v2142
  %2175 = vrot.lane.b32.xlu0 %v2143, 56
  %v2176 = vpop.permute.xlu0 %2175
  %2177 = vrot.lane.b32.xlu0 %v2144, 56
  %v2178 = vpop.permute.xlu0 %2177
  %2179 = vrot.lane.b32.xlu0 %v2145, 56
  %v2180 = vpop.permute.xlu0 %2179
  %2181 = vrot.lane.b32.xlu0 %v2146, 56
  %v2182 = vpop.permute.xlu0 %2181
  %2183 = vrot.lane.b32.xlu0 %v2147, 56
  %v2184 = vpop.permute.xlu0 %2183
  %2185 = vrot.lane.b32.xlu0 %v2148, 56
  %v2186 = vpop.permute.xlu0 %2185
  %2187 = vrot.lane.b32.xlu0 %v2149, 56
  %v2188 = vpop.permute.xlu0 %2187
  %2189 = vrot.lane.b32.xlu0 %v2150, 56
  %v2190 = vpop.permute.xlu0 %2189
  %2191 = vrot.lane.b32.xlu0 %v2151, 56
  %v2192 = vpop.permute.xlu0 %2191
  %2193 = vrot.lane.b32.xlu0 %v2152, 56
  %v2194 = vpop.permute.xlu0 %2193
  %2195 = vrot.lane.b32.xlu0 %v2153, 56
  %v2196 = vpop.permute.xlu0 %2195
  %2197 = vrot.lane.b32.xlu0 %v2154, 56
  %v2198 = vpop.permute.xlu0 %2197
  %2199 = vrot.lane.b32.xlu0 %v2155, 56
  %v2200 = vpop.permute.xlu0 %2199
  %2201 = vrot.lane.b32.xlu0 %v2156, 56
  %v2202 = vpop.permute.xlu0 %2201
  %2203 = vrot.lane.b32.xlu0 %v2157, 56
  %v2204 = vpop.permute.xlu0 %2203
  %2205 = vrot.lane.b32.xlu0 %v2158, 56
  %v2206 = vpop.permute.xlu0 %2205
  %vm2223 = vcmask 519616
  %2224 = vst.msk [vmem:[#allocation4] sm:$0xf] %vm2223, %v2176
  %2225 = vst.msk [vmem:[#allocation4 + $0x4] sm:$0xf] %vm2223, %v2178
  %2226 = vst.msk [vmem:[#allocation4 + $0x8] sm:$0xf] %vm2223, %v2180
  %2227 = vst.msk [vmem:[#allocation4 + $0xc] sm:$0xf] %vm2223, %v2182
  %2228 = vst.msk [vmem:[#allocation4 + $0x10] sm:$0xf] %vm2223, %v2184
  %2229 = vst.msk [vmem:[#allocation4 + $0x14] sm:$0xf] %vm2223, %v2186
  %2230 = vst.msk [vmem:[#allocation4 + $0x18] sm:$0xf] %vm2223, %v2188
  %2231 = vst.msk [vmem:[#allocation4 + $0x1c] sm:$0xf] %vm2223, %v2190
  %2232 = vst.msk [vmem:[#allocation4 + $0x20] sm:$0xf] %vm2223, %v2192
  %2233 = vst.msk [vmem:[#allocation4 + $0x24] sm:$0xf] %vm2223, %v2194
  %2234 = vst.msk [vmem:[#allocation4 + $0x28] sm:$0xf] %vm2223, %v2196
  %2235 = vst.msk [vmem:[#allocation4 + $0x2c] sm:$0xf] %vm2223, %v2198
  %2236 = vst.msk [vmem:[#allocation4 + $0x30] sm:$0xf] %vm2223, %v2200
  %2237 = vst.msk [vmem:[#allocation4 + $0x34] sm:$0xf] %vm2223, %v2202
  %2238 = vst.msk [vmem:[#allocation4 + $0x38] sm:$0xf] %vm2223, %v2204
  %2239 = vst.msk [vmem:[#allocation4 + $0x3c] sm:$0xf] %vm2223, %v2206
  %v2240 = vld [vmem:[%s2013 + $0x2] sm:$0xff]
  %v2241 = vld [vmem:[%s2013 + $0x12] sm:$0xff]
  %v2242 = vld [vmem:[%s2013 + $0x22] sm:$0xff]
  %v2243 = vld [vmem:[%s2013 + $0x32] sm:$0xff]
  %v2244 = vld [vmem:[%s2013 + $0x42] sm:$0xff]
  %v2245 = vld [vmem:[%s2013 + $0x52] sm:$0xff]
  %v2246 = vld [vmem:[%s2013 + $0x62] sm:$0xff]
  %v2247 = vld [vmem:[%s2013 + $0x72] sm:$0xff]
  %v2248 = vld [vmem:[%s2013 + $0xa2] sm:$0xff]
  %v2249 = vld [vmem:[%s2013 + $0xb2] sm:$0xff]
  %v2250 = vld [vmem:[%s2013 + $0xc2] sm:$0xff]
  %v2251 = vld [vmem:[%s2013 + $0xd2] sm:$0xff]
  %v2252 = vld [vmem:[%s2013 + $0xe2] sm:$0xff]
  %v2253 = vld [vmem:[%s2013 + $0xf2] sm:$0xff]
  %v2254 = vld [vmem:[%s2013 + $0x102] sm:$0xff]
  %v2255 = vld [vmem:[%s2013 + $0x112] sm:$0xff]
  %v2256 = vpack.c.bf16 %v2240, %v2240
  %v2257 = vpack.c.bf16 %v2241, %v2241
  %v2258 = vpack.c.bf16 %v2242, %v2242
  %v2259 = vpack.c.bf16 %v2243, %v2243
  %v2260 = vpack.c.bf16 %v2244, %v2244
  %v2261 = vpack.c.bf16 %v2245, %v2245
  %v2262 = vpack.c.bf16 %v2246, %v2246
  %v2263 = vpack.c.bf16 %v2247, %v2247
  %v2264 = vpack.c.bf16 %v2248, %v2248
  %v2265 = vpack.c.bf16 %v2249, %v2249
  %v2266 = vpack.c.bf16 %v2250, %v2250
  %v2267 = vpack.c.bf16 %v2251, %v2251
  %v2268 = vpack.c.bf16 %v2252, %v2252
  %v2269 = vpack.c.bf16 %v2253, %v2253
  %v2270 = vpack.c.bf16 %v2254, %v2254
  %v2271 = vpack.c.bf16 %v2255, %v2255
  %2288 = vrot.lane.b32.xlu0 %v2256, 64
  %v2289 = vpop.permute.xlu0 %2288
  %2290 = vrot.lane.b32.xlu0 %v2257, 64
  %v2291 = vpop.permute.xlu0 %2290
  %2292 = vrot.lane.b32.xlu0 %v2258, 64
  %v2293 = vpop.permute.xlu0 %2292
  %2294 = vrot.lane.b32.xlu0 %v2259, 64
  %v2295 = vpop.permute.xlu0 %2294
  %2296 = vrot.lane.b32.xlu0 %v2260, 64
  %v2297 = vpop.permute.xlu0 %2296
  %2298 = vrot.lane.b32.xlu0 %v2261, 64
  %v2299 = vpop.permute.xlu0 %2298
  %2300 = vrot.lane.b32.xlu0 %v2262, 64
  %v2301 = vpop.permute.xlu0 %2300
  %2302 = vrot.lane.b32.xlu0 %v2263, 64
  %v2303 = vpop.permute.xlu0 %2302
  %2304 = vrot.lane.b32.xlu0 %v2264, 64
  %v2305 = vpop.permute.xlu0 %2304
  %2306 = vrot.lane.b32.xlu0 %v2265, 64
  %v2307 = vpop.permute.xlu0 %2306
  %2308 = vrot.lane.b32.xlu0 %v2266, 64
  %v2309 = vpop.permute.xlu0 %2308
  %2310 = vrot.lane.b32.xlu0 %v2267, 64
  %v2311 = vpop.permute.xlu0 %2310
  %2312 = vrot.lane.b32.xlu0 %v2268, 64
  %v2313 = vpop.permute.xlu0 %2312
  %2314 = vrot.lane.b32.xlu0 %v2269, 64
  %v2315 = vpop.permute.xlu0 %2314
  %2316 = vrot.lane.b32.xlu0 %v2270, 64
  %v2317 = vpop.permute.xlu0 %2316
  %2318 = vrot.lane.b32.xlu0 %v2271, 64
  %v2319 = vpop.permute.xlu0 %2318
  %vm2336 = vcmask 585216
  %2337 = vst.msk [vmem:[#allocation4] sm:$0xf] %vm2336, %v2289
  %2338 = vst.msk [vmem:[#allocation4 + $0x4] sm:$0xf] %vm2336, %v2291
  %2339 = vst.msk [vmem:[#allocation4 + $0x8] sm:$0xf] %vm2336, %v2293
  %2340 = vst.msk [vmem:[#allocation4 + $0xc] sm:$0xf] %vm2336, %v2295
  %2341 = vst.msk [vmem:[#allocation4 + $0x10] sm:$0xf] %vm2336, %v2297
  %2342 = vst.msk [vmem:[#allocation4 + $0x14] sm:$0xf] %vm2336, %v2299
  %2343 = vst.msk [vmem:[#allocation4 + $0x18] sm:$0xf] %vm2336, %v2301
  %2344 = vst.msk [vmem:[#allocation4 + $0x1c] sm:$0xf] %vm2336, %v2303
  %2345 = vst.msk [vmem:[#allocation4 + $0x20] sm:$0xf] %vm2336, %v2305
  %2346 = vst.msk [vmem:[#allocation4 + $0x24] sm:$0xf] %vm2336, %v2307
  %2347 = vst.msk [vmem:[#allocation4 + $0x28] sm:$0xf] %vm2336, %v2309
  %2348 = vst.msk [vmem:[#allocation4 + $0x2c] sm:$0xf] %vm2336, %v2311
  %2349 = vst.msk [vmem:[#allocation4 + $0x30] sm:$0xf] %vm2336, %v2313
  %2350 = vst.msk [vmem:[#allocation4 + $0x34] sm:$0xf] %vm2336, %v2315
  %2351 = vst.msk [vmem:[#allocation4 + $0x38] sm:$0xf] %vm2336, %v2317
  %2352 = vst.msk [vmem:[#allocation4 + $0x3c] sm:$0xf] %vm2336, %v2319
  %v2353 = vld [vmem:[#allocation4] sm:$0xf]
  %v2354 = vld [vmem:[#allocation4 + $0x4] sm:$0xf]
  %v2355 = vld [vmem:[#allocation4 + $0x8] sm:$0xf]
  %v2356 = vld [vmem:[#allocation4 + $0xc] sm:$0xf]
  %v2357 = vld [vmem:[#allocation4 + $0x10] sm:$0xf]
  %v2358 = vld [vmem:[#allocation4 + $0x14] sm:$0xf]
  %v2359 = vld [vmem:[#allocation4 + $0x18] sm:$0xf]
  %v2360 = vld [vmem:[#allocation4 + $0x1c] sm:$0xf]
  %v2361 = vld [vmem:[#allocation4 + $0x20] sm:$0xf]
  %v2362 = vld [vmem:[#allocation4 + $0x24] sm:$0xf]
  %v2363 = vld [vmem:[#allocation4 + $0x28] sm:$0xf]
  %v2364 = vld [vmem:[#allocation4 + $0x2c] sm:$0xf]
  %v2365 = vld [vmem:[#allocation4 + $0x30] sm:$0xf]
  %v2366 = vld [vmem:[#allocation4 + $0x34] sm:$0xf]
  %v2367 = vld [vmem:[#allocation4 + $0x38] sm:$0xf]
  %v2368 = vld [vmem:[#allocation4 + $0x3c] sm:$0xf]
  %v2369 = vld [vmem:[%s7] sm:$0xf]
  %v2370 = vld [vmem:[%s7 + $0x4] sm:$0xf]
  %v2371 = vld [vmem:[%s7 + $0x8] sm:$0xf]
  %v2372 = vld [vmem:[%s7 + $0xc] sm:$0xf]
  %v2373 = vld [vmem:[%s7 + $0x10] sm:$0xf]
  %v2374 = vld [vmem:[%s7 + $0x14] sm:$0xf]
  %v2375 = vld [vmem:[%s7 + $0x18] sm:$0xf]
  %v2376 = vld [vmem:[%s7 + $0x1c] sm:$0xf]
  %v2377 = vld [vmem:[%s7 + $0x20] sm:$0xf]
  %v2394 = vunpack.c.l.b16 %v2353
  %v2395 = vunpack.c.l.b16 %v2354
  %v2396 = vunpack.c.l.b16 %v2355
  %v2397 = vunpack.c.l.b16 %v2356
  %v2398 = vunpack.c.l.b16 %v2357
  %v2399 = vunpack.c.l.b16 %v2358
  %v2400 = vunpack.c.l.b16 %v2359
  %v2401 = vunpack.c.l.b16 %v2360
  %v2402 = vunpack.c.l.b16 %v2361
  %v2403 = vunpack.c.l.b16 %v2362
  %v2404 = vunpack.c.l.b16 %v2363
  %v2405 = vunpack.c.l.b16 %v2364
  %v2406 = vunpack.c.l.b16 %v2365
  %v2407 = vunpack.c.l.b16 %v2366
  %v2408 = vunpack.c.l.b16 %v2367
  %v2409 = vunpack.c.l.b16 %v2368
  %v2410 = vpack.c.b16 %v2395, %v2394
  %v2411 = vpack.c.b16 %v2397, %v2396
  %v2412 = vpack.c.b16 %v2399, %v2398
  %v2413 = vpack.c.b16 %v2401, %v2400
  %v2414 = vpack.c.b16 %v2403, %v2402
  %v2415 = vpack.c.b16 %v2405, %v2404
  %v2416 = vpack.c.b16 %v2407, %v2406
  %v2417 = vpack.c.b16 %v2409, %v2408
  %v2427 = vunpack.c.l.b16 %v2369
  %v2428 = vunpack.c.l.b16 %v2370
  %v2429 = vunpack.c.l.b16 %v2371
  %v2430 = vunpack.c.l.b16 %v2372
  %v2431 = vunpack.c.l.b16 %v2373
  %v2432 = vunpack.c.l.b16 %v2374
  %v2433 = vunpack.c.l.b16 %v2375
  %v2434 = vunpack.c.l.b16 %v2376
  %v2435 = vunpack.c.l.b16 %v2377
  %v2436 = vpack.c.b16 %v2428, %v2427
  %v2437 = vpack.c.b16 %v2430, %v2429
  %v2438 = vpack.c.b16 %v2432, %v2431
  %v2439 = vpack.c.b16 %v2434, %v2433
  %v2440 = vpack.c.b16 %v2435, %v2435
  %vm2445 = vcmask 588800
  %v2447 = vsel %vm2445, %v2410, 0
  %v2450 = vsel %vm2445, %v2411, 0
  %v2453 = vsel %vm2445, %v2412, 0
  %v2456 = vsel %vm2445, %v2413, 0
  %v2459 = vsel %vm2445, %v2414, 0
  %v2462 = vsel %vm2445, %v2415, 0
  %v2465 = vsel %vm2445, %v2416, 0
  %v2468 = vsel %vm2445, %v2417, 0
  %vm2470 = vcmask 1043456
  %v2472 = vsel %vm2470, %v2440, 0
  %2474 = vmatpush.bf16.msra.mxu0 0
  %2475 = vmatpush.bf16.msra.mxu0 0
  %2476 = vmatpush.bf16.msra.mxu0 0
  %2477 = vmatpush.bf16.msra.mxu0 %v2472
  %2478 = vmatpush.bf16.msra.mxu0 %v2439
  %2479 = vmatpush.bf16.msra.mxu0 %v2438
  %2480 = vmatpush.bf16.msra.mxu0 %v2437
  %2481 = vmatpush.bf16.msra.mxu0 %v2436
  %2482 = vmatmul.bf16.gmra.mxu0 %v2447
  %v2483 = vpop.f32.mrf.mxu0
  %v2484 = vadd.f32 0.0, %v2483
  %v2485 = vpop.f32.mrf.mxu0
  %v2486 = vadd.f32 0.0, %v2485
  %2487 = vmatmul.bf16.gmra.mxu0 %v2450
  %v2488 = vpop.f32.mrf.mxu0
  %v2489 = vadd.f32 0.0, %v2488
  %v2490 = vpop.f32.mrf.mxu0
  %v2491 = vadd.f32 0.0, %v2490
  %2492 = vmatmul.bf16.gmra.mxu0 %v2453
  %v2493 = vpop.f32.mrf.mxu0
  %v2494 = vadd.f32 0.0, %v2493
  %v2495 = vpop.f32.mrf.mxu0
  %v2496 = vadd.f32 0.0, %v2495
  %2497 = vmatmul.bf16.gmra.mxu0 %v2456
  %v2498 = vpop.f32.mrf.mxu0
  %v2499 = vadd.f32 0.0, %v2498
  %v2500 = vpop.f32.mrf.mxu0
  %v2501 = vadd.f32 0.0, %v2500
  %2502 = vmatmul.bf16.gmra.mxu0 %v2459
  %v2503 = vpop.f32.mrf.mxu0
  %v2504 = vadd.f32 0.0, %v2503
  %v2505 = vpop.f32.mrf.mxu0
  %v2506 = vadd.f32 0.0, %v2505
  %2507 = vmatmul.bf16.gmra.mxu0 %v2462
  %v2508 = vpop.f32.mrf.mxu0
  %v2509 = vadd.f32 0.0, %v2508
  %v2510 = vpop.f32.mrf.mxu0
  %v2511 = vadd.f32 0.0, %v2510
  %2512 = vmatmul.bf16.gmra.mxu0 %v2465
  %v2513 = vpop.f32.mrf.mxu0
  %v2514 = vadd.f32 0.0, %v2513
  %v2515 = vpop.f32.mrf.mxu0
  %v2516 = vadd.f32 0.0, %v2515
  %2517 = vmatmul.bf16.gmra.mxu0 %v2468
  %v2518 = vpop.f32.mrf.mxu0
  %v2519 = vadd.f32 0.0, %v2518
  %v2520 = vpop.f32.mrf.mxu0
  %v2521 = vadd.f32 0.0, %v2520
  %2522 = vdwg.mxu0
  %v2523 = vsel %vm1154, %v2484, 0.0
  %v2524 = vsel %vm1154, %v2486, 0.0
  %v2525 = vadd.f32 %v2523, %v2524
  %v2526 = vsel %vm1154, %v2489, 0.0
  %v2527 = vadd.f32 %v2525, %v2526
  %v2528 = vsel %vm1154, %v2491, 0.0
  %v2529 = vadd.f32 %v2527, %v2528
  %v2530 = vsel %vm1154, %v2494, 0.0
  %v2531 = vadd.f32 %v2529, %v2530
  %v2532 = vsel %vm1154, %v2496, 0.0
  %v2533 = vadd.f32 %v2531, %v2532
  %v2534 = vsel %vm1154, %v2499, 0.0
  %v2535 = vadd.f32 %v2533, %v2534
  %v2536 = vsel %vm1154, %v2501, 0.0
  %v2537 = vadd.f32 %v2535, %v2536
  %v2538 = vsel %vm1154, %v2504, 0.0
  %v2539 = vadd.f32 %v2537, %v2538
  %v2540 = vsel %vm1154, %v2506, 0.0
  %v2541 = vadd.f32 %v2539, %v2540
  %v2542 = vsel %vm1154, %v2509, 0.0
  %v2543 = vadd.f32 %v2541, %v2542
  %v2544 = vsel %vm1154, %v2511, 0.0
  %v2545 = vadd.f32 %v2543, %v2544
  %v2546 = vsel %vm1154, %v2514, 0.0
  %v2547 = vadd.f32 %v2545, %v2546
  %v2548 = vsel %vm1154, %v2516, 0.0
  %v2549 = vadd.f32 %v2547, %v2548
  %v2550 = vsel %vm1154, %v2519, 0.0
  %v2551 = vadd.f32 %v2549, %v2550
  %v2552 = vsel %vm1154, %v2521, 0.0
  %v2553 = vadd.f32 %v2551, %v2552
  %v2554 = vrot.slane %v2553, 4
  %v2555 = vadd.f32 %v2553, %v2554
  %v2556 = vrot.slane %v2555, 2
  %v2557 = vadd.f32 %v2555, %v2556
  %v2558 = vrot.slane %v2557, 1
  %v2559 = vadd.f32 %v2557, %v2558
  %v2560 = vmul.f32 %v2484, %v2484
  %v2561 = vmul.f32 %v2486, %v2486
  %v2562 = vmul.f32 %v2489, %v2489
  %v2563 = vmul.f32 %v2491, %v2491
  %v2564 = vmul.f32 %v2494, %v2494
  %v2565 = vmul.f32 %v2496, %v2496
  %v2566 = vmul.f32 %v2499, %v2499
  %v2567 = vmul.f32 %v2501, %v2501
  %v2568 = vmul.f32 %v2504, %v2504
  %v2569 = vmul.f32 %v2506, %v2506
  %v2570 = vmul.f32 %v2509, %v2509
  %v2571 = vmul.f32 %v2511, %v2511
  %v2572 = vmul.f32 %v2514, %v2514
  %v2573 = vmul.f32 %v2516, %v2516
  %v2574 = vmul.f32 %v2519, %v2519
  %v2575 = vmul.f32 %v2521, %v2521
  %v2576 = vsel %vm1154, %v2560, 0.0
  %v2577 = vsel %vm1154, %v2561, 0.0
  %v2578 = vadd.f32 %v2576, %v2577
  %v2579 = vsel %vm1154, %v2562, 0.0
  %v2580 = vadd.f32 %v2578, %v2579
  %v2581 = vsel %vm1154, %v2563, 0.0
  %v2582 = vadd.f32 %v2580, %v2581
  %v2583 = vsel %vm1154, %v2564, 0.0
  %v2584 = vadd.f32 %v2582, %v2583
  %v2585 = vsel %vm1154, %v2565, 0.0
  %v2586 = vadd.f32 %v2584, %v2585
  %v2587 = vsel %vm1154, %v2566, 0.0
  %v2588 = vadd.f32 %v2586, %v2587
  %v2589 = vsel %vm1154, %v2567, 0.0
  %v2590 = vadd.f32 %v2588, %v2589
  %v2591 = vsel %vm1154, %v2568, 0.0
  %v2592 = vadd.f32 %v2590, %v2591
  %v2593 = vsel %vm1154, %v2569, 0.0
  %v2594 = vadd.f32 %v2592, %v2593
  %v2595 = vsel %vm1154, %v2570, 0.0
  %v2596 = vadd.f32 %v2594, %v2595
  %v2597 = vsel %vm1154, %v2571, 0.0
  %v2598 = vadd.f32 %v2596, %v2597
  %v2599 = vsel %vm1154, %v2572, 0.0
  %v2600 = vadd.f32 %v2598, %v2599
  %v2601 = vsel %vm1154, %v2573, 0.0
  %v2602 = vadd.f32 %v2600, %v2601
  %v2603 = vsel %vm1154, %v2574, 0.0
  %v2604 = vadd.f32 %v2602, %v2603
  %v2605 = vsel %vm1154, %v2575, 0.0
  %v2606 = vadd.f32 %v2604, %v2605
  %v2607 = vrot.slane %v2606, 4
  %v2608 = vadd.f32 %v2606, %v2607
  %v2609 = vrot.slane %v2608, 2
  %v2610 = vadd.f32 %v2608, %v2609
  %v2611 = vrot.slane %v2610, 1
  %v2612 = vadd.f32 %v2610, %v2611
  %v2613 = vmul.f32 %v2559, 0.0078125
  %v2614 = vmul.f32 %v2612, 0.0078125
  %v2615 = vmul.f32 %v2613, %v2613
  %v2616 = vsub.f32 %v2614, %v2615
  %v2617 = vadd.f32 %v2616, 1e-05
  %v2618 = vrsqrt.pop %v2617
  %v2619 = vmul.f32 %v2618, %v2617
  %v2620 = vmul.f32 %v2619, %v2618
  %v2621 = vmul.f32 0.5, %v2620
  %v2622 = vsub.f32 1.5, %v2621
  %v2623 = vmul.f32 %v2618, %v2622
  %vm2624 = vweird.f32 %v2617
  %vm2625 = vweird.f32 %v2618
  %vm2626 = vmor %vm2624, %vm2625
  %v2627 = vsel %vm2626, %v2618, %v2623
  %v2628 = vld [vmem:[%s8] sm:$0x1]
  %v2629 = vmul.f32 %v2627, %v2628
  %v2630 = vsub.f32 %v2484, %v2613
  %v2631 = vsub.f32 %v2486, %v2613
  %v2632 = vsub.f32 %v2489, %v2613
  %v2633 = vsub.f32 %v2491, %v2613
  %v2634 = vsub.f32 %v2494, %v2613
  %v2635 = vsub.f32 %v2496, %v2613
  %v2636 = vsub.f32 %v2499, %v2613
  %v2637 = vsub.f32 %v2501, %v2613
  %v2638 = vsub.f32 %v2504, %v2613
  %v2639 = vsub.f32 %v2506, %v2613
  %v2640 = vsub.f32 %v2509, %v2613
  %v2641 = vsub.f32 %v2511, %v2613
  %v2642 = vsub.f32 %v2514, %v2613
  %v2643 = vsub.f32 %v2516, %v2613
  %v2644 = vsub.f32 %v2519, %v2613
  %v2645 = vsub.f32 %v2521, %v2613
  %v2646 = vperm.slane %v2629, 0
  %v2647 = vmul.f32 %v2630, %v2646
  %v2648 = vmul.f32 %v2631, %v2646
  %v2649 = vmul.f32 %v2632, %v2646
  %v2650 = vmul.f32 %v2633, %v2646
  %v2651 = vmul.f32 %v2634, %v2646
  %v2652 = vmul.f32 %v2635, %v2646
  %v2653 = vmul.f32 %v2636, %v2646
  %v2654 = vmul.f32 %v2637, %v2646
  %v2655 = vmul.f32 %v2638, %v2646
  %v2656 = vmul.f32 %v2639, %v2646
  %v2657 = vmul.f32 %v2640, %v2646
  %v2658 = vmul.f32 %v2641, %v2646
  %v2659 = vmul.f32 %v2642, %v2646
  %v2660 = vmul.f32 %v2643, %v2646
  %v2661 = vmul.f32 %v2644, %v2646
  %v2662 = vmul.f32 %v2645, %v2646
  %v2663 = vld [vmem:[%s9] sm:$0x1]
  %v2665 = vperm.slane %v2663, 0
  %v2667 = vadd.f32 %v2647, %v2665
  %v2668 = vadd.f32 %v2648, %v2665
  %v2669 = vadd.f32 %v2649, %v2665
  %v2670 = vadd.f32 %v2650, %v2665
  %v2671 = vadd.f32 %v2651, %v2665
  %v2672 = vadd.f32 %v2652, %v2665
  %v2673 = vadd.f32 %v2653, %v2665
  %v2674 = vadd.f32 %v2654, %v2665
  %v2675 = vadd.f32 %v2655, %v2665
  %v2676 = vadd.f32 %v2656, %v2665
  %v2677 = vadd.f32 %v2657, %v2665
  %v2678 = vadd.f32 %v2658, %v2665
  %v2679 = vadd.f32 %v2659, %v2665
  %v2680 = vadd.f32 %v2660, %v2665
  %v2681 = vadd.f32 %v2661, %v2665
  %v2682 = vadd.f32 %v2662, %v2665
  %v2683 = vld [vmem:[%s3] sm:$0xff]
  %v2684 = vld [vmem:[%s3 + $0x10] sm:$0xff]
  %v2685 = vld [vmem:[%s3 + $0x20] sm:$0xff]
  %v2686 = vld [vmem:[%s3 + $0x30] sm:$0xff]
  %v2687 = vld [vmem:[%s3 + $0x40] sm:$0xff]
  %v2688 = vld [vmem:[%s3 + $0x50] sm:$0xff]
  %v2689 = vld [vmem:[%s3 + $0x60] sm:$0xff]
  %v2690 = vld [vmem:[%s3 + $0x70] sm:$0xff]
  %v2691 = vld [vmem:[%s3 + $0x90] sm:$0xff]
  %v2692 = vld [vmem:[%s3 + $0xa0] sm:$0xff]
  %v2693 = vld [vmem:[%s3 + $0xb0] sm:$0xff]
  %v2694 = vld [vmem:[%s3 + $0xc0] sm:$0xff]
  %v2695 = vld [vmem:[%s3 + $0xd0] sm:$0xff]
  %v2696 = vld [vmem:[%s3 + $0xe0] sm:$0xff]
  %v2697 = vld [vmem:[%s3 + $0xf0] sm:$0xff]
  %v2698 = vld [vmem:[%s3 + $0x100] sm:$0xff]
  %v2699 = vpack.c.bf16 %v2684, %v2683
  %v2700 = vpack.c.bf16 %v2686, %v2685
  %v2701 = vpack.c.bf16 %v2688, %v2687
  %v2702 = vpack.c.bf16 %v2690, %v2689
  %v2703 = vpack.c.bf16 %v2692, %v2691
  %v2704 = vpack.c.bf16 %v2694, %v2693
  %v2705 = vpack.c.bf16 %v2696, %v2695
  %v2706 = vpack.c.bf16 %v2698, %v2697
  %v2707 = vld [vmem:[%s10] sm:$0x3]
  %vm2708 = vcmask 31744
  %v2710 = vsel %vm2708, %v2699, 0
  %v2713 = vsel %vm2708, %v2700, 0
  %v2716 = vsel %vm2708, %v2701, 0
  %v2719 = vsel %vm2708, %v2702, 0
  %v2722 = vsel %vm2708, %v2703, 0
  %v2725 = vsel %vm2708, %v2704, 0
  %v2728 = vsel %vm2708, %v2705, 0
  %v2731 = vsel %vm2708, %v2706, 0
  %v2734 = vsel %vm1101, %v2707, 0
  %2736 = vmatpush.bf16.msra.mxu0 0
  %2737 = vmatpush.bf16.msra.mxu0 0
  %2738 = vmatpush.bf16.msra.mxu0 0
  %2739 = vmatpush.bf16.msra.mxu0 0
  %2740 = vmatpush.bf16.msra.mxu0 0
  %2741 = vmatpush.bf16.msra.mxu0 0
  %2742 = vmatpush.bf16.msra.mxu0 0
  %2743 = vmatpush.bf16.msra.mxu0 %v2734
  %2744 = vmatmul.bf16.gmra.mxu0 %v2710
  %v2745 = vpop.f32.mrf.mxu0
  %v2746 = vadd.f32 0.0, %v2745
  %v2747 = vpop.f32.mrf.mxu0
  %v2748 = vadd.f32 0.0, %v2747
  %2749 = vmatmul.bf16.gmra.mxu0 %v2713
  %v2750 = vpop.f32.mrf.mxu0
  %v2751 = vadd.f32 0.0, %v2750
  %v2752 = vpop.f32.mrf.mxu0
  %v2753 = vadd.f32 0.0, %v2752
  %2754 = vmatmul.bf16.gmra.mxu0 %v2716
  %v2755 = vpop.f32.mrf.mxu0
  %v2756 = vadd.f32 0.0, %v2755
  %v2757 = vpop.f32.mrf.mxu0
  %v2758 = vadd.f32 0.0, %v2757
  %2759 = vmatmul.bf16.gmra.mxu0 %v2719
  %v2760 = vpop.f32.mrf.mxu0
  %v2761 = vadd.f32 0.0, %v2760
  %v2762 = vpop.f32.mrf.mxu0
  %v2763 = vadd.f32 0.0, %v2762
  %2764 = vmatmul.bf16.gmra.mxu0 %v2722
  %v2765 = vpop.f32.mrf.mxu0
  %v2766 = vadd.f32 0.0, %v2765
  %v2767 = vpop.f32.mrf.mxu0
  %v2768 = vadd.f32 0.0, %v2767
  %2769 = vmatmul.bf16.gmra.mxu0 %v2725
  %v2770 = vpop.f32.mrf.mxu0
  %v2771 = vadd.f32 0.0, %v2770
  %v2772 = vpop.f32.mrf.mxu0
  %v2773 = vadd.f32 0.0, %v2772
  %2774 = vmatmul.bf16.gmra.mxu0 %v2728
  %v2775 = vpop.f32.mrf.mxu0
  %v2776 = vadd.f32 0.0, %v2775
  %v2777 = vpop.f32.mrf.mxu0
  %v2778 = vadd.f32 0.0, %v2777
  %2779 = vmatmul.bf16.gmra.mxu0 %v2731
  %v2780 = vpop.f32.mrf.mxu0
  %v2781 = vadd.f32 0.0, %v2780
  %v2782 = vpop.f32.mrf.mxu0
  %v2783 = vadd.f32 0.0, %v2782
  %2784 = vdwg.mxu0
  %v2785 = vsel %vm1154, %v2746, 0.0
  %v2786 = vsel %vm1154, %v2748, 0.0
  %v2787 = vadd.f32 %v2785, %v2786
  %v2788 = vsel %vm1154, %v2751, 0.0
  %v2789 = vadd.f32 %v2787, %v2788
  %v2790 = vsel %vm1154, %v2753, 0.0
  %v2791 = vadd.f32 %v2789, %v2790
  %v2792 = vsel %vm1154, %v2756, 0.0
  %v2793 = vadd.f32 %v2791, %v2792
  %v2794 = vsel %vm1154, %v2758, 0.0
  %v2795 = vadd.f32 %v2793, %v2794
  %v2796 = vsel %vm1154, %v2761, 0.0
  %v2797 = vadd.f32 %v2795, %v2796
  %v2798 = vsel %vm1154, %v2763, 0.0
  %v2799 = vadd.f32 %v2797, %v2798
  %v2800 = vsel %vm1154, %v2766, 0.0
  %v2801 = vadd.f32 %v2799, %v2800
  %v2802 = vsel %vm1154, %v2768, 0.0
  %v2803 = vadd.f32 %v2801, %v2802
  %v2804 = vsel %vm1154, %v2771, 0.0
  %v2805 = vadd.f32 %v2803, %v2804
  %v2806 = vsel %vm1154, %v2773, 0.0
  %v2807 = vadd.f32 %v2805, %v2806
  %v2808 = vsel %vm1154, %v2776, 0.0
  %v2809 = vadd.f32 %v2807, %v2808
  %v2810 = vsel %vm1154, %v2778, 0.0
  %v2811 = vadd.f32 %v2809, %v2810
  %v2812 = vsel %vm1154, %v2781, 0.0
  %v2813 = vadd.f32 %v2811, %v2812
  %v2814 = vsel %vm1154, %v2783, 0.0
  %v2815 = vadd.f32 %v2813, %v2814
  %v2816 = vrot.slane %v2815, 4
  %v2817 = vadd.f32 %v2815, %v2816
  %v2818 = vrot.slane %v2817, 2
  %v2819 = vadd.f32 %v2817, %v2818
  %v2820 = vrot.slane %v2819, 1
  %v2821 = vadd.f32 %v2819, %v2820
  %v2822 = vmul.f32 %v2746, %v2746
  %v2823 = vmul.f32 %v2748, %v2748
  %v2824 = vmul.f32 %v2751, %v2751
  %v2825 = vmul.f32 %v2753, %v2753
  %v2826 = vmul.f32 %v2756, %v2756
  %v2827 = vmul.f32 %v2758, %v2758
  %v2828 = vmul.f32 %v2761, %v2761
  %v2829 = vmul.f32 %v2763, %v2763
  %v2830 = vmul.f32 %v2766, %v2766
  %v2831 = vmul.f32 %v2768, %v2768
  %v2832 = vmul.f32 %v2771, %v2771
  %v2833 = vmul.f32 %v2773, %v2773
  %v2834 = vmul.f32 %v2776, %v2776
  %v2835 = vmul.f32 %v2778, %v2778
  %v2836 = vmul.f32 %v2781, %v2781
  %v2837 = vmul.f32 %v2783, %v2783
  %v2838 = vsel %vm1154, %v2822, 0.0
  %v2839 = vsel %vm1154, %v2823, 0.0
  %v2840 = vadd.f32 %v2838, %v2839
  %v2841 = vsel %vm1154, %v2824, 0.0
  %v2842 = vadd.f32 %v2840, %v2841
  %v2843 = vsel %vm1154, %v2825, 0.0
  %v2844 = vadd.f32 %v2842, %v2843
  %v2845 = vsel %vm1154, %v2826, 0.0
  %v2846 = vadd.f32 %v2844, %v2845
  %v2847 = vsel %vm1154, %v2827, 0.0
  %v2848 = vadd.f32 %v2846, %v2847
  %v2849 = vsel %vm1154, %v2828, 0.0
  %v2850 = vadd.f32 %v2848, %v2849
  %v2851 = vsel %vm1154, %v2829, 0.0
  %v2852 = vadd.f32 %v2850, %v2851
  %v2853 = vsel %vm1154, %v2830, 0.0
  %v2854 = vadd.f32 %v2852, %v2853
  %v2855 = vsel %vm1154, %v2831, 0.0
  %v2856 = vadd.f32 %v2854, %v2855
  %v2857 = vsel %vm1154, %v2832, 0.0
  %v2858 = vadd.f32 %v2856, %v2857
  %v2859 = vsel %vm1154, %v2833, 0.0
  %v2860 = vadd.f32 %v2858, %v2859
  %v2861 = vsel %vm1154, %v2834, 0.0
  %v2862 = vadd.f32 %v2860, %v2861
  %v2863 = vsel %vm1154, %v2835, 0.0
  %v2864 = vadd.f32 %v2862, %v2863
  %v2865 = vsel %vm1154, %v2836, 0.0
  %v2866 = vadd.f32 %v2864, %v2865
  %v2867 = vsel %vm1154, %v2837, 0.0
  %v2868 = vadd.f32 %v2866, %v2867
  %v2869 = vrot.slane %v2868, 4
  %v2870 = vadd.f32 %v2868, %v2869
  %v2871 = vrot.slane %v2870, 2
  %v2872 = vadd.f32 %v2870, %v2871
  %v2873 = vrot.slane %v2872, 1
  %v2874 = vadd.f32 %v2872, %v2873
  %v2875 = vmul.f32 %v2821, 0.0078125
  %v2876 = vmul.f32 %v2874, 0.0078125
  %v2877 = vmul.f32 %v2875, %v2875
  %v2878 = vsub.f32 %v2876, %v2877
  %v2879 = vadd.f32 %v2878, 1e-05
  %v2880 = vrsqrt.pop %v2879
  %v2881 = vmul.f32 %v2880, %v2879
  %v2882 = vmul.f32 %v2881, %v2880
  %v2883 = vmul.f32 0.5, %v2882
  %v2884 = vsub.f32 1.5, %v2883
  %v2885 = vmul.f32 %v2880, %v2884
  %vm2886 = vweird.f32 %v2879
  %vm2887 = vweird.f32 %v2880
  %vm2888 = vmor %vm2886, %vm2887
  %v2889 = vsel %vm2888, %v2880, %v2885
  %v2890 = vld [vmem:[%s11] sm:$0x1]
  %v2891 = vmul.f32 %v2889, %v2890
  %v2892 = vsub.f32 %v2746, %v2875
  %v2893 = vsub.f32 %v2748, %v2875
  %v2894 = vsub.f32 %v2751, %v2875
  %v2895 = vsub.f32 %v2753, %v2875
  %v2896 = vsub.f32 %v2756, %v2875
  %v2897 = vsub.f32 %v2758, %v2875
  %v2898 = vsub.f32 %v2761, %v2875
  %v2899 = vsub.f32 %v2763, %v2875
  %v2900 = vsub.f32 %v2766, %v2875
  %v2901 = vsub.f32 %v2768, %v2875
  %v2902 = vsub.f32 %v2771, %v2875
  %v2903 = vsub.f32 %v2773, %v2875
  %v2904 = vsub.f32 %v2776, %v2875
  %v2905 = vsub.f32 %v2778, %v2875
  %v2906 = vsub.f32 %v2781, %v2875
  %v2907 = vsub.f32 %v2783, %v2875
  %v2908 = vperm.slane %v2891, 0
  %v2909 = vmul.f32 %v2892, %v2908
  %v2910 = vmul.f32 %v2893, %v2908
  %v2911 = vmul.f32 %v2894, %v2908
  %v2912 = vmul.f32 %v2895, %v2908
  %v2913 = vmul.f32 %v2896, %v2908
  %v2914 = vmul.f32 %v2897, %v2908
  %v2915 = vmul.f32 %v2898, %v2908
  %v2916 = vmul.f32 %v2899, %v2908
  %v2917 = vmul.f32 %v2900, %v2908
  %v2918 = vmul.f32 %v2901, %v2908
  %v2919 = vmul.f32 %v2902, %v2908
  %v2920 = vmul.f32 %v2903, %v2908
  %v2921 = vmul.f32 %v2904, %v2908
  %v2922 = vmul.f32 %v2905, %v2908
  %v2923 = vmul.f32 %v2906, %v2908
  %v2924 = vmul.f32 %v2907, %v2908
  %v2925 = vld [vmem:[%s12] sm:$0x1]
  %v2927 = vperm.slane %v2925, 0
  %v2929 = vadd.f32 %v2909, %v2927
  %v2930 = vadd.f32 %v2910, %v2927
  %v2931 = vadd.f32 %v2911, %v2927
  %v2932 = vadd.f32 %v2912, %v2927
  %v2933 = vadd.f32 %v2913, %v2927
  %v2934 = vadd.f32 %v2914, %v2927
  %v2935 = vadd.f32 %v2915, %v2927
  %v2936 = vadd.f32 %v2916, %v2927
  %v2937 = vadd.f32 %v2917, %v2927
  %v2938 = vadd.f32 %v2918, %v2927
  %v2939 = vadd.f32 %v2919, %v2927
  %v2940 = vadd.f32 %v2920, %v2927
  %v2941 = vadd.f32 %v2921, %v2927
  %v2942 = vadd.f32 %v2922, %v2927
  %v2943 = vadd.f32 %v2923, %v2927
  %v2944 = vadd.f32 %v2924, %v2927
  %v2945 = vadd.f32 %v2667, %v2929
  %v2946 = vadd.f32 %v2668, %v2930
  %v2947 = vadd.f32 %v2669, %v2931
  %v2948 = vadd.f32 %v2670, %v2932
  %v2949 = vadd.f32 %v2671, %v2933
  %v2950 = vadd.f32 %v2672, %v2934
  %v2951 = vadd.f32 %v2673, %v2935
  %v2952 = vadd.f32 %v2674, %v2936
  %v2953 = vadd.f32 %v2675, %v2937
  %v2954 = vadd.f32 %v2676, %v2938
  %v2955 = vadd.f32 %v2677, %v2939
  %v2956 = vadd.f32 %v2678, %v2940
  %v2957 = vadd.f32 %v2679, %v2941
  %v2958 = vadd.f32 %v2680, %v2942
  %v2959 = vadd.f32 %v2681, %v2943
  %v2960 = vadd.f32 %v2682, %v2944
  %v2961 = vmax.f32 %v2945, 0.0
  %v2962 = vmax.f32 %v2946, 0.0
  %v2963 = vmax.f32 %v2947, 0.0
  %v2964 = vmax.f32 %v2948, 0.0
  %v2965 = vmax.f32 %v2949, 0.0
  %v2966 = vmax.f32 %v2950, 0.0
  %v2967 = vmax.f32 %v2951, 0.0
  %v2968 = vmax.f32 %v2952, 0.0
  %v2969 = vmax.f32 %v2953, 0.0
  %v2970 = vmax.f32 %v2954, 0.0
  %v2971 = vmax.f32 %v2955, 0.0
  %v2972 = vmax.f32 %v2956, 0.0
  %v2973 = vmax.f32 %v2957, 0.0
  %v2974 = vmax.f32 %v2958, 0.0
  %v2975 = vmax.f32 %v2959, 0.0
  %v2976 = vmax.f32 %v2960, 0.0
  %2977 = vst.msk [vmem:[%s13] sm:$0xff] %vm1154, %v2961
  %2978 = vst.msk [vmem:[%s13 + $0x8] sm:$0xff] %vm1154, %v2962
  %2979 = vst.msk [vmem:[%s13 + $0x10] sm:$0xff] %vm1154, %v2963
  %2980 = vst.msk [vmem:[%s13 + $0x18] sm:$0xff] %vm1154, %v2964
  %2981 = vst.msk [vmem:[%s13 + $0x20] sm:$0xff] %vm1154, %v2965
  %2982 = vst.msk [vmem:[%s13 + $0x28] sm:$0xff] %vm1154, %v2966
  %2983 = vst.msk [vmem:[%s13 + $0x30] sm:$0xff] %vm1154, %v2967
  %2984 = vst.msk [vmem:[%s13 + $0x38] sm:$0xff] %vm1154, %v2968
  %2985 = vst.msk [vmem:[%s13 + $0x40] sm:$0xff] %vm1154, %v2969
  %2986 = vst.msk [vmem:[%s13 + $0x48] sm:$0xff] %vm1154, %v2970
  %2987 = vst.msk [vmem:[%s13 + $0x50] sm:$0xff] %vm1154, %v2971
  %2988 = vst.msk [vmem:[%s13 + $0x58] sm:$0xff] %vm1154, %v2972
  %2989 = vst.msk [vmem:[%s13 + $0x60] sm:$0xff] %vm1154, %v2973
  %2990 = vst.msk [vmem:[%s13 + $0x68] sm:$0xff] %vm1154, %v2974
  %2991 = vst.msk [vmem:[%s13 + $0x70] sm:$0xff] %vm1154, %v2975
  %2992 = vst.msk [vmem:[%s13 + $0x78] sm:$0xff] %vm1154, %v2976
  // Predicated region
  $region54: #{basic_block_forward.1} parent=0 // pred_check
    _
  $region55: #{basic_block_forward.1} parent=0 // pred_check_branch
    %2994 = sbr.rel (0) target = $region57
  $region56: #{basic_block_forward.1} parent=0 // pred_region
    _
  $region57: #{basic_block_forward.1} parent=0 // pred_fallthru
    _
  // Predicated region
  $region58: #{basic_block_forward.1} parent=0 // pred_check
    _
  $region59: #{basic_block_forward.1} parent=0 // pred_check_branch
    %2996 = sbr.rel (0) target = $region61
  $region60: #{basic_block_forward.1} parent=0 // pred_region
    _
  $region61: #{basic_block_forward.1} parent=0 // pred_fallthru
    _

</llo_original>
